<compile_context>
chip_gen: v7x
topology: tpu7x:2x2x1
jax: 0.10.0
libtpu: 0.0.40
codegen_flags: <defaults>
</compile_context>

<pallas_src>
import functools

import jax
import jax.numpy as jnp
from jax.experimental import pallas as pl
from jax.experimental.pallas import tpu as pltpu

# CLIP image normalization constants.
CLIP_MEAN = jnp.array([0.48145466, 0.4578275, 0.40821073], jnp.float32)
CLIP_STD = jnp.array([0.26862954, 0.26130258, 0.27577711], jnp.float32)


# ----------------------------------------------------------------------------
# Kernel 1: batched cutout pooling (adaptive_avg_pool2d as two matmuls)
#           + folded noise injection.  Grid = (2,) halves of cutn ("parallel"
#           so v7x can split across its 2 TensorCores).
# ----------------------------------------------------------------------------
def pool_kernel(img_ref, ay_ref, axt_ref, noise_ref, out_ref):
    half, cs, _ = noise_ref.shape
    # Step 1: row pooling for ALL cutouts of this grid step in one MXU matmul:
    #   (half*cs, H) @ (H, C*W) -> (half*cs, C*W), f32 accumulate.
    t = jnp.dot(ay_ref[...], img_ref[...], preferred_element_type=jnp.float32)
    t = t.astype(jnp.bfloat16)
    for r in range(half):  # static, tiny unroll
        # Step 2: column pooling for cutout r via a channel-block-diagonal
        #   Ax^T:  (cs, C*W) @ (C*W, C*cs) -> (cs, C*cs), f32 accumulate.
        p = jnp.dot(t[r * cs:(r + 1) * cs, :], axt_ref[r],
                    preferred_element_type=jnp.float32)
        # noise_ref already holds facs * randn / std (folded on host).
        out_ref[r] = (p + noise_ref[r]).astype(out_ref.dtype)


def cutout_pool(img_cols, ay_all, axt_bd, noise, *, cutn, cut_size, channels,
                grid_split=2):
    assert cutn % grid_split == 0
    H, CW = img_cols.shape
    cs = cut_size
    ccs = channels * cs
    half = cutn // grid_split
    return pl.pallas_call(
        pool_kernel,
        out_shape=jax.ShapeDtypeStruct((cutn, cs, ccs), jnp.bfloat16),
        grid=(grid_split,),
        in_specs=[
            pl.BlockSpec((H, CW), lambda g: (0, 0)),             # image (resident)
            pl.BlockSpec((half * cs, H), lambda g: (g, 0)),      # stacked Ay
            pl.BlockSpec((half, CW, ccs), lambda g: (g, 0, 0)),  # block-diag Ax^T
            pl.BlockSpec((half, cs, ccs), lambda g: (g, 0, 0)),  # facs*noise/std
        ],
        out_specs=pl.BlockSpec((half, cs, ccs), lambda g: (g, 0, 0)),
        compiler_params=pltpu.CompilerParams(
            dimension_semantics=("parallel",)),
    )(img_cols, ay_all, axt_bd, noise)


# ----------------------------------------------------------------------------
# Kernel 2: synthetic perceptor.encode_image — ONE un-tiled MXU matmul per
#           perceptor.  Grid = (num_perceptors,), "parallel" (v7x: 1 per TC).
#           cat_with_pad is folded in via zero-padded W columns / zero bias.
# ----------------------------------------------------------------------------
def embed_kernel(x_ref, w_ref, b_ref, o_ref):
    o_ref[0] = (jnp.dot(x_ref[0], w_ref[0], preferred_element_type=jnp.float32)
                + b_ref[0])


def encode_image(xs, ws, bs):
    P, n, F = xs.shape
    D = ws.shape[2]
    return pl.pallas_call(
        embed_kernel,
        out_shape=jax.ShapeDtypeStruct((P, n, D), jnp.float32),
        grid=(P,),
        in_specs=[
            pl.BlockSpec((1, n, F), lambda p: (p, 0, 0)),
            pl.BlockSpec((1, F, D), lambda p: (p, 0, 0)),
            pl.BlockSpec((1, 1, D), lambda p: (p, 0, 0)),
        ],
        out_specs=pl.BlockSpec((1, n, D), lambda p: (p, 0, 0)),
        compiler_params=pltpu.CompilerParams(
            dimension_semantics=("parallel",)),
    )(xs, ws, bs)


# ----------------------------------------------------------------------------
# Plain-JAX glue: batched random cutout geometry -> pooling matrices (traceable).
# ----------------------------------------------------------------------------
def pool_matrix(size, offset, full, cs):
    """Averaging matrix (cs, full) reproducing F.adaptive_avg_pool2d bin edges
    for a crop of `size` pixels starting at `offset` (size/offset may be traced)."""
    i = jnp.arange(cs, dtype=jnp.int32)
    start = (i * size) // cs
    end = ((i + 1) * size + cs - 1) // cs                     # ceil
    y = jnp.arange(full, dtype=jnp.int32)[None, :] - offset   # crop-local coord
    mask = (y >= start[:, None]) & (y < end[:, None])
    return mask.astype(jnp.float32) / (end - start)[:, None].astype(jnp.float32)


def build_pool_mats(key, cut_size, H, W, C, cutn):
    """Batched draws (no host round-trips) -> stacked Ay (cutn*cs, H) and a
    channel-block-diagonal Ax^T (cutn, C*W, C*cs), both bf16."""
    max_size = min(H, W)
    k1, k2, k3, k4 = jax.random.split(key, 4)
    frac = jnp.clip(0.8 + 0.3 * jax.random.normal(k1, (cutn,), jnp.float32),
                    cut_size / max_size, 1.0)
    sizes = jnp.floor(max_size * frac).astype(jnp.int32)
    offy = jnp.floor(jax.random.uniform(k2, (cutn,), jnp.float32)
                     * (H - sizes + 1).astype(jnp.float32)).astype(jnp.int32)
    offx = jnp.floor(jax.random.uniform(k3, (cutn,), jnp.float32)
                     * (W - sizes + 1).astype(jnp.float32)).astype(jnp.int32)
    flip = jax.random.bernoulli(k4, 0.5, (cutn,))

    ay = jax.vmap(lambda s, o: pool_matrix(s, o, H, cut_size))(sizes, offy)
    ax = jax.vmap(lambda s, o: pool_matrix(s, o, W, cut_size))(sizes, offx)
    # K.RandomHorizontalFlip(p=0.5): the reference applies augs AFTER pooling,
    # so reversing the pooled columns (rows of Ax) is exact.
    ax = jnp.where(flip[:, None, None], ax[:, ::-1, :], ax)

    ay_all = ay.reshape(cutn * cut_size, H).astype(jnp.bfloat16)
    axt = jnp.transpose(ax, (0, 2, 1))                        # (cutn, W, cs)
    axt_bd = jnp.einsum("kxj,cd->kcxdj", axt, jnp.eye(C, dtype=jnp.float32))
    axt_bd = axt_bd.reshape(cutn, C * W, C * cut_size).astype(jnp.bfloat16)
    return ay_all, axt_bd


def perceptor_inputs(key, img_norm, cut_size, embed_dim, cutn, noise_fac,
                     f_max, d_max):
    """Pooled + noised cutout features (flattened, bf16) and synthetic encoder
    weights for one perceptor, zero-padded to the shared (f_max, d_max)."""
    C, H, W = img_norm.shape
    kg, kn, kf, kw = jax.random.split(key, 4)

    ay_all, axt_bd = build_pool_mats(kg, cut_size, H, W, C, cutn)
    # Image as (H, C*W): y is the contraction axis of the row-pool matmul.
    img_cols = jnp.transpose(img_norm, (1, 0, 2)).reshape(H, C * W)
    img_cols = img_cols.astype(jnp.bfloat16)

    # cutouts + facs*randn with the CLIP 1/std fold applied on host; layout
    # matches the kernel's (i, c, j) pooled output.
    facs = jax.random.uniform(kf, (cutn, 1, 1, 1), jnp.float32, 0.0, noise_fac)
    noise = (facs * jax.random.normal(kn, (cutn, cut_size, C, cut_size),
                                      jnp.float32)
             / CLIP_STD[None, None, :, None])
    noise = noise.reshape(cutn, cut_size, C * cut_size)

    feats = cutout_pool(img_cols, ay_all, axt_bd, noise,
                        cutn=cutn, cut_size=cut_size, channels=C)
    F = cut_size * C * cut_size
    x = feats.reshape(cutn, F)                 # contiguous -> free reshape
    x = jnp.pad(x, ((0, 0), (0, f_max - F)))

    # TODO(synk): real CLIP image encoder replaced by a synthetic linear
    #             projection over the flattened cutout (feature layout (i,c,j)).
    w = (jax.random.normal(kw, (F, embed_dim), jnp.float32)
         / jnp.sqrt(F)).astype(jnp.bfloat16)
    w = jnp.pad(w, ((0, f_max - F), (0, d_max - embed_dim)))   # zero cols = cat_with_pad
    b = jnp.zeros((1, d_max), jnp.float32)
    return x, w, b


def hd_multi_clip_embed(key, image, *, cut_cfgs, cutn=8, noise_fac=0.1):
    """cut_cfgs: tuple of (cut_size, embed_dim) — one per synthetic perceptor.
    Returns (num_perceptors, cutn, max_embed_dim)  [axes ('c','n','i')]."""
    N, C, H, W = image.shape
    # CLIP normalize folded into the image: every pooling row sums to 1, so
    # pool(scale*img + bias) == scale*pool(img) + bias exactly.
    img_norm = (image[0] - CLIP_MEAN[:, None, None]) / CLIP_STD[:, None, None]
    d_max = max(d for _, d in cut_cfgs)
    f_max = max(cs * C * cs for cs, _ in cut_cfgs)

    keys = jax.random.split(key, len(cut_cfgs))
    xs, ws, bs = [], [], []
    for k, (cs, d) in zip(keys, cut_cfgs):
        x, w, b = perceptor_inputs(k, img_norm, cs, d, cutn, noise_fac,
                                   f_max, d_max)
        xs.append(x)
        ws.append(w)
        bs.append(b)
    xs = jnp.stack(xs)     # (P, cutn, f_max)  bf16
    ws = jnp.stack(ws)     # (P, f_max, d_max) bf16
    bs = jnp.stack(bs)     # (P, 1, d_max)     f32
    return encode_image(xs, ws, bs)            # (P, cutn, d_max) = ('c','n','i')


if __name__ == "__main__":
    key = jax.random.PRNGKey(0)
    N, C, H, W = 1, 3, 64, 64
    cutn = 8
    noise_fac = 0.1
    cut_cfgs = ((32, 128), (16, 64))            # two synthetic perceptors

    key, k_img = jax.random.split(key)
    image = jax.random.uniform(k_img, (N, C, H, W), jnp.float32)

    embed_fn = jax.jit(functools.partial(
        hd_multi_clip_embed, cut_cfgs=cut_cfgs, cutn=cutn, noise_fac=noise_fac))
    embeds = embed_fn(key, image)
    jax.block_until_ready(embeds)
    assert embeds.shape == (len(cut_cfgs), cutn, 128)
    assert embeds.dtype == jnp.float32
    print("KERNEL_OK")
</pallas_src>

<mosaic_0001>
module attributes {stable_mosaic.version = 11 : i64} {
  func.func @pool_kernel(%arg0: i32, %arg1: memref<64x192xbf16, #tpu.memory_space<vmem>>, %arg2: memref<128x64xbf16, #tpu.memory_space<vmem>>, %arg3: memref<4x192x96xbf16, #tpu.memory_space<vmem>>, %arg4: memref<4x32x96xf32, #tpu.memory_space<vmem>>, %arg5: memref<4x32x96xbf16, #tpu.memory_space<vmem>>) attributes {dimension_semantics = [#tpu.dimension_semantics<parallel>], iteration_bounds = array<i64: 2>, scalar_prefetch = 0 : i64, scratch_operands = 0 : i64, tpu.core_type = #tpu.core_type<tc>, window_params = [{pipeline_mode = #tpu.pipeline_mode<synchronous>, transform_indices = @transform_0, window_bounds = array<i64: 64, 192>}, {transform_indices = @transform_1, window_bounds = array<i64: 128, 64>}, {transform_indices = @transform_2, window_bounds = array<i64: 4, 192, 96>}, {transform_indices = @transform_3, window_bounds = array<i64: 4, 32, 96>}, {transform_indices = @transform_4, window_bounds = array<i64: 4, 32, 96>}]} {
    %c0 = arith.constant 0 : index
    %c0_0 = arith.constant 0 : index
    %0 = vector.load %arg2[%c0, %c0_0] : memref<128x64xbf16, #tpu.memory_space<vmem>>, vector<128x64xbf16>
    %c0_1 = arith.constant 0 : index
    %c0_2 = arith.constant 0 : index
    %1 = vector.load %arg1[%c0_1, %c0_2] : memref<64x192xbf16, #tpu.memory_space<vmem>>, vector<64x192xbf16>
    %cst = arith.constant dense<0.000000e+00> : vector<128x192xf32>
    %2 = tpu.matmul %0, %1, %cst {dimension_numbers = #tpu.dot_dimension_numbers<[1], [0], [0], [1], [0, 0, 1, 1], [], []>} : vector<128x64xbf16>, vector<64x192xbf16>, vector<128x192xf32> -> vector<128x192xf32>
    %3 = arith.truncf %2 : vector<128x192xf32> to vector<128x192xbf16>
    %4 = vector.extract_strided_slice %3 {offsets = [0, 0], sizes = [32, 192], strides = [1, 1]} : vector<128x192xbf16> to vector<32x192xbf16>
    %c0_3 = arith.constant 0 : index
    %c0_4 = arith.constant 0 : index
    %c0_5 = arith.constant 0 : index
    %5 = vector.load %arg3[%c0_3, %c0_4, %c0_5] : memref<4x192x96xbf16, #tpu.memory_space<vmem>>, vector<1x192x96xbf16>
    %6 = vector.shape_cast %5 : vector<1x192x96xbf16> to vector<192x96xbf16>
    %cst_6 = arith.constant dense<0.000000e+00> : vector<32x96xf32>
    %7 = tpu.matmul %4, %6, %cst_6 {dimension_numbers = #tpu.dot_dimension_numbers<[1], [0], [0], [1], [0, 0, 1, 1], [], []>} : vector<32x192xbf16>, vector<192x96xbf16>, vector<32x96xf32> -> vector<32x96xf32>
    %c0_7 = arith.constant 0 : index
    %c0_8 = arith.constant 0 : index
    %c0_9 = arith.constant 0 : index
    %8 = vector.load %arg4[%c0_7, %c0_8, %c0_9] : memref<4x32x96xf32, #tpu.memory_space<vmem>>, vector<1x32x96xf32>
    %9 = vector.shape_cast %8 : vector<1x32x96xf32> to vector<32x96xf32>
    %10 = arith.addf %7, %9 : vector<32x96xf32>
    %11 = arith.truncf %10 : vector<32x96xf32> to vector<32x96xbf16>
    %c0_10 = arith.constant 0 : index
    %c0_11 = arith.constant 0 : index
    %c0_12 = arith.constant 0 : index
    %12 = vector.load %arg5[%c0_10, %c0_11, %c0_12] : memref<4x32x96xbf16, #tpu.memory_space<vmem>>, vector<1x32x96xbf16>
    %13 = vector.shape_cast %12 : vector<1x32x96xbf16> to vector<32x96xbf16>
    %14 = vector.shape_cast %11 : vector<32x96xbf16> to vector<1x32x96xbf16>
    tpu.vector_store %arg5[%c0_10, %c0_11, %c0_12], %14 {strides = array<i32>} : memref<4x32x96xbf16, #tpu.memory_space<vmem>>, vector<1x32x96xbf16>,
    %15 = vector.extract_strided_slice %3 {offsets = [32, 0], sizes = [32, 192], strides = [1, 1]} : vector<128x192xbf16> to vector<32x192xbf16>
    %c1 = arith.constant 1 : index
    %c0_13 = arith.constant 0 : index
    %c0_14 = arith.constant 0 : index
    %16 = vector.load %arg3[%c1, %c0_13, %c0_14] : memref<4x192x96xbf16, #tpu.memory_space<vmem>>, vector<1x192x96xbf16>
    %17 = vector.shape_cast %16 : vector<1x192x96xbf16> to vector<192x96xbf16>
    %cst_15 = arith.constant dense<0.000000e+00> : vector<32x96xf32>
    %18 = tpu.matmul %15, %17, %cst_15 {dimension_numbers = #tpu.dot_dimension_numbers<[1], [0], [0], [1], [0, 0, 1, 1], [], []>} : vector<32x192xbf16>, vector<192x96xbf16>, vector<32x96xf32> -> vector<32x96xf32>
    %c1_16 = arith.constant 1 : index
    %c0_17 = arith.constant 0 : index
    %c0_18 = arith.constant 0 : index
    %19 = vector.load %arg4[%c1_16, %c0_17, %c0_18] : memref<4x32x96xf32, #tpu.memory_space<vmem>>, vector<1x32x96xf32>
    %20 = vector.shape_cast %19 : vector<1x32x96xf32> to vector<32x96xf32>
    %21 = arith.addf %18, %20 : vector<32x96xf32>
    %22 = arith.truncf %21 : vector<32x96xf32> to vector<32x96xbf16>
    %c1_19 = arith.constant 1 : index
    %c0_20 = arith.constant 0 : index
    %c0_21 = arith.constant 0 : index
    %23 = vector.load %arg5[%c1_19, %c0_20, %c0_21] : memref<4x32x96xbf16, #tpu.memory_space<vmem>>, vector<1x32x96xbf16>
    %24 = vector.shape_cast %23 : vector<1x32x96xbf16> to vector<32x96xbf16>
    %25 = vector.shape_cast %22 : vector<32x96xbf16> to vector<1x32x96xbf16>
    tpu.vector_store %arg5[%c1_19, %c0_20, %c0_21], %25 {strides = array<i32>} : memref<4x32x96xbf16, #tpu.memory_space<vmem>>, vector<1x32x96xbf16>,
    %26 = vector.extract_strided_slice %3 {offsets = [64, 0], sizes = [32, 192], strides = [1, 1]} : vector<128x192xbf16> to vector<32x192xbf16>
    %c2 = arith.constant 2 : index
    %c0_22 = arith.constant 0 : index
    %c0_23 = arith.constant 0 : index
    %27 = vector.load %arg3[%c2, %c0_22, %c0_23] : memref<4x192x96xbf16, #tpu.memory_space<vmem>>, vector<1x192x96xbf16>
    %28 = vector.shape_cast %27 : vector<1x192x96xbf16> to vector<192x96xbf16>
    %cst_24 = arith.constant dense<0.000000e+00> : vector<32x96xf32>
    %29 = tpu.matmul %26, %28, %cst_24 {dimension_numbers = #tpu.dot_dimension_numbers<[1], [0], [0], [1], [0, 0, 1, 1], [], []>} : vector<32x192xbf16>, vector<192x96xbf16>, vector<32x96xf32> -> vector<32x96xf32>
    %c2_25 = arith.constant 2 : index
    %c0_26 = arith.constant 0 : index
    %c0_27 = arith.constant 0 : index
    %30 = vector.load %arg4[%c2_25, %c0_26, %c0_27] : memref<4x32x96xf32, #tpu.memory_space<vmem>>, vector<1x32x96xf32>
    %31 = vector.shape_cast %30 : vector<1x32x96xf32> to vector<32x96xf32>
    %32 = arith.addf %29, %31 : vector<32x96xf32>
    %33 = arith.truncf %32 : vector<32x96xf32> to vector<32x96xbf16>
    %c2_28 = arith.constant 2 : index
    %c0_29 = arith.constant 0 : index
    %c0_30 = arith.constant 0 : index
    %34 = vector.load %arg5[%c2_28, %c0_29, %c0_30] : memref<4x32x96xbf16, #tpu.memory_space<vmem>>, vector<1x32x96xbf16>
    %35 = vector.shape_cast %34 : vector<1x32x96xbf16> to vector<32x96xbf16>
    %36 = vector.shape_cast %33 : vector<32x96xbf16> to vector<1x32x96xbf16>
    tpu.vector_store %arg5[%c2_28, %c0_29, %c0_30], %36 {strides = array<i32>} : memref<4x32x96xbf16, #tpu.memory_space<vmem>>, vector<1x32x96xbf16>,
    %37 = vector.extract_strided_slice %3 {offsets = [96, 0], sizes = [32, 192], strides = [1, 1]} : vector<128x192xbf16> to vector<32x192xbf16>
    %c3 = arith.constant 3 : index
    %c0_31 = arith.constant 0 : index
    %c0_32 = arith.constant 0 : index
    %38 = vector.load %arg3[%c3, %c0_31, %c0_32] : memref<4x192x96xbf16, #tpu.memory_space<vmem>>, vector<1x192x96xbf16>
    %39 = vector.shape_cast %38 : vector<1x192x96xbf16> to vector<192x96xbf16>
    %cst_33 = arith.constant dense<0.000000e+00> : vector<32x96xf32>
    %40 = tpu.matmul %37, %39, %cst_33 {dimension_numbers = #tpu.dot_dimension_numbers<[1], [0], [0], [1], [0, 0, 1, 1], [], []>} : vector<32x192xbf16>, vector<192x96xbf16>, vector<32x96xf32> -> vector<32x96xf32>
    %c3_34 = arith.constant 3 : index
    %c0_35 = arith.constant 0 : index
    %c0_36 = arith.constant 0 : index
    %41 = vector.load %arg4[%c3_34, %c0_35, %c0_36] : memref<4x32x96xf32, #tpu.memory_space<vmem>>, vector<1x32x96xf32>
    %42 = vector.shape_cast %41 : vector<1x32x96xf32> to vector<32x96xf32>
    %43 = arith.addf %40, %42 : vector<32x96xf32>
    %44 = arith.truncf %43 : vector<32x96xf32> to vector<32x96xbf16>
    %c3_37 = arith.constant 3 : index
    %c0_38 = arith.constant 0 : index
    %c0_39 = arith.constant 0 : index
    %45 = vector.load %arg5[%c3_37, %c0_38, %c0_39] : memref<4x32x96xbf16, #tpu.memory_space<vmem>>, vector<1x32x96xbf16>
    %46 = vector.shape_cast %45 : vector<1x32x96xbf16> to vector<32x96xbf16>
    %47 = vector.shape_cast %44 : vector<32x96xbf16> to vector<1x32x96xbf16>
    tpu.vector_store %arg5[%c3_37, %c0_38, %c0_39], %47 {strides = array<i32>} : memref<4x32x96xbf16, #tpu.memory_space<vmem>>, vector<1x32x96xbf16>,
    return
  }
  func.func @transform_0(%arg0: i32) -> (i32, i32) {
    %c0_i32 = arith.constant 0 : i32
    %c0_i32_0 = arith.constant 0 : i32
    %c0_i32_1 = arith.constant 0 : i32
    return %c0_i32, %c0_i32_0 : i32, i32
  }
  func.func @transform_1(%arg0: i32) -> (i32, i32) {
    %c0_i32 = arith.constant 0 : i32
    %c0_i32_0 = arith.constant 0 : i32
    return %arg0, %c0_i32 : i32, i32
  }
  func.func @transform_2(%arg0: i32) -> (i32, i32, i32) {
    %c0_i32 = arith.constant 0 : i32
    %c0_i32_0 = arith.constant 0 : i32
    %c0_i32_1 = arith.constant 0 : i32
    return %arg0, %c0_i32, %c0_i32_0 : i32, i32, i32
  }
  func.func @transform_3(%arg0: i32) -> (i32, i32, i32) {
    %c0_i32 = arith.constant 0 : i32
    %c0_i32_0 = arith.constant 0 : i32
    %c0_i32_1 = arith.constant 0 : i32
    return %arg0, %c0_i32, %c0_i32_0 : i32, i32, i32
  }
  func.func @transform_4(%arg0: i32) -> (i32, i32, i32) {
    %c0_i32 = arith.constant 0 : i32
    %c0_i32_0 = arith.constant 0 : i32
    %c0_i32_1 = arith.constant 0 : i32
    return %arg0, %c0_i32, %c0_i32_0 : i32, i32, i32
  }
}

module attributes {stable_mosaic.version = 11 : i64} {
  func.func @pool_kernel(%arg0: i32, %arg1: memref<64x192xbf16, #tpu.memory_space<vmem>>, %arg2: memref<64x64xbf16, #tpu.memory_space<vmem>>, %arg3: memref<4x192x48xbf16, #tpu.memory_space<vmem>>, %arg4: memref<4x16x48xf32, #tpu.memory_space<vmem>>, %arg5: memref<4x16x48xbf16, #tpu.memory_space<vmem>>) attributes {dimension_semantics = [#tpu.dimension_semantics<parallel>], iteration_bounds = array<i64: 2>, scalar_prefetch = 0 : i64, scratch_operands = 0 : i64, tpu.core_type = #tpu.core_type<tc>, window_params = [{pipeline_mode = #tpu.pipeline_mode<synchronous>, transform_indices = @transform_0, window_bounds = array<i64: 64, 192>}, {transform_indices = @transform_1, window_bounds = array<i64: 64, 64>}, {transform_indices = @transform_2, window_bounds = array<i64: 4, 192, 48>}, {transform_indices = @transform_3, window_bounds = array<i64: 4, 16, 48>}, {transform_indices = @transform_4, window_bounds = array<i64: 4, 16, 48>}]} {
    %c0 = arith.constant 0 : index
    %c0_0 = arith.constant 0 : index
    %0 = vector.load %arg2[%c0, %c0_0] : memref<64x64xbf16, #tpu.memory_space<vmem>>, vector<64x64xbf16>
    %c0_1 = arith.constant 0 : index
    %c0_2 = arith.constant 0 : index
    %1 = vector.load %arg1[%c0_1, %c0_2] : memref<64x192xbf16, #tpu.memory_space<vmem>>, vector<64x192xbf16>
    %cst = arith.constant dense<0.000000e+00> : vector<64x192xf32>
    %2 = tpu.matmul %0, %1, %cst {dimension_numbers = #tpu.dot_dimension_numbers<[1], [0], [0], [1], [0, 0, 1, 1], [], []>} : vector<64x64xbf16>, vector<64x192xbf16>, vector<64x192xf32> -> vector<64x192xf32>
    %3 = arith.truncf %2 : vector<64x192xf32> to vector<64x192xbf16>
    %4 = vector.extract_strided_slice %3 {offsets = [0, 0], sizes = [16, 192], strides = [1, 1]} : vector<64x192xbf16> to vector<16x192xbf16>
    %c0_3 = arith.constant 0 : index
    %c0_4 = arith.constant 0 : index
    %c0_5 = arith.constant 0 : index
    %5 = vector.load %arg3[%c0_3, %c0_4, %c0_5] : memref<4x192x48xbf16, #tpu.memory_space<vmem>>, vector<1x192x48xbf16>
    %6 = vector.shape_cast %5 : vector<1x192x48xbf16> to vector<192x48xbf16>
    %cst_6 = arith.constant dense<0.000000e+00> : vector<16x48xf32>
    %7 = tpu.matmul %4, %6, %cst_6 {dimension_numbers = #tpu.dot_dimension_numbers<[1], [0], [0], [1], [0, 0, 1, 1], [], []>} : vector<16x192xbf16>, vector<192x48xbf16>, vector<16x48xf32> -> vector<16x48xf32>
    %c0_7 = arith.constant 0 : index
    %c0_8 = arith.constant 0 : index
    %c0_9 = arith.constant 0 : index
    %8 = vector.load %arg4[%c0_7, %c0_8, %c0_9] : memref<4x16x48xf32, #tpu.memory_space<vmem>>, vector<1x16x48xf32>
    %9 = vector.shape_cast %8 : vector<1x16x48xf32> to vector<16x48xf32>
    %10 = arith.addf %7, %9 : vector<16x48xf32>
    %11 = arith.truncf %10 : vector<16x48xf32> to vector<16x48xbf16>
    %c0_10 = arith.constant 0 : index
    %c0_11 = arith.constant 0 : index
    %c0_12 = arith.constant 0 : index
    %12 = vector.load %arg5[%c0_10, %c0_11, %c0_12] : memref<4x16x48xbf16, #tpu.memory_space<vmem>>, vector<1x16x48xbf16>
    %13 = vector.shape_cast %12 : vector<1x16x48xbf16> to vector<16x48xbf16>
    %14 = vector.shape_cast %11 : vector<16x48xbf16> to vector<1x16x48xbf16>
    tpu.vector_store %arg5[%c0_10, %c0_11, %c0_12], %14 {strides = array<i32>} : memref<4x16x48xbf16, #tpu.memory_space<vmem>>, vector<1x16x48xbf16>,
    %15 = vector.extract_strided_slice %3 {offsets = [16, 0], sizes = [16, 192], strides = [1, 1]} : vector<64x192xbf16> to vector<16x192xbf16>
    %c1 = arith.constant 1 : index
    %c0_13 = arith.constant 0 : index
    %c0_14 = arith.constant 0 : index
    %16 = vector.load %arg3[%c1, %c0_13, %c0_14] : memref<4x192x48xbf16, #tpu.memory_space<vmem>>, vector<1x192x48xbf16>
    %17 = vector.shape_cast %16 : vector<1x192x48xbf16> to vector<192x48xbf16>
    %cst_15 = arith.constant dense<0.000000e+00> : vector<16x48xf32>
    %18 = tpu.matmul %15, %17, %cst_15 {dimension_numbers = #tpu.dot_dimension_numbers<[1], [0], [0], [1], [0, 0, 1, 1], [], []>} : vector<16x192xbf16>, vector<192x48xbf16>, vector<16x48xf32> -> vector<16x48xf32>
    %c1_16 = arith.constant 1 : index
    %c0_17 = arith.constant 0 : index
    %c0_18 = arith.constant 0 : index
    %19 = vector.load %arg4[%c1_16, %c0_17, %c0_18] : memref<4x16x48xf32, #tpu.memory_space<vmem>>, vector<1x16x48xf32>
    %20 = vector.shape_cast %19 : vector<1x16x48xf32> to vector<16x48xf32>
    %21 = arith.addf %18, %20 : vector<16x48xf32>
    %22 = arith.truncf %21 : vector<16x48xf32> to vector<16x48xbf16>
    %c1_19 = arith.constant 1 : index
    %c0_20 = arith.constant 0 : index
    %c0_21 = arith.constant 0 : index
    %23 = vector.load %arg5[%c1_19, %c0_20, %c0_21] : memref<4x16x48xbf16, #tpu.memory_space<vmem>>, vector<1x16x48xbf16>
    %24 = vector.shape_cast %23 : vector<1x16x48xbf16> to vector<16x48xbf16>
    %25 = vector.shape_cast %22 : vector<16x48xbf16> to vector<1x16x48xbf16>
    tpu.vector_store %arg5[%c1_19, %c0_20, %c0_21], %25 {strides = array<i32>} : memref<4x16x48xbf16, #tpu.memory_space<vmem>>, vector<1x16x48xbf16>,
    %26 = vector.extract_strided_slice %3 {offsets = [32, 0], sizes = [16, 192], strides = [1, 1]} : vector<64x192xbf16> to vector<16x192xbf16>
    %c2 = arith.constant 2 : index
    %c0_22 = arith.constant 0 : index
    %c0_23 = arith.constant 0 : index
    %27 = vector.load %arg3[%c2, %c0_22, %c0_23] : memref<4x192x48xbf16, #tpu.memory_space<vmem>>, vector<1x192x48xbf16>
    %28 = vector.shape_cast %27 : vector<1x192x48xbf16> to vector<192x48xbf16>
    %cst_24 = arith.constant dense<0.000000e+00> : vector<16x48xf32>
    %29 = tpu.matmul %26, %28, %cst_24 {dimension_numbers = #tpu.dot_dimension_numbers<[1], [0], [0], [1], [0, 0, 1, 1], [], []>} : vector<16x192xbf16>, vector<192x48xbf16>, vector<16x48xf32> -> vector<16x48xf32>
    %c2_25 = arith.constant 2 : index
    %c0_26 = arith.constant 0 : index
    %c0_27 = arith.constant 0 : index
    %30 = vector.load %arg4[%c2_25, %c0_26, %c0_27] : memref<4x16x48xf32, #tpu.memory_space<vmem>>, vector<1x16x48xf32>
    %31 = vector.shape_cast %30 : vector<1x16x48xf32> to vector<16x48xf32>
    %32 = arith.addf %29, %31 : vector<16x48xf32>
    %33 = arith.truncf %32 : vector<16x48xf32> to vector<16x48xbf16>
    %c2_28 = arith.constant 2 : index
    %c0_29 = arith.constant 0 : index
    %c0_30 = arith.constant 0 : index
    %34 = vector.load %arg5[%c2_28, %c0_29, %c0_30] : memref<4x16x48xbf16, #tpu.memory_space<vmem>>, vector<1x16x48xbf16>
    %35 = vector.shape_cast %34 : vector<1x16x48xbf16> to vector<16x48xbf16>
    %36 = vector.shape_cast %33 : vector<16x48xbf16> to vector<1x16x48xbf16>
    tpu.vector_store %arg5[%c2_28, %c0_29, %c0_30], %36 {strides = array<i32>} : memref<4x16x48xbf16, #tpu.memory_space<vmem>>, vector<1x16x48xbf16>,
    %37 = vector.extract_strided_slice %3 {offsets = [48, 0], sizes = [16, 192], strides = [1, 1]} : vector<64x192xbf16> to vector<16x192xbf16>
    %c3 = arith.constant 3 : index
    %c0_31 = arith.constant 0 : index
    %c0_32 = arith.constant 0 : index
    %38 = vector.load %arg3[%c3, %c0_31, %c0_32] : memref<4x192x48xbf16, #tpu.memory_space<vmem>>, vector<1x192x48xbf16>
    %39 = vector.shape_cast %38 : vector<1x192x48xbf16> to vector<192x48xbf16>
    %cst_33 = arith.constant dense<0.000000e+00> : vector<16x48xf32>
    %40 = tpu.matmul %37, %39, %cst_33 {dimension_numbers = #tpu.dot_dimension_numbers<[1], [0], [0], [1], [0, 0, 1, 1], [], []>} : vector<16x192xbf16>, vector<192x48xbf16>, vector<16x48xf32> -> vector<16x48xf32>
    %c3_34 = arith.constant 3 : index
    %c0_35 = arith.constant 0 : index
    %c0_36 = arith.constant 0 : index
    %41 = vector.load %arg4[%c3_34, %c0_35, %c0_36] : memref<4x16x48xf32, #tpu.memory_space<vmem>>, vector<1x16x48xf32>
    %42 = vector.shape_cast %41 : vector<1x16x48xf32> to vector<16x48xf32>
    %43 = arith.addf %40, %42 : vector<16x48xf32>
    %44 = arith.truncf %43 : vector<16x48xf32> to vector<16x48xbf16>
    %c3_37 = arith.constant 3 : index
    %c0_38 = arith.constant 0 : index
    %c0_39 = arith.constant 0 : index
    %45 = vector.load %arg5[%c3_37, %c0_38, %c0_39] : memref<4x16x48xbf16, #tpu.memory_space<vmem>>, vector<1x16x48xbf16>
    %46 = vector.shape_cast %45 : vector<1x16x48xbf16> to vector<16x48xbf16>
    %47 = vector.shape_cast %44 : vector<16x48xbf16> to vector<1x16x48xbf16>
    tpu.vector_store %arg5[%c3_37, %c0_38, %c0_39], %47 {strides = array<i32>} : memref<4x16x48xbf16, #tpu.memory_space<vmem>>, vector<1x16x48xbf16>,
    return
  }
  func.func @transform_0(%arg0: i32) -> (i32, i32) {
    %c0_i32 = arith.constant 0 : i32
    %c0_i32_0 = arith.constant 0 : i32
    %c0_i32_1 = arith.constant 0 : i32
    return %c0_i32, %c0_i32_0 : i32, i32
  }
  func.func @transform_1(%arg0: i32) -> (i32, i32) {
    %c0_i32 = arith.constant 0 : i32
    %c0_i32_0 = arith.constant 0 : i32
    return %arg0, %c0_i32 : i32, i32
  }
  func.func @transform_2(%arg0: i32) -> (i32, i32, i32) {
    %c0_i32 = arith.constant 0 : i32
    %c0_i32_0 = arith.constant 0 : i32
    %c0_i32_1 = arith.constant 0 : i32
    return %arg0, %c0_i32, %c0_i32_0 : i32, i32, i32
  }
  func.func @transform_3(%arg0: i32) -> (i32, i32, i32) {
    %c0_i32 = arith.constant 0 : i32
    %c0_i32_0 = arith.constant 0 : i32
    %c0_i32_1 = arith.constant 0 : i32
    return %arg0, %c0_i32, %c0_i32_0 : i32, i32, i32
  }
  func.func @transform_4(%arg0: i32) -> (i32, i32, i32) {
    %c0_i32 = arith.constant 0 : i32
    %c0_i32_0 = arith.constant 0 : i32
    %c0_i32_1 = arith.constant 0 : i32
    return %arg0, %c0_i32, %c0_i32_0 : i32, i32, i32
  }
}

module attributes {stable_mosaic.version = 11 : i64} {
  func.func @embed_kernel(%arg0: i32, %arg1: memref<1x8x3072xbf16, #tpu.memory_space<vmem>>, %arg2: memref<1x3072x128xbf16, #tpu.memory_space<vmem>>, %arg3: memref<1x1x128xf32, #tpu.memory_space<vmem>>, %arg4: memref<1x8x128xf32, #tpu.memory_space<vmem>>) attributes {dimension_semantics = [#tpu.dimension_semantics<parallel>], iteration_bounds = array<i64: 2>, scalar_prefetch = 0 : i64, scratch_operands = 0 : i64, tpu.core_type = #tpu.core_type<tc>, window_params = [{transform_indices = @transform_0, window_bounds = array<i64: 1, 8, 3072>}, {transform_indices = @transform_1, window_bounds = array<i64: 1, 3072, 128>}, {transform_indices = @transform_2, window_bounds = array<i64: 1, 1, 128>}, {transform_indices = @transform_3, window_bounds = array<i64: 1, 8, 128>}]} {
    %c0 = arith.constant 0 : index
    %c0_0 = arith.constant 0 : index
    %c0_1 = arith.constant 0 : index
    %0 = vector.load %arg1[%c0, %c0_0, %c0_1] : memref<1x8x3072xbf16, #tpu.memory_space<vmem>>, vector<1x8x3072xbf16>
    %1 = vector.shape_cast %0 : vector<1x8x3072xbf16> to vector<8x3072xbf16>
    %c0_2 = arith.constant 0 : index
    %c0_3 = arith.constant 0 : index
    %c0_4 = arith.constant 0 : index
    %2 = vector.load %arg2[%c0_2, %c0_3, %c0_4] : memref<1x3072x128xbf16, #tpu.memory_space<vmem>>, vector<1x3072x128xbf16>
    %3 = vector.shape_cast %2 : vector<1x3072x128xbf16> to vector<3072x128xbf16>
    %cst = arith.constant dense<0.000000e+00> : vector<8x128xf32>
    %4 = tpu.matmul %1, %3, %cst {dimension_numbers = #tpu.dot_dimension_numbers<[1], [0], [0], [1], [0, 0, 1, 1], [], []>} : vector<8x3072xbf16>, vector<3072x128xbf16>, vector<8x128xf32> -> vector<8x128xf32>
    %c0_5 = arith.constant 0 : index
    %c0_6 = arith.constant 0 : index
    %c0_7 = arith.constant 0 : index
    %5 = vector.load %arg3[%c0_5, %c0_6, %c0_7] : memref<1x1x128xf32, #tpu.memory_space<vmem>>, vector<1x1x128xf32>
    %6 = vector.shape_cast %5 : vector<1x1x128xf32> to vector<1x128xf32>
    %7 = vector.broadcast %6 : vector<1x128xf32> to vector<8x128xf32>
    %8 = arith.addf %4, %7 : vector<8x128xf32>
    %c0_8 = arith.constant 0 : index
    %c0_9 = arith.constant 0 : index
    %c0_10 = arith.constant 0 : index
    %9 = vector.load %arg4[%c0_8, %c0_9, %c0_10] : memref<1x8x128xf32, #tpu.memory_space<vmem>>, vector<1x8x128xf32>
    %10 = vector.shape_cast %9 : vector<1x8x128xf32> to vector<8x128xf32>
    %11 = vector.shape_cast %8 : vector<8x128xf32> to vector<1x8x128xf32>
    tpu.vector_store %arg4[%c0_8, %c0_9, %c0_10], %11 {strides = array<i32>} : memref<1x8x128xf32, #tpu.memory_space<vmem>>, vector<1x8x128xf32>,
    return
  }
  func.func @transform_0(%arg0: i32) -> (i32, i32, i32) {
    %c0_i32 = arith.constant 0 : i32
    %c0_i32_0 = arith.constant 0 : i32
    %c0_i32_1 = arith.constant 0 : i32
    return %arg0, %c0_i32, %c0_i32_0 : i32, i32, i32
  }
  func.func @transform_1(%arg0: i32) -> (i32, i32, i32) {
    %c0_i32 = arith.constant 0 : i32
    %c0_i32_0 = arith.constant 0 : i32
    %c0_i32_1 = arith.constant 0 : i32
    return %arg0, %c0_i32, %c0_i32_0 : i32, i32, i32
  }
  func.func @transform_2(%arg0: i32) -> (i32, i32, i32) {
    %c0_i32 = arith.constant 0 : i32
    %c0_i32_0 = arith.constant 0 : i32
    %c0_i32_1 = arith.constant 0 : i32
    return %arg0, %c0_i32, %c0_i32_0 : i32, i32, i32
  }
  func.func @transform_3(%arg0: i32) -> (i32, i32, i32) {
    %c0_i32 = arith.constant 0 : i32
    %c0_i32_0 = arith.constant 0 : i32
    %c0_i32_1 = arith.constant 0 : i32
    return %arg0, %c0_i32, %c0_i32_0 : i32, i32, i32
  }
}

</mosaic_0001>

<llo_original>
// kernel: hd_multi_clip_embed.5
$region0: #{hd_multi_clip_embed.5}
  #allocation0 [shape = 'u32[]', space=smem, size = 0x4, offset = 0x4, fixed_abs, tag = 'smem constant byte address 0x4 - core index']
  #allocation1 [shape = 'u32[144,128]{1,0:T(1,128)}', space=vmem, size = 0x12000, scoped, tag = 'internal scratch']
  %s0 = inlined_call_operand.vmem [shape: bf16[64,192], index: 0, kind: input, shape index: {}]
  %s1 = inlined_call_operand.vmem [shape: bf16[256,64], index: 1, kind: input, shape index: {}]
  %s2 = inlined_call_operand.vmem [shape: bf16[8,192,96], index: 2, kind: input, shape index: {}]
  %s3 = inlined_call_operand.vmem [shape: f32[8,32,96], index: 3, kind: input, shape index: {}]
  %s4 = inlined_call_operand.vmem [shape: bf16[8,32,96], index: 4, kind: output, shape index: {}]
  %s5 = sld [smem:[#allocation0]]
  $region49: #{hd_multi_clip_embed.5} parent=0
    _
  %s7 = ssub.s32 1, %s5
  %s8 = scalar_select 0, %s7, %s5
  loop: start=0, step=1, limit=4
  $region2: #{hd_multi_clip_embed.5} parent=0 // loop_pre_header
    _
  $region3: #{hd_multi_clip_embed.5} parent=0 // loop_header
    %s10 = sphi 0, %s14
    %p11 = scmp.ge.s32.totalorder %s10, 4
    %s18 = sphi 0, %s18
    %s20 = sphi 0, %s18
    %s21 = sphi 0, %s20
    %s35 = sphi 0, %s21
    %s41 = sphi 0, %s43
    %s44 = sphi 0, %s41
    %s45 = sphi 0, %s44
    %s61 = sphi 0, %s45
    %s67 = sphi 0, %s69
    %s70 = sphi 0, %s67
    %s71 = sphi 0, %s70
    %s87 = sphi 0, %s71
    %s93 = sphi 0, %s95
    %s96 = sphi 0, %s93
    %s97 = sphi 0, %s96
    %s113 = sphi 0, %s97
    %s119 = sphi 0, %s121
    %s122 = sphi 0, %s119
    %s123 = sphi 0, %s122
    %s139 = sphi 0, %s123
  $region4: #{hd_multi_clip_embed.5} parent=0 // loop_header_branch
    %13 = sbr.rel (%p11) target = $region8
  $region5: #{hd_multi_clip_embed.5} parent=0 // loop_body
    %s15 = ssub.s32 %s10, 1
    %s16 = ssub.s32 %s10, 2
    %s17 = sadd.s32 %s10, 1
    %s19 = sadd.s32 %s18, 1
    %p22 = scmp.eq.s32.totalorder %s10, 1
    %p23 = scmp.ne.s32.totalorder %s18, %s20
    %p24 = scmp.eq.s32.totalorder %s10, 0
    %p25 = por %p23, %p24
    %p26 = scmp.ne.s32.totalorder %s18, %s20
    %p27 = scmp.eq.s32.totalorder %s15, 1
    %p28 = por %p26, %p27
    %p29 = scmp.ne.s32.totalorder %s20, %s21
    %p30 = scmp.eq.s32.totalorder %s15, 0
    %p31 = por %p29, %p30
    %p32 = scmp.ne.s32.totalorder %s20, %s21
    %p33 = scmp.eq.s32.totalorder %s16, 1
    %p34 = por %p32, %p33
    %p36 = scmp.ne.s32.totalorder %s21, %s35
    %p37 = scmp.eq.s32.totalorder %s16, 0
    %p38 = por %p36, %p37
    %s39 = ssub.s32 %s10, %s17
    %p40 = scmp.eq.s32.totalorder %s39, 0
    %s42 = sadd.s32 %s41, 1
    %s43 = scalar_select %p40, %s41, %s42
    %p46 = pneg %p40
    %p47 = scmp.eq.s32.totalorder %s10, 1
    %p48 = por %p46, %p47
    %p49 = scmp.ne.s32.totalorder %s41, %s44
    %p50 = scmp.eq.s32.totalorder %s10, 0
    %p51 = por %p49, %p50
    %p52 = scmp.ne.s32.totalorder %s41, %s44
    %p53 = scmp.eq.s32.totalorder %s15, 1
    %p54 = por %p52, %p53
    %p55 = scmp.ne.s32.totalorder %s44, %s45
    %p56 = scmp.eq.s32.totalorder %s15, 0
    %p57 = por %p55, %p56
    %p58 = scmp.ne.s32.totalorder %s44, %s45
    %p59 = scmp.eq.s32.totalorder %s16, 1
    %p60 = por %p58, %p59
    %p62 = scmp.ne.s32.totalorder %s45, %s61
    %p63 = scmp.eq.s32.totalorder %s16, 0
    %p64 = por %p62, %p63
    %s65 = ssub.s32 %s10, %s17
    %p66 = scmp.eq.s32.totalorder %s65, 0
    %s68 = sadd.s32 %s67, 1
    %s69 = scalar_select %p66, %s67, %s68
    %p72 = pneg %p66
    %p73 = scmp.eq.s32.totalorder %s10, 1
    %p74 = por %p72, %p73
    %p75 = scmp.ne.s32.totalorder %s67, %s70
    %p76 = scmp.eq.s32.totalorder %s10, 0
    %p77 = por %p75, %p76
    %p78 = scmp.ne.s32.totalorder %s67, %s70
    %p79 = scmp.eq.s32.totalorder %s15, 1
    %p80 = por %p78, %p79
    %p81 = scmp.ne.s32.totalorder %s70, %s71
    %p82 = scmp.eq.s32.totalorder %s15, 0
    %p83 = por %p81, %p82
    %p84 = scmp.ne.s32.totalorder %s70, %s71
    %p85 = scmp.eq.s32.totalorder %s16, 1
    %p86 = por %p84, %p85
    %p88 = scmp.ne.s32.totalorder %s71, %s87
    %p89 = scmp.eq.s32.totalorder %s16, 0
    %p90 = por %p88, %p89
    %s91 = ssub.s32 %s10, %s17
    %p92 = scmp.eq.s32.totalorder %s91, 0
    %s94 = sadd.s32 %s93, 1
    %s95 = scalar_select %p92, %s93, %s94
    %p98 = pneg %p92
    %p99 = scmp.eq.s32.totalorder %s10, 1
    %p100 = por %p98, %p99
    %p101 = scmp.ne.s32.totalorder %s93, %s96
    %p102 = scmp.eq.s32.totalorder %s10, 0
    %p103 = por %p101, %p102
    %p104 = scmp.ne.s32.totalorder %s93, %s96
    %p105 = scmp.eq.s32.totalorder %s15, 1
    %p106 = por %p104, %p105
    %p107 = scmp.ne.s32.totalorder %s96, %s97
    %p108 = scmp.eq.s32.totalorder %s15, 0
    %p109 = por %p107, %p108
    %p110 = scmp.ne.s32.totalorder %s96, %s97
    %p111 = scmp.eq.s32.totalorder %s16, 1
    %p112 = por %p110, %p111
    %p114 = scmp.ne.s32.totalorder %s97, %s113
    %p115 = scmp.eq.s32.totalorder %s16, 0
    %p116 = por %p114, %p115
    %s117 = ssub.s32 %s10, %s17
    %p118 = scmp.eq.s32.totalorder %s117, 0
    %s120 = sadd.s32 %s119, 1
    %s121 = scalar_select %p118, %s119, %s120
    %p124 = pneg %p118
    %p125 = scmp.eq.s32.totalorder %s10, 1
    %p126 = por %p124, %p125
    %p127 = scmp.ne.s32.totalorder %s119, %s122
    %p128 = scmp.eq.s32.totalorder %s10, 0
    %p129 = por %p127, %p128
    %p130 = scmp.ne.s32.totalorder %s119, %s122
    %p131 = scmp.eq.s32.totalorder %s15, 1
    %p132 = por %p130, %p131
    %p133 = scmp.ne.s32.totalorder %s122, %s123
    %p134 = scmp.eq.s32.totalorder %s15, 0
    %p135 = por %p133, %p134
    %p136 = scmp.ne.s32.totalorder %s122, %s123
    %p137 = scmp.eq.s32.totalorder %s16, 1
    %p138 = por %p136, %p137
    %p140 = scmp.ne.s32.totalorder %s123, %s139
    %p141 = scmp.eq.s32.totalorder %s16, 0
    %p142 = por %p140, %p141
    %p143 = scmp.le.s32.totalorder 1, %s10
    %p144 = scmp.lt.s32.totalorder %s10, 3
    %p145 = pnand %p143, %p144
    %p146 = pneg %p145
    // Predicated region
    $region9: #{hd_multi_clip_embed.5} parent=5 // pred_check
      _
    $region10: #{hd_multi_clip_embed.5} parent=5 // pred_check_branch
      %148 = sbr.rel (%p145) target = $region12
    $region11: #{hd_multi_clip_embed.5} parent=5 // pred_region
      %s149 = ssub.s32 %s10, 1
      // Predicated region
      $region13: #{hd_multi_clip_embed.5} parent=11 // pred_check
        %p150 = pneg %p31
      $region14: #{hd_multi_clip_embed.5} parent=11 // pred_check_branch
        %152 = sbr.rel (%p150) target = $region16
      $region15: #{hd_multi_clip_embed.5} parent=11 // pred_region
        _
      $region16: #{hd_multi_clip_embed.5} parent=11 // pred_fallthru
        _
    $region12: #{hd_multi_clip_embed.5} parent=5 // pred_fallthru
      _
    %p153 = scmp.lt.s32.totalorder %s10, 2
    // Predicated region
    $region17: #{hd_multi_clip_embed.5} parent=5 // pred_check
      %p154 = pneg %p153
    $region18: #{hd_multi_clip_embed.5} parent=5 // pred_check_branch
      %156 = sbr.rel (%p154) target = $region20
    $region19: #{hd_multi_clip_embed.5} parent=5 // pred_region
      // Predicated region
      $region21: #{hd_multi_clip_embed.5} parent=19 // pred_check
        %p157 = pneg %p51
      $region22: #{hd_multi_clip_embed.5} parent=19 // pred_check_branch
        %159 = sbr.rel (%p157) target = $region24
      $region23: #{hd_multi_clip_embed.5} parent=19 // pred_region
        %s160 = smul.u32 16, %s10
        %p161 = scmp.lt.s32.totalorder %s160, 31
        %s162 = scalar_select %p161, %s160, 31
        %s163 = smul.addr %s162, 4
        %s164 = scalar_lea.vmem %s1, %s163
        %s165 = smul.u32 16, %s10
      $region24: #{hd_multi_clip_embed.5} parent=19 // pred_fallthru
        _
      // Predicated region
      $region25: #{hd_multi_clip_embed.5} parent=19 // pred_check
        %p166 = pneg %p77
      $region26: #{hd_multi_clip_embed.5} parent=19 // pred_check_branch
        %168 = sbr.rel (%p166) target = $region28
      $region27: #{hd_multi_clip_embed.5} parent=19 // pred_region
        %s169 = smul.u32 4, %s10
        %p170 = scmp.lt.s32.totalorder %s169, 7
        %s171 = scalar_select %p170, %s169, 7
        %s172 = smul.addr %s171, 24
        %s173 = smul.addr %s172, 4
        %s174 = scalar_lea.vmem %s2, %s173
        %s175 = smul.u32 4, %s10
      $region28: #{hd_multi_clip_embed.5} parent=19 // pred_fallthru
        _
      // Predicated region
      $region29: #{hd_multi_clip_embed.5} parent=19 // pred_check
        %p176 = pneg %p103
      $region30: #{hd_multi_clip_embed.5} parent=19 // pred_check_branch
        %178 = sbr.rel (%p176) target = $region32
      $region31: #{hd_multi_clip_embed.5} parent=19 // pred_region
        %s179 = smul.u32 4, %s10
        %p180 = scmp.lt.s32.totalorder %s179, 7
        %s181 = scalar_select %p180, %s179, 7
        %s182 = smul.addr %s181, 4
        %s183 = smul.addr %s182, 8
        %s184 = scalar_lea.vmem %s3, %s183
        %s185 = smul.u32 4, %s10
      $region32: #{hd_multi_clip_embed.5} parent=19 // pred_fallthru
        _
    $region20: #{hd_multi_clip_embed.5} parent=5 // pred_fallthru
      _
    %p186 = scmp.le.s32.totalorder 1, %s10
    %p187 = scmp.lt.s32.totalorder %s10, 3
    %p188 = pnand %p186, %p187
    %p189 = pneg %p188
    // Predicated region
    $region33: #{hd_multi_clip_embed.5} parent=5 // pred_check
      _
    $region34: #{hd_multi_clip_embed.5} parent=5 // pred_check_branch
      %191 = sbr.rel (%p188) target = $region36
    $region35: #{hd_multi_clip_embed.5} parent=5 // pred_region
      %s192 = ssub.s32 %s10, 1
      %p193 = pneg %p31
      %p194 = pneg %p28
      %s195 = smul.u32 16, %s15
      %p196 = scmp.lt.s32.totalorder %s195, 31
      %s197 = scalar_select %p196, %s195, 31
      %s198 = smul.addr %s197, 4
      %s199 = scalar_lea.vmem %s1, %s198
      %p200 = pneg %p57
      %p201 = pneg %p54
      %s202 = smul.u32 4, %s15
      %p203 = scmp.lt.s32.totalorder %s202, 7
      %s204 = scalar_select %p203, %s202, 7
      %s205 = smul.addr %s204, 24
      %s206 = smul.addr %s205, 4
      %s207 = scalar_lea.vmem %s2, %s206
      %p208 = pneg %p83
      %p209 = pneg %p80
      %s210 = smul.u32 4, %s15
      %p211 = scmp.lt.s32.totalorder %s210, 7
      %s212 = scalar_select %p211, %s210, 7
      %s213 = smul.addr %s212, 4
      %s214 = smul.addr %s213, 8
      %s215 = scalar_lea.vmem %s3, %s214
      %p216 = pneg %p109
      %p217 = pneg %p106
      %p218 = pneg %p135
      %p219 = pneg %p132
      %s220 = smul.u32 4, %s15
      %p221 = scmp.lt.s32.totalorder %s220, 7
      %s222 = scalar_select %p221, %s220, 7
      %s223 = smul.addr %s222, 4
      %s224 = smul.addr %s223, 4
      %s225 = scalar_lea.vmem %s4, %s224
      %s226 = smul.u32 16, %s15
      %p227 = scmp.lt.s32.totalorder %s226, 31
      %s228 = scalar_select %p227, %s226, 31
      %s229 = smul.addr %s228, 4
      %s230 = scalar_lea.vmem %s1, %s229
      %s231 = smul.u32 16, %s15
      %s232 = smul.u32 4, %s15
      %p233 = scmp.lt.s32.totalorder %s232, 7
      %s234 = scalar_select %p233, %s232, 7
      %s235 = smul.addr %s234, 24
      %s236 = smul.addr %s235, 4
      %s237 = scalar_lea.vmem %s2, %s236
      %s238 = smul.u32 4, %s15
      %s239 = smul.u32 4, %s15
      %p240 = scmp.lt.s32.totalorder %s239, 7
      %s241 = scalar_select %p240, %s239, 7
      %s242 = smul.addr %s241, 4
      %s243 = smul.addr %s242, 8
      %s244 = scalar_lea.vmem %s3, %s243
      %s245 = smul.u32 4, %s15
      %s246 = smul.u32 4, %s15
      %p247 = scmp.lt.s32.totalorder %s246, 7
      %s248 = scalar_select %p247, %s246, 7
      %s249 = smul.addr %s248, 4
      %s250 = smul.addr %s249, 4
      %s251 = scalar_lea.vmem %s4, %s250
      %s252 = smul.u32 4, %s15
      %v254 = vld [vmem:[%s230] sm:$0xf]
      %v255 = vld [vmem:[%s230 + $0x4] sm:$0xf]
      %v256 = vld [vmem:[%s230 + $0x8] sm:$0xf]
      %v257 = vld [vmem:[%s230 + $0xc] sm:$0xf]
      %v258 = vld [vmem:[%s230 + $0x10] sm:$0xf]
      %v259 = vld [vmem:[%s230 + $0x14] sm:$0xf]
      %v260 = vld [vmem:[%s230 + $0x18] sm:$0xf]
      %v261 = vld [vmem:[%s230 + $0x1c] sm:$0xf]
      %v262 = vld [vmem:[%s230 + $0x20] sm:$0xf]
      %v263 = vld [vmem:[%s230 + $0x24] sm:$0xf]
      %v264 = vld [vmem:[%s230 + $0x28] sm:$0xf]
      %v265 = vld [vmem:[%s230 + $0x2c] sm:$0xf]
      %v266 = vld [vmem:[%s230 + $0x30] sm:$0xf]
      %v267 = vld [vmem:[%s230 + $0x34] sm:$0xf]
      %v268 = vld [vmem:[%s230 + $0x38] sm:$0xf]
      %v269 = vld [vmem:[%s230 + $0x3c] sm:$0xf]
      %v270 = vld [vmem:[%s0] sm:$0xff]
      %v271 = vld [vmem:[%s0 + $0x8] sm:$0xff]
      %v272 = vld [vmem:[%s0 + $0x10] sm:$0xff]
      %v273 = vld [vmem:[%s0 + $0x18] sm:$0xff]
      %v274 = vld [vmem:[%s0 + $0x20] sm:$0xff]
      %v275 = vld [vmem:[%s0 + $0x28] sm:$0xff]
      %v276 = vld [vmem:[%s0 + $0x30] sm:$0xff]
      %v277 = vld [vmem:[%s0 + $0x38] sm:$0xff]
      %v294 = vunpack.c.l.b16 %v254
      %v295 = vunpack.c.l.b16 %v255
      %v296 = vunpack.c.l.b16 %v256
      %v297 = vunpack.c.l.b16 %v257
      %v298 = vunpack.c.l.b16 %v258
      %v299 = vunpack.c.l.b16 %v259
      %v300 = vunpack.c.l.b16 %v260
      %v301 = vunpack.c.l.b16 %v261
      %v302 = vunpack.c.l.b16 %v262
      %v303 = vunpack.c.l.b16 %v263
      %v304 = vunpack.c.l.b16 %v264
      %v305 = vunpack.c.l.b16 %v265
      %v306 = vunpack.c.l.b16 %v266
      %v307 = vunpack.c.l.b16 %v267
      %v308 = vunpack.c.l.b16 %v268
      %v309 = vunpack.c.l.b16 %v269
      %v310 = vpack.c.b16 %v295, %v294
      %v311 = vpack.c.b16 %v297, %v296
      %v312 = vpack.c.b16 %v299, %v298
      %v313 = vpack.c.b16 %v301, %v300
      %v314 = vpack.c.b16 %v303, %v302
      %v315 = vpack.c.b16 %v305, %v304
      %v316 = vpack.c.b16 %v307, %v306
      %v317 = vpack.c.b16 %v309, %v308
      %v326 = vunpack.c.l.b16 %v270
      %v327 = vunpack.c.h.b16 %v270
      %v328 = vunpack.c.l.b16 %v271
      %v329 = vunpack.c.h.b16 %v271
      %v330 = vunpack.c.l.b16 %v272
      %v331 = vunpack.c.h.b16 %v272
      %v332 = vunpack.c.l.b16 %v273
      %v333 = vunpack.c.h.b16 %v273
      %v334 = vunpack.c.l.b16 %v274
      %v335 = vunpack.c.h.b16 %v274
      %v336 = vunpack.c.l.b16 %v275
      %v337 = vunpack.c.h.b16 %v275
      %v338 = vunpack.c.l.b16 %v276
      %v339 = vunpack.c.h.b16 %v276
      %v340 = vunpack.c.l.b16 %v277
      %v341 = vunpack.c.h.b16 %v277
      %v342 = vpack.c.b16 %v328, %v326
      %v343 = vpack.c.b16 %v329, %v327
      %v344 = vpack.c.b16 %v332, %v330
      %v345 = vpack.c.b16 %v333, %v331
      %v346 = vpack.c.b16 %v336, %v334
      %v347 = vpack.c.b16 %v337, %v335
      %v348 = vpack.c.b16 %v340, %v338
      %v349 = vpack.c.b16 %v341, %v339
      %vm358 = vcmask 523264
      %v360 = vsel %vm358, %v310, 0
      %v363 = vsel %vm358, %v311, 0
      %v366 = vsel %vm358, %v312, 0
      %v369 = vsel %vm358, %v313, 0
      %v372 = vsel %vm358, %v314, 0
      %v375 = vsel %vm358, %v315, 0
      %v378 = vsel %vm358, %v316, 0
      %v381 = vsel %vm358, %v317, 0
      %383 = vmatprep.subr.bf16.mxu0 %v343
      %384 = vmatpush1.bf16.msra.mxu0 %v342
      %385 = vmatprep.subr.bf16.mxu0 %v345
      %386 = vmatpush1.bf16.msra.mxu0 %v344
      %387 = vmatprep.subr.bf16.mxu0 %v347
      %388 = vmatpush1.bf16.msra.mxu0 %v346
      %389 = vmatprep.subr.bf16.mxu0 %v349
      %390 = vmatpush1.bf16.msra.mxu0 %v348
      %391 = vmatprep.subr.bf16.mxu0 0
      %392 = vmatpush1.bf16.msra.mxu0 0
      %393 = vmatprep.subr.bf16.mxu0 0
      %394 = vmatpush1.bf16.msra.mxu0 0
      %395 = vmatprep.subr.bf16.mxu0 0
      %396 = vmatpush1.bf16.msra.mxu0 0
      %397 = vmatprep.subr.bf16.mxu0 0
      %398 = vmatpush1.bf16.msra.mxu0 0
      %399 = vmatprep.subr.bf16.mxu0 0
      %400 = vmatpush1.bf16.msra.mxu0 0
      %401 = vmatprep.subr.bf16.mxu0 0
      %402 = vmatpush1.bf16.msra.mxu0 0
      %403 = vmatprep.subr.bf16.mxu0 0
      %404 = vmatpush1.bf16.msra.mxu0 0
      %405 = vmatprep.subr.bf16.mxu0 0
      %406 = vmatpush1.bf16.msra.mxu0 0
      %407 = vmatprep.subr.bf16.mxu0 0
      %408 = vmatpush1.bf16.msra.mxu0 0
      %409 = vmatprep.subr.bf16.mxu0 0
      %410 = vmatpush1.bf16.msra.mxu0 0
      %411 = vmatprep.subr.bf16.mxu0 0
      %412 = vmatpush1.bf16.msra.mxu0 0
      %413 = vmatprep.subr.bf16.mxu0 0
      %414 = vmatpush1.bf16.msra.mxu0 0
      %415 = vmatprep.mubr.bf16.mxu0 0
      %416 = vmatmul.mubr.bf16.gmra.mrb[0].mxu0 %v360
      %v417 = vpop.f32.mrb[0].mxu0
      %v418 = vadd.f32 0.0, %v417
      %v419 = vpop.f32.mrb[0].mxu0
      %v420 = vadd.f32 0.0, %v419
      %v421 = vpop.f32.mrb[0].mxu0
      %v422 = vadd.f32 0.0, %v421
      %v423 = vpop.f32.mrb[0].mxu0
      %v424 = vadd.f32 0.0, %v423
      %425 = vmatprep.mubr.bf16.mxu0 0
      %426 = vmatmul.mubr.bf16.gmra.mrb[0].mxu0 %v363
      %v427 = vpop.f32.mrb[0].mxu0
      %v428 = vadd.f32 0.0, %v427
      %v429 = vpop.f32.mrb[0].mxu0
      %v430 = vadd.f32 0.0, %v429
      %v431 = vpop.f32.mrb[0].mxu0
      %v432 = vadd.f32 0.0, %v431
      %v433 = vpop.f32.mrb[0].mxu0
      %v434 = vadd.f32 0.0, %v433
      %435 = vmatprep.mubr.bf16.mxu0 0
      %436 = vmatmul.mubr.bf16.gmra.mrb[0].mxu0 %v366
      %v437 = vpop.f32.mrb[0].mxu0
      %v438 = vadd.f32 0.0, %v437
      %v439 = vpop.f32.mrb[0].mxu0
      %v440 = vadd.f32 0.0, %v439
      %v441 = vpop.f32.mrb[0].mxu0
      %v442 = vadd.f32 0.0, %v441
      %v443 = vpop.f32.mrb[0].mxu0
      %v444 = vadd.f32 0.0, %v443
      %445 = vmatprep.mubr.bf16.mxu0 0
      %446 = vmatmul.mubr.bf16.gmra.mrb[0].mxu0 %v369
      %v447 = vpop.f32.mrb[0].mxu0
      %v448 = vadd.f32 0.0, %v447
      %v449 = vpop.f32.mrb[0].mxu0
      %v450 = vadd.f32 0.0, %v449
      %v451 = vpop.f32.mrb[0].mxu0
      %v452 = vadd.f32 0.0, %v451
      %v453 = vpop.f32.mrb[0].mxu0
      %v454 = vadd.f32 0.0, %v453
      %455 = vmatprep.mubr.bf16.mxu0 0
      %456 = vmatmul.mubr.bf16.gmra.mrb[0].mxu0 %v372
      %v457 = vpop.f32.mrb[0].mxu0
      %v458 = vadd.f32 0.0, %v457
      %v459 = vpop.f32.mrb[0].mxu0
      %v460 = vadd.f32 0.0, %v459
      %v461 = vpop.f32.mrb[0].mxu0
      %v462 = vadd.f32 0.0, %v461
      %v463 = vpop.f32.mrb[0].mxu0
      %v464 = vadd.f32 0.0, %v463
      %465 = vmatprep.mubr.bf16.mxu0 0
      %466 = vmatmul.mubr.bf16.gmra.mrb[0].mxu0 %v375
      %v467 = vpop.f32.mrb[0].mxu0
      %v468 = vadd.f32 0.0, %v467
      %v469 = vpop.f32.mrb[0].mxu0
      %v470 = vadd.f32 0.0, %v469
      %v471 = vpop.f32.mrb[0].mxu0
      %v472 = vadd.f32 0.0, %v471
      %v473 = vpop.f32.mrb[0].mxu0
      %v474 = vadd.f32 0.0, %v473
      %475 = vmatprep.mubr.bf16.mxu0 0
      %476 = vmatmul.mubr.bf16.gmra.mrb[0].mxu0 %v378
      %v477 = vpop.f32.mrb[0].mxu0
      %v478 = vadd.f32 0.0, %v477
      %v479 = vpop.f32.mrb[0].mxu0
      %v480 = vadd.f32 0.0, %v479
      %v481 = vpop.f32.mrb[0].mxu0
      %v482 = vadd.f32 0.0, %v481
      %v483 = vpop.f32.mrb[0].mxu0
      %v484 = vadd.f32 0.0, %v483
      %485 = vmatprep.mubr.bf16.mxu0 0
      %486 = vmatmul.mubr.bf16.gmra.mrb[0].mxu0 %v381
      %v487 = vpop.f32.mrb[0].mxu0
      %v488 = vadd.f32 0.0, %v487
      %v489 = vpop.f32.mrb[0].mxu0
      %v490 = vadd.f32 0.0, %v489
      %v491 = vpop.f32.mrb[0].mxu0
      %v492 = vadd.f32 0.0, %v491
      %v493 = vpop.f32.mrb[0].mxu0
      %v494 = vadd.f32 0.0, %v493
      %495 = vdwg.mxu0
      %v496 = vpack.c.bf16 %v422, %v418
      %v497 = vpack.c.bf16 %v424, %v420
      %v498 = vpack.c.bf16 %v432, %v428
      %v499 = vpack.c.bf16 %v434, %v430
      %v500 = vpack.c.bf16 %v442, %v438
      %v501 = vpack.c.bf16 %v444, %v440
      %v502 = vpack.c.bf16 %v452, %v448
      %v503 = vpack.c.bf16 %v454, %v450
      %v504 = vpack.c.bf16 %v462, %v458
      %v505 = vpack.c.bf16 %v464, %v460
      %v506 = vpack.c.bf16 %v472, %v468
      %v507 = vpack.c.bf16 %v474, %v470
      %v508 = vpack.c.bf16 %v482, %v478
      %v509 = vpack.c.bf16 %v484, %v480
      %v510 = vpack.c.bf16 %v492, %v488
      %v511 = vpack.c.bf16 %v494, %v490
      %v512 = vld [vmem:[%s237] sm:$0xf]
      %v513 = vld [vmem:[%s237 + $0x4] sm:$0xf]
      %v514 = vld [vmem:[%s237 + $0x8] sm:$0xf]
      %v515 = vld [vmem:[%s237 + $0xc] sm:$0xf]
      %v516 = vld [vmem:[%s237 + $0x10] sm:$0xf]
      %v517 = vld [vmem:[%s237 + $0x14] sm:$0xf]
      %v518 = vld [vmem:[%s237 + $0x18] sm:$0xf]
      %v519 = vld [vmem:[%s237 + $0x1c] sm:$0xf]
      %v520 = vld [vmem:[%s237 + $0x20] sm:$0xf]
      %v521 = vld [vmem:[%s237 + $0x24] sm:$0xf]
      %v522 = vld [vmem:[%s237 + $0x28] sm:$0xf]
      %v523 = vld [vmem:[%s237 + $0x2c] sm:$0xf]
      %v524 = vld [vmem:[%s237 + $0x30] sm:$0xf]
      %v525 = vld [vmem:[%s237 + $0x34] sm:$0xf]
      %v526 = vld [vmem:[%s237 + $0x38] sm:$0xf]
      %v527 = vld [vmem:[%s237 + $0x3c] sm:$0xf]
      %v528 = vld [vmem:[%s237 + $0x40] sm:$0xf]
      %v529 = vld [vmem:[%s237 + $0x44] sm:$0xf]
      %v530 = vld [vmem:[%s237 + $0x48] sm:$0xf]
      %v531 = vld [vmem:[%s237 + $0x4c] sm:$0xf]
      %v532 = vld [vmem:[%s237 + $0x50] sm:$0xf]
      %v533 = vld [vmem:[%s237 + $0x54] sm:$0xf]
      %v534 = vld [vmem:[%s237 + $0x58] sm:$0xf]
      %v535 = vld [vmem:[%s237 + $0x5c] sm:$0xf]
      %v536 = vld [vmem:[%s244] sm:$0xff]
      %v537 = vld [vmem:[%s244 + $0x8] sm:$0xff]
      %v538 = vld [vmem:[%s244 + $0x10] sm:$0xff]
      %v539 = vld [vmem:[%s244 + $0x18] sm:$0xff]
      %v564 = vunpack.c.l.b16 %v512
      %v565 = vunpack.c.l.b16 %v513
      %v566 = vunpack.c.l.b16 %v514
      %v567 = vunpack.c.l.b16 %v515
      %v568 = vunpack.c.l.b16 %v516
      %v569 = vunpack.c.l.b16 %v517
      %v570 = vunpack.c.l.b16 %v518
      %v571 = vunpack.c.l.b16 %v519
      %v572 = vunpack.c.l.b16 %v520
      %v573 = vunpack.c.l.b16 %v521
      %v574 = vunpack.c.l.b16 %v522
      %v575 = vunpack.c.l.b16 %v523
      %v576 = vunpack.c.l.b16 %v524
      %v577 = vunpack.c.l.b16 %v525
      %v578 = vunpack.c.l.b16 %v526
      %v579 = vunpack.c.l.b16 %v527
      %v580 = vunpack.c.l.b16 %v528
      %v581 = vunpack.c.l.b16 %v529
      %v582 = vunpack.c.l.b16 %v530
      %v583 = vunpack.c.l.b16 %v531
      %v584 = vunpack.c.l.b16 %v532
      %v585 = vunpack.c.l.b16 %v533
      %v586 = vunpack.c.l.b16 %v534
      %v587 = vunpack.c.l.b16 %v535
      %v588 = vpack.c.b16 %v565, %v564
      %v589 = vpack.c.b16 %v567, %v566
      %v590 = vpack.c.b16 %v569, %v568
      %v591 = vpack.c.b16 %v571, %v570
      %v592 = vpack.c.b16 %v573, %v572
      %v593 = vpack.c.b16 %v575, %v574
      %v594 = vpack.c.b16 %v577, %v576
      %v595 = vpack.c.b16 %v579, %v578
      %v596 = vpack.c.b16 %v581, %v580
      %v597 = vpack.c.b16 %v583, %v582
      %v598 = vpack.c.b16 %v585, %v584
      %v599 = vpack.c.b16 %v587, %v586
      %v613 = vsel %vm358, %v497, 0
      %v616 = vsel %vm358, %v499, 0
      %618 = vmatprep.subr.bf16.mxu0 0
      %619 = vmatpush1.bf16.msra.mxu0 %v588
      %620 = vmatprep.subr.bf16.mxu0 0
      %621 = vmatpush1.bf16.msra.mxu0 %v589
      %622 = vmatprep.subr.bf16.mxu0 0
      %623 = vmatpush1.bf16.msra.mxu0 %v590
      %624 = vmatprep.subr.bf16.mxu0 0
      %625 = vmatpush1.bf16.msra.mxu0 %v591
      %626 = vmatprep.subr.bf16.mxu0 0
      %627 = vmatpush1.bf16.msra.mxu0 %v592
      %628 = vmatprep.subr.bf16.mxu0 0
      %629 = vmatpush1.bf16.msra.mxu0 %v593
      %630 = vmatprep.subr.bf16.mxu0 0
      %631 = vmatpush1.bf16.msra.mxu0 %v594
      %632 = vmatprep.subr.bf16.mxu0 0
      %633 = vmatpush1.bf16.msra.mxu0 %v595
      %634 = vmatprep.subr.bf16.mxu0 0
      %635 = vmatpush1.bf16.msra.mxu0 %v596
      %636 = vmatprep.subr.bf16.mxu0 0
      %637 = vmatpush1.bf16.msra.mxu0 %v597
      %638 = vmatprep.subr.bf16.mxu0 0
      %639 = vmatpush1.bf16.msra.mxu0 %v598
      %640 = vmatprep.subr.bf16.mxu0 0
      %641 = vmatpush1.bf16.msra.mxu0 %v599
      %642 = vmatprep.subr.bf16.mxu0 0
      %643 = vmatpush1.bf16.msra.mxu0 0
      %644 = vmatprep.subr.bf16.mxu0 0
      %645 = vmatpush1.bf16.msra.mxu0 0
      %646 = vmatprep.subr.bf16.mxu0 0
      %647 = vmatpush1.bf16.msra.mxu0 0
      %648 = vmatprep.subr.bf16.mxu0 0
      %649 = vmatpush1.bf16.msra.mxu0 0
      %650 = vmatprep.mubr.bf16.mxu0 %v613
      %651 = vmatmul.mubr.bf16.gmra.mrb[0].mxu0 %v496
      %v652 = vpop.f32.mrb[0].mxu0
      %v653 = vadd.f32 %v536, %v652
      %v654 = vpop.f32.mrb[0].mxu0
      %v655 = vpop.f32.mrb[0].mxu0
      %v656 = vadd.f32 %v537, %v655
      %v657 = vpop.f32.mrb[0].mxu0
      %658 = vmatprep.mubr.bf16.mxu0 %v616
      %659 = vmatmul.mubr.bf16.gmra.mrb[0].mxu0 %v498
      %v660 = vpop.f32.mrb[0].mxu0
      %v661 = vadd.f32 %v538, %v660
      %v662 = vpop.f32.mrb[0].mxu0
      %v663 = vpop.f32.mrb[0].mxu0
      %v664 = vadd.f32 %v539, %v663
      %v665 = vpop.f32.mrb[0].mxu0
      %666 = vdwg.mxu0
      %v667 = vpack.c.bf16 %v656, %v653
      %v668 = vpack.c.bf16 %v664, %v661
      %v671 = vunpack.c.l.b16 %v667
      %v672 = vunpack.c.h.b16 %v667
      %v673 = vunpack.c.l.b16 %v668
      %v674 = vunpack.c.h.b16 %v668
      %v675 = vpack.c.b16 %v671, %v671
      %v676 = vpack.c.b16 %v672, %v672
      %v677 = vpack.c.b16 %v673, %v673
      %v678 = vpack.c.b16 %v674, %v674
      %vm683 = vcmask 781312
      %684 = vst.msk [vmem:[%s251] sm:$0xf] %vm683, %v675
      %685 = vst.msk [vmem:[%s251 + $0x4] sm:$0xf] %vm683, %v676
      %686 = vst.msk [vmem:[%s251 + $0x8] sm:$0xf] %vm683, %v677
      %687 = vst.msk [vmem:[%s251 + $0xc] sm:$0xf] %vm683, %v678
      %s688 = scalar_lea.vmem %s237, 96
      %v689 = vld [vmem:[%s688] sm:$0xf]
      %v690 = vld [vmem:[%s688 + $0x4] sm:$0xf]
      %v691 = vld [vmem:[%s688 + $0x8] sm:$0xf]
      %v692 = vld [vmem:[%s688 + $0xc] sm:$0xf]
      %v693 = vld [vmem:[%s688 + $0x10] sm:$0xf]
      %v694 = vld [vmem:[%s688 + $0x14] sm:$0xf]
      %v695 = vld [vmem:[%s688 + $0x18] sm:$0xf]
      %v696 = vld [vmem:[%s688 + $0x1c] sm:$0xf]
      %v697 = vld [vmem:[%s688 + $0x20] sm:$0xf]
      %v698 = vld [vmem:[%s688 + $0x24] sm:$0xf]
      %v699 = vld [vmem:[%s688 + $0x28] sm:$0xf]
      %v700 = vld [vmem:[%s688 + $0x2c] sm:$0xf]
      %v701 = vld [vmem:[%s688 + $0x30] sm:$0xf]
      %v702 = vld [vmem:[%s688 + $0x34] sm:$0xf]
      %v703 = vld [vmem:[%s688 + $0x38] sm:$0xf]
      %v704 = vld [vmem:[%s688 + $0x3c] sm:$0xf]
      %v705 = vld [vmem:[%s688 + $0x40] sm:$0xf]
      %v706 = vld [vmem:[%s688 + $0x44] sm:$0xf]
      %v707 = vld [vmem:[%s688 + $0x48] sm:$0xf]
      %v708 = vld [vmem:[%s688 + $0x4c] sm:$0xf]
      %v709 = vld [vmem:[%s688 + $0x50] sm:$0xf]
      %v710 = vld [vmem:[%s688 + $0x54] sm:$0xf]
      %v711 = vld [vmem:[%s688 + $0x58] sm:$0xf]
      %v712 = vld [vmem:[%s688 + $0x5c] sm:$0xf]
      %s713 = scalar_lea.vmem %s244, 32
      %v714 = vld [vmem:[%s713] sm:$0xff]
      %v715 = vld [vmem:[%s713 + $0x8] sm:$0xff]
      %v716 = vld [vmem:[%s713 + $0x10] sm:$0xff]
      %v717 = vld [vmem:[%s713 + $0x18] sm:$0xff]
      %v742 = vunpack.c.l.b16 %v689
      %v743 = vunpack.c.l.b16 %v690
      %v744 = vunpack.c.l.b16 %v691
      %v745 = vunpack.c.l.b16 %v692
      %v746 = vunpack.c.l.b16 %v693
      %v747 = vunpack.c.l.b16 %v694
      %v748 = vunpack.c.l.b16 %v695
      %v749 = vunpack.c.l.b16 %v696
      %v750 = vunpack.c.l.b16 %v697
      %v751 = vunpack.c.l.b16 %v698
      %v752 = vunpack.c.l.b16 %v699
      %v753 = vunpack.c.l.b16 %v700
      %v754 = vunpack.c.l.b16 %v701
      %v755 = vunpack.c.l.b16 %v702
      %v756 = vunpack.c.l.b16 %v703
      %v757 = vunpack.c.l.b16 %v704
      %v758 = vunpack.c.l.b16 %v705
      %v759 = vunpack.c.l.b16 %v706
      %v760 = vunpack.c.l.b16 %v707
      %v761 = vunpack.c.l.b16 %v708
      %v762 = vunpack.c.l.b16 %v709
      %v763 = vunpack.c.l.b16 %v710
      %v764 = vunpack.c.l.b16 %v711
      %v765 = vunpack.c.l.b16 %v712
      %v766 = vpack.c.b16 %v743, %v742
      %v767 = vpack.c.b16 %v745, %v744
      %v768 = vpack.c.b16 %v747, %v746
      %v769 = vpack.c.b16 %v749, %v748
      %v770 = vpack.c.b16 %v751, %v750
      %v771 = vpack.c.b16 %v753, %v752
      %v772 = vpack.c.b16 %v755, %v754
      %v773 = vpack.c.b16 %v757, %v756
      %v774 = vpack.c.b16 %v759, %v758
      %v775 = vpack.c.b16 %v761, %v760
      %v776 = vpack.c.b16 %v763, %v762
      %v777 = vpack.c.b16 %v765, %v764
      %v791 = vsel %vm358, %v501, 0
      %v794 = vsel %vm358, %v503, 0
      %796 = vmatprep.subr.bf16.mxu0 0
      %797 = vmatpush1.bf16.msra.mxu0 %v766
      %798 = vmatprep.subr.bf16.mxu0 0
      %799 = vmatpush1.bf16.msra.mxu0 %v767
      %800 = vmatprep.subr.bf16.mxu0 0
      %801 = vmatpush1.bf16.msra.mxu0 %v768
      %802 = vmatprep.subr.bf16.mxu0 0
      %803 = vmatpush1.bf16.msra.mxu0 %v769
      %804 = vmatprep.subr.bf16.mxu0 0
      %805 = vmatpush1.bf16.msra.mxu0 %v770
      %806 = vmatprep.subr.bf16.mxu0 0
      %807 = vmatpush1.bf16.msra.mxu0 %v771
      %808 = vmatprep.subr.bf16.mxu0 0
      %809 = vmatpush1.bf16.msra.mxu0 %v772
      %810 = vmatprep.subr.bf16.mxu0 0
      %811 = vmatpush1.bf16.msra.mxu0 %v773
      %812 = vmatprep.subr.bf16.mxu0 0
      %813 = vmatpush1.bf16.msra.mxu0 %v774
      %814 = vmatprep.subr.bf16.mxu0 0
      %815 = vmatpush1.bf16.msra.mxu0 %v775
      %816 = vmatprep.subr.bf16.mxu0 0
      %817 = vmatpush1.bf16.msra.mxu0 %v776
      %818 = vmatprep.subr.bf16.mxu0 0
      %819 = vmatpush1.bf16.msra.mxu0 %v777
      %820 = vmatprep.subr.bf16.mxu0 0
      %821 = vmatpush1.bf16.msra.mxu0 0
      %822 = vmatprep.subr.bf16.mxu0 0
      %823 = vmatpush1.bf16.msra.mxu0 0
      %824 = vmatprep.subr.bf16.mxu0 0
      %825 = vmatpush1.bf16.msra.mxu0 0
      %826 = vmatprep.subr.bf16.mxu0 0
      %827 = vmatpush1.bf16.msra.mxu0 0
      %828 = vmatprep.mubr.bf16.mxu0 %v791
      %829 = vmatmul.mubr.bf16.gmra.mrb[0].mxu0 %v500
      %v830 = vpop.f32.mrb[0].mxu0
      %v831 = vadd.f32 %v714, %v830
      %v832 = vpop.f32.mrb[0].mxu0
      %v833 = vpop.f32.mrb[0].mxu0
      %v834 = vadd.f32 %v715, %v833
      %v835 = vpop.f32.mrb[0].mxu0
      %836 = vmatprep.mubr.bf16.mxu0 %v794
      %837 = vmatmul.mubr.bf16.gmra.mrb[0].mxu0 %v502
      %v838 = vpop.f32.mrb[0].mxu0
      %v839 = vadd.f32 %v716, %v838
      %v840 = vpop.f32.mrb[0].mxu0
      %v841 = vpop.f32.mrb[0].mxu0
      %v842 = vadd.f32 %v717, %v841
      %v843 = vpop.f32.mrb[0].mxu0
      %844 = vdwg.mxu0
      %v845 = vpack.c.bf16 %v834, %v831
      %v846 = vpack.c.bf16 %v842, %v839
      %v849 = vunpack.c.l.b16 %v845
      %v850 = vunpack.c.h.b16 %v845
      %v851 = vunpack.c.l.b16 %v846
      %v852 = vunpack.c.h.b16 %v846
      %v853 = vpack.c.b16 %v849, %v849
      %v854 = vpack.c.b16 %v850, %v850
      %v855 = vpack.c.b16 %v851, %v851
      %v856 = vpack.c.b16 %v852, %v852
      %s861 = scalar_lea.vmem %s251, 16
      %862 = vst.msk [vmem:[%s861] sm:$0xf] %vm683, %v853
      %863 = vst.msk [vmem:[%s861 + $0x4] sm:$0xf] %vm683, %v854
      %864 = vst.msk [vmem:[%s861 + $0x8] sm:$0xf] %vm683, %v855
      %865 = vst.msk [vmem:[%s861 + $0xc] sm:$0xf] %vm683, %v856
      %s866 = scalar_lea.vmem %s237, 192
      %v867 = vld [vmem:[%s866] sm:$0xf]
      %v868 = vld [vmem:[%s866 + $0x4] sm:$0xf]
      %v869 = vld [vmem:[%s866 + $0x8] sm:$0xf]
      %v870 = vld [vmem:[%s866 + $0xc] sm:$0xf]
      %v871 = vld [vmem:[%s866 + $0x10] sm:$0xf]
      %v872 = vld [vmem:[%s866 + $0x14] sm:$0xf]
      %v873 = vld [vmem:[%s866 + $0x18] sm:$0xf]
      %v874 = vld [vmem:[%s866 + $0x1c] sm:$0xf]
      %v875 = vld [vmem:[%s866 + $0x20] sm:$0xf]
      %v876 = vld [vmem:[%s866 + $0x24] sm:$0xf]
      %v877 = vld [vmem:[%s866 + $0x28] sm:$0xf]
      %v878 = vld [vmem:[%s866 + $0x2c] sm:$0xf]
      %v879 = vld [vmem:[%s866 + $0x30] sm:$0xf]
      %v880 = vld [vmem:[%s866 + $0x34] sm:$0xf]
      %v881 = vld [vmem:[%s866 + $0x38] sm:$0xf]
      %v882 = vld [vmem:[%s866 + $0x3c] sm:$0xf]
      %v883 = vld [vmem:[%s866 + $0x40] sm:$0xf]
      %v884 = vld [vmem:[%s866 + $0x44] sm:$0xf]
      %v885 = vld [vmem:[%s866 + $0x48] sm:$0xf]
      %v886 = vld [vmem:[%s866 + $0x4c] sm:$0xf]
      %v887 = vld [vmem:[%s866 + $0x50] sm:$0xf]
      %v888 = vld [vmem:[%s866 + $0x54] sm:$0xf]
      %v889 = vld [vmem:[%s866 + $0x58] sm:$0xf]
      %v890 = vld [vmem:[%s866 + $0x5c] sm:$0xf]
      %s891 = scalar_lea.vmem %s244, 64
      %v892 = vld [vmem:[%s891] sm:$0xff]
      %v893 = vld [vmem:[%s891 + $0x8] sm:$0xff]
      %v894 = vld [vmem:[%s891 + $0x10] sm:$0xff]
      %v895 = vld [vmem:[%s891 + $0x18] sm:$0xff]
      %v920 = vunpack.c.l.b16 %v867
      %v921 = vunpack.c.l.b16 %v868
      %v922 = vunpack.c.l.b16 %v869
      %v923 = vunpack.c.l.b16 %v870
      %v924 = vunpack.c.l.b16 %v871
      %v925 = vunpack.c.l.b16 %v872
      %v926 = vunpack.c.l.b16 %v873
      %v927 = vunpack.c.l.b16 %v874
      %v928 = vunpack.c.l.b16 %v875
      %v929 = vunpack.c.l.b16 %v876
      %v930 = vunpack.c.l.b16 %v877
      %v931 = vunpack.c.l.b16 %v878
      %v932 = vunpack.c.l.b16 %v879
      %v933 = vunpack.c.l.b16 %v880
      %v934 = vunpack.c.l.b16 %v881
      %v935 = vunpack.c.l.b16 %v882
      %v936 = vunpack.c.l.b16 %v883
      %v937 = vunpack.c.l.b16 %v884
      %v938 = vunpack.c.l.b16 %v885
      %v939 = vunpack.c.l.b16 %v886
      %v940 = vunpack.c.l.b16 %v887
      %v941 = vunpack.c.l.b16 %v888
      %v942 = vunpack.c.l.b16 %v889
      %v943 = vunpack.c.l.b16 %v890
      %v944 = vpack.c.b16 %v921, %v920
      %v945 = vpack.c.b16 %v923, %v922
      %v946 = vpack.c.b16 %v925, %v924
      %v947 = vpack.c.b16 %v927, %v926
      %v948 = vpack.c.b16 %v929, %v928
      %v949 = vpack.c.b16 %v931, %v930
      %v950 = vpack.c.b16 %v933, %v932
      %v951 = vpack.c.b16 %v935, %v934
      %v952 = vpack.c.b16 %v937, %v936
      %v953 = vpack.c.b16 %v939, %v938
      %v954 = vpack.c.b16 %v941, %v940
      %v955 = vpack.c.b16 %v943, %v942
      %v969 = vsel %vm358, %v505, 0
      %v972 = vsel %vm358, %v507, 0
      %974 = vmatprep.subr.bf16.mxu0 0
      %975 = vmatpush1.bf16.msra.mxu0 %v944
      %976 = vmatprep.subr.bf16.mxu0 0
      %977 = vmatpush1.bf16.msra.mxu0 %v945
      %978 = vmatprep.subr.bf16.mxu0 0
      %979 = vmatpush1.bf16.msra.mxu0 %v946
      %980 = vmatprep.subr.bf16.mxu0 0
      %981 = vmatpush1.bf16.msra.mxu0 %v947
      %982 = vmatprep.subr.bf16.mxu0 0
      %983 = vmatpush1.bf16.msra.mxu0 %v948
      %984 = vmatprep.subr.bf16.mxu0 0
      %985 = vmatpush1.bf16.msra.mxu0 %v949
      %986 = vmatprep.subr.bf16.mxu0 0
      %987 = vmatpush1.bf16.msra.mxu0 %v950
      %988 = vmatprep.subr.bf16.mxu0 0
      %989 = vmatpush1.bf16.msra.mxu0 %v951
      %990 = vmatprep.subr.bf16.mxu0 0
      %991 = vmatpush1.bf16.msra.mxu0 %v952
      %992 = vmatprep.subr.bf16.mxu0 0
      %993 = vmatpush1.bf16.msra.mxu0 %v953
      %994 = vmatprep.subr.bf16.mxu0 0
      %995 = vmatpush1.bf16.msra.mxu0 %v954
      %996 = vmatprep.subr.bf16.mxu0 0
      %997 = vmatpush1.bf16.msra.mxu0 %v955
      %998 = vmatprep.subr.bf16.mxu0 0
      %999 = vmatpush1.bf16.msra.mxu0 0
      %1000 = vmatprep.subr.bf16.mxu0 0
      %1001 = vmatpush1.bf16.msra.mxu0 0
      %1002 = vmatprep.subr.bf16.mxu0 0
      %1003 = vmatpush1.bf16.msra.mxu0 0
      %1004 = vmatprep.subr.bf16.mxu0 0
      %1005 = vmatpush1.bf16.msra.mxu0 0
      %1006 = vmatprep.mubr.bf16.mxu0 %v969
      %1007 = vmatmul.mubr.bf16.gmra.mrb[0].mxu0 %v504
      %v1008 = vpop.f32.mrb[0].mxu0
      %v1009 = vadd.f32 %v892, %v1008
      %v1010 = vpop.f32.mrb[0].mxu0
      %v1011 = vpop.f32.mrb[0].mxu0
      %v1012 = vadd.f32 %v893, %v1011
      %v1013 = vpop.f32.mrb[0].mxu0
      %1014 = vmatprep.mubr.bf16.mxu0 %v972
      %1015 = vmatmul.mubr.bf16.gmra.mrb[0].mxu0 %v506
      %v1016 = vpop.f32.mrb[0].mxu0
      %v1017 = vadd.f32 %v894, %v1016
      %v1018 = vpop.f32.mrb[0].mxu0
      %v1019 = vpop.f32.mrb[0].mxu0
      %v1020 = vadd.f32 %v895, %v1019
      %v1021 = vpop.f32.mrb[0].mxu0
      %1022 = vdwg.mxu0
      %v1023 = vpack.c.bf16 %v1012, %v1009
      %v1024 = vpack.c.bf16 %v1020, %v1017
      %v1027 = vunpack.c.l.b16 %v1023
      %v1028 = vunpack.c.h.b16 %v1023
      %v1029 = vunpack.c.l.b16 %v1024
      %v1030 = vunpack.c.h.b16 %v1024
      %v1031 = vpack.c.b16 %v1027, %v1027
      %v1032 = vpack.c.b16 %v1028, %v1028
      %v1033 = vpack.c.b16 %v1029, %v1029
      %v1034 = vpack.c.b16 %v1030, %v1030
      %s1039 = scalar_lea.vmem %s251, 32
      %1040 = vst.msk [vmem:[%s1039] sm:$0xf] %vm683, %v1031
      %1041 = vst.msk [vmem:[%s1039 + $0x4] sm:$0xf] %vm683, %v1032
      %1042 = vst.msk [vmem:[%s1039 + $0x8] sm:$0xf] %vm683, %v1033
      %1043 = vst.msk [vmem:[%s1039 + $0xc] sm:$0xf] %vm683, %v1034
      %s1044 = scalar_lea.vmem %s237, 288
      %v1045 = vld [vmem:[%s1044] sm:$0xf]
      %v1046 = vld [vmem:[%s1044 + $0x4] sm:$0xf]
      %v1047 = vld [vmem:[%s1044 + $0x8] sm:$0xf]
      %v1048 = vld [vmem:[%s1044 + $0xc] sm:$0xf]
      %v1049 = vld [vmem:[%s1044 + $0x10] sm:$0xf]
      %v1050 = vld [vmem:[%s1044 + $0x14] sm:$0xf]
      %v1051 = vld [vmem:[%s1044 + $0x18] sm:$0xf]
      %v1052 = vld [vmem:[%s1044 + $0x1c] sm:$0xf]
      %v1053 = vld [vmem:[%s1044 + $0x20] sm:$0xf]
      %v1054 = vld [vmem:[%s1044 + $0x24] sm:$0xf]
      %v1055 = vld [vmem:[%s1044 + $0x28] sm:$0xf]
      %v1056 = vld [vmem:[%s1044 + $0x2c] sm:$0xf]
      %v1057 = vld [vmem:[%s1044 + $0x30] sm:$0xf]
      %v1058 = vld [vmem:[%s1044 + $0x34] sm:$0xf]
      %v1059 = vld [vmem:[%s1044 + $0x38] sm:$0xf]
      %v1060 = vld [vmem:[%s1044 + $0x3c] sm:$0xf]
      %v1061 = vld [vmem:[%s1044 + $0x40] sm:$0xf]
      %v1062 = vld [vmem:[%s1044 + $0x44] sm:$0xf]
      %v1063 = vld [vmem:[%s1044 + $0x48] sm:$0xf]
      %v1064 = vld [vmem:[%s1044 + $0x4c] sm:$0xf]
      %v1065 = vld [vmem:[%s1044 + $0x50] sm:$0xf]
      %v1066 = vld [vmem:[%s1044 + $0x54] sm:$0xf]
      %v1067 = vld [vmem:[%s1044 + $0x58] sm:$0xf]
      %v1068 = vld [vmem:[%s1044 + $0x5c] sm:$0xf]
      %s1069 = scalar_lea.vmem %s244, 96
      %v1070 = vld [vmem:[%s1069] sm:$0xff]
      %v1071 = vld [vmem:[%s1069 + $0x8] sm:$0xff]
      %v1072 = vld [vmem:[%s1069 + $0x10] sm:$0xff]
      %v1073 = vld [vmem:[%s1069 + $0x18] sm:$0xff]
      %v1098 = vunpack.c.l.b16 %v1045
      %v1099 = vunpack.c.l.b16 %v1046
      %v1100 = vunpack.c.l.b16 %v1047
      %v1101 = vunpack.c.l.b16 %v1048
      %v1102 = vunpack.c.l.b16 %v1049
      %v1103 = vunpack.c.l.b16 %v1050
      %v1104 = vunpack.c.l.b16 %v1051
      %v1105 = vunpack.c.l.b16 %v1052
      %v1106 = vunpack.c.l.b16 %v1053
      %v1107 = vunpack.c.l.b16 %v1054
      %v1108 = vunpack.c.l.b16 %v1055
      %v1109 = vunpack.c.l.b16 %v1056
      %v1110 = vunpack.c.l.b16 %v1057
      %v1111 = vunpack.c.l.b16 %v1058
      %v1112 = vunpack.c.l.b16 %v1059
      %v1113 = vunpack.c.l.b16 %v1060
      %v1114 = vunpack.c.l.b16 %v1061
      %v1115 = vunpack.c.l.b16 %v1062
      %v1116 = vunpack.c.l.b16 %v1063
      %v1117 = vunpack.c.l.b16 %v1064
      %v1118 = vunpack.c.l.b16 %v1065
      %v1119 = vunpack.c.l.b16 %v1066
      %v1120 = vunpack.c.l.b16 %v1067
      %v1121 = vunpack.c.l.b16 %v1068
      %v1122 = vpack.c.b16 %v1099, %v1098
      %v1123 = vpack.c.b16 %v1101, %v1100
      %v1124 = vpack.c.b16 %v1103, %v1102
      %v1125 = vpack.c.b16 %v1105, %v1104
      %v1126 = vpack.c.b16 %v1107, %v1106
      %v1127 = vpack.c.b16 %v1109, %v1108
      %v1128 = vpack.c.b16 %v1111, %v1110
      %v1129 = vpack.c.b16 %v1113, %v1112
      %v1130 = vpack.c.b16 %v1115, %v1114
      %v1131 = vpack.c.b16 %v1117, %v1116
      %v1132 = vpack.c.b16 %v1119, %v1118
      %v1133 = vpack.c.b16 %v1121, %v1120
      %v1147 = vsel %vm358, %v509, 0
      %v1150 = vsel %vm358, %v511, 0
      %1152 = vmatprep.subr.bf16.mxu0 0
      %1153 = vmatpush1.bf16.msra.mxu0 %v1122
      %1154 = vmatprep.subr.bf16.mxu0 0
      %1155 = vmatpush1.bf16.msra.mxu0 %v1123
      %1156 = vmatprep.subr.bf16.mxu0 0
      %1157 = vmatpush1.bf16.msra.mxu0 %v1124
      %1158 = vmatprep.subr.bf16.mxu0 0
      %1159 = vmatpush1.bf16.msra.mxu0 %v1125
      %1160 = vmatprep.subr.bf16.mxu0 0
      %1161 = vmatpush1.bf16.msra.mxu0 %v1126
      %1162 = vmatprep.subr.bf16.mxu0 0
      %1163 = vmatpush1.bf16.msra.mxu0 %v1127
      %1164 = vmatprep.subr.bf16.mxu0 0
      %1165 = vmatpush1.bf16.msra.mxu0 %v1128
      %1166 = vmatprep.subr.bf16.mxu0 0
      %1167 = vmatpush1.bf16.msra.mxu0 %v1129
      %1168 = vmatprep.subr.bf16.mxu0 0
      %1169 = vmatpush1.bf16.msra.mxu0 %v1130
      %1170 = vmatprep.subr.bf16.mxu0 0
      %1171 = vmatpush1.bf16.msra.mxu0 %v1131
      %1172 = vmatprep.subr.bf16.mxu0 0
      %1173 = vmatpush1.bf16.msra.mxu0 %v1132
      %1174 = vmatprep.subr.bf16.mxu0 0
      %1175 = vmatpush1.bf16.msra.mxu0 %v1133
      %1176 = vmatprep.subr.bf16.mxu0 0
      %1177 = vmatpush1.bf16.msra.mxu0 0
      %1178 = vmatprep.subr.bf16.mxu0 0
      %1179 = vmatpush1.bf16.msra.mxu0 0
      %1180 = vmatprep.subr.bf16.mxu0 0
      %1181 = vmatpush1.bf16.msra.mxu0 0
      %1182 = vmatprep.subr.bf16.mxu0 0
      %1183 = vmatpush1.bf16.msra.mxu0 0
      %1184 = vmatprep.mubr.bf16.mxu0 %v1147
      %1185 = vmatmul.mubr.bf16.gmra.mrb[0].mxu0 %v508
      %v1186 = vpop.f32.mrb[0].mxu0
      %v1187 = vadd.f32 %v1070, %v1186
      %v1188 = vpop.f32.mrb[0].mxu0
      %v1189 = vpop.f32.mrb[0].mxu0
      %v1190 = vadd.f32 %v1071, %v1189
      %v1191 = vpop.f32.mrb[0].mxu0
      %1192 = vmatprep.mubr.bf16.mxu0 %v1150
      %1193 = vmatmul.mubr.bf16.gmra.mrb[0].mxu0 %v510
      %v1194 = vpop.f32.mrb[0].mxu0
      %v1195 = vadd.f32 %v1072, %v1194
      %v1196 = vpop.f32.mrb[0].mxu0
      %v1197 = vpop.f32.mrb[0].mxu0
      %v1198 = vadd.f32 %v1073, %v1197
      %v1199 = vpop.f32.mrb[0].mxu0
      %1200 = vdwg.mxu0
      %v1201 = vpack.c.bf16 %v1190, %v1187
      %v1202 = vpack.c.bf16 %v1198, %v1195
      %v1205 = vunpack.c.l.b16 %v1201
      %v1206 = vunpack.c.h.b16 %v1201
      %v1207 = vunpack.c.l.b16 %v1202
      %v1208 = vunpack.c.h.b16 %v1202
      %v1209 = vpack.c.b16 %v1205, %v1205
      %v1210 = vpack.c.b16 %v1206, %v1206
      %v1211 = vpack.c.b16 %v1207, %v1207
      %v1212 = vpack.c.b16 %v1208, %v1208
      %s1217 = scalar_lea.vmem %s251, 48
      %1218 = vst.msk [vmem:[%s1217] sm:$0xf] %vm683, %v1209
      %1219 = vst.msk [vmem:[%s1217 + $0x4] sm:$0xf] %vm683, %v1210
      %1220 = vst.msk [vmem:[%s1217 + $0x8] sm:$0xf] %vm683, %v1211
      %1221 = vst.msk [vmem:[%s1217 + $0xc] sm:$0xf] %vm683, %v1212
      %s1222 = smul.u32 4, %s15
      %p1223 = scmp.lt.s32.totalorder %s1222, 7
      %s1224 = scalar_select %p1223, %s1222, 7
      %s1225 = smul.addr %s1224, 4
      %s1226 = smul.addr %s1225, 4
      %s1227 = scalar_lea.vmem %s4, %s1226
      // Predicated region
      $region37: #{hd_multi_clip_embed.5} parent=35 // pred_check
        %p1228 = pneg %p132
      $region38: #{hd_multi_clip_embed.5} parent=35 // pred_check_branch
        %1230 = sbr.rel (%p1228) target = $region40
      $region39: #{hd_multi_clip_embed.5} parent=35 // pred_region
        %s1231 = smul.u32 4, %s15
      $region40: #{hd_multi_clip_embed.5} parent=35 // pred_fallthru
        _
    $region36: #{hd_multi_clip_embed.5} parent=5 // pred_fallthru
      _
    %p1232 = scmp.le.s32.totalorder 2, %s10
    // Predicated region
    $region41: #{hd_multi_clip_embed.5} parent=5 // pred_check
      %p1233 = pneg %p1232
    $region42: #{hd_multi_clip_embed.5} parent=5 // pred_check_branch
      %1235 = sbr.rel (%p1233) target = $region44
    $region43: #{hd_multi_clip_embed.5} parent=5 // pred_region
      %s1236 = ssub.s32 %s10, 2
      // Predicated region
      $region45: #{hd_multi_clip_embed.5} parent=43 // pred_check
        %p1237 = pneg %p138
      $region46: #{hd_multi_clip_embed.5} parent=43 // pred_check_branch
        %1239 = sbr.rel (%p1237) target = $region48
      $region47: #{hd_multi_clip_embed.5} parent=43 // pred_region
        %s1240 = smul.u32 4, %s16
        %p1241 = scmp.lt.s32.totalorder %s1240, 7
        %s1242 = scalar_select %p1241, %s1240, 7
        %s1243 = smul.addr %s1242, 4
        %s1244 = smul.addr %s1243, 4
        %s1245 = scalar_lea.vmem %s4, %s1244
      $region48: #{hd_multi_clip_embed.5} parent=43 // pred_fallthru
        _
    $region44: #{hd_multi_clip_embed.5} parent=5 // pred_fallthru
      _
  $region6: #{hd_multi_clip_embed.5} parent=0 // loop_footer
    %s14 = sadd.s32 1, %s10
  $region7: #{hd_multi_clip_embed.5} parent=0 // loop_footer_branch
    %9 = sbr.rel target = $region3
  $region8: #{hd_multi_clip_embed.5} parent=0 // loop_exit
    _

// kernel: hd_multi_clip_embed.6
$region0: #{hd_multi_clip_embed.6}
  #allocation0 [shape = 'u32[]', space=smem, size = 0x4, offset = 0x4, fixed_abs, tag = 'smem constant byte address 0x4 - core index']
  #allocation1 [shape = 'u32[144,128]{1,0:T(1,128)}', space=vmem, size = 0x12000, scoped, tag = 'internal scratch']
  %s0 = inlined_call_operand.vmem [shape: bf16[64,192], index: 0, kind: input, shape index: {}]
  %s1 = inlined_call_operand.vmem [shape: bf16[128,64], index: 1, kind: input, shape index: {}]
  %s2 = inlined_call_operand.vmem [shape: bf16[8,192,48], index: 2, kind: input, shape index: {}]
  %s3 = inlined_call_operand.vmem [shape: f32[8,16,48], index: 3, kind: input, shape index: {}]
  %s4 = inlined_call_operand.vmem [shape: bf16[8,16,48], index: 4, kind: output, shape index: {}]
  %s5 = sld [smem:[#allocation0]]
  $region49: #{hd_multi_clip_embed.6} parent=0
    _
  %s7 = ssub.s32 1, %s5
  %s8 = scalar_select 0, %s7, %s5
  loop: start=0, step=1, limit=4
  $region2: #{hd_multi_clip_embed.6} parent=0 // loop_pre_header
    _
  $region3: #{hd_multi_clip_embed.6} parent=0 // loop_header
    %s10 = sphi 0, %s14
    %p11 = scmp.ge.s32.totalorder %s10, 4
    %s18 = sphi 0, %s18
    %s20 = sphi 0, %s18
    %s21 = sphi 0, %s20
    %s35 = sphi 0, %s21
    %s41 = sphi 0, %s43
    %s44 = sphi 0, %s41
    %s45 = sphi 0, %s44
    %s61 = sphi 0, %s45
    %s67 = sphi 0, %s69
    %s70 = sphi 0, %s67
    %s71 = sphi 0, %s70
    %s87 = sphi 0, %s71
    %s93 = sphi 0, %s95
    %s96 = sphi 0, %s93
    %s97 = sphi 0, %s96
    %s113 = sphi 0, %s97
    %s119 = sphi 0, %s121
    %s122 = sphi 0, %s119
    %s123 = sphi 0, %s122
    %s139 = sphi 0, %s123
  $region4: #{hd_multi_clip_embed.6} parent=0 // loop_header_branch
    %13 = sbr.rel (%p11) target = $region8
  $region5: #{hd_multi_clip_embed.6} parent=0 // loop_body
    %s15 = ssub.s32 %s10, 1
    %s16 = ssub.s32 %s10, 2
    %s17 = sadd.s32 %s10, 1
    %s19 = sadd.s32 %s18, 1
    %p22 = scmp.eq.s32.totalorder %s10, 1
    %p23 = scmp.ne.s32.totalorder %s18, %s20
    %p24 = scmp.eq.s32.totalorder %s10, 0
    %p25 = por %p23, %p24
    %p26 = scmp.ne.s32.totalorder %s18, %s20
    %p27 = scmp.eq.s32.totalorder %s15, 1
    %p28 = por %p26, %p27
    %p29 = scmp.ne.s32.totalorder %s20, %s21
    %p30 = scmp.eq.s32.totalorder %s15, 0
    %p31 = por %p29, %p30
    %p32 = scmp.ne.s32.totalorder %s20, %s21
    %p33 = scmp.eq.s32.totalorder %s16, 1
    %p34 = por %p32, %p33
    %p36 = scmp.ne.s32.totalorder %s21, %s35
    %p37 = scmp.eq.s32.totalorder %s16, 0
    %p38 = por %p36, %p37
    %s39 = ssub.s32 %s10, %s17
    %p40 = scmp.eq.s32.totalorder %s39, 0
    %s42 = sadd.s32 %s41, 1
    %s43 = scalar_select %p40, %s41, %s42
    %p46 = pneg %p40
    %p47 = scmp.eq.s32.totalorder %s10, 1
    %p48 = por %p46, %p47
    %p49 = scmp.ne.s32.totalorder %s41, %s44
    %p50 = scmp.eq.s32.totalorder %s10, 0
    %p51 = por %p49, %p50
    %p52 = scmp.ne.s32.totalorder %s41, %s44
    %p53 = scmp.eq.s32.totalorder %s15, 1
    %p54 = por %p52, %p53
    %p55 = scmp.ne.s32.totalorder %s44, %s45
    %p56 = scmp.eq.s32.totalorder %s15, 0
    %p57 = por %p55, %p56
    %p58 = scmp.ne.s32.totalorder %s44, %s45
    %p59 = scmp.eq.s32.totalorder %s16, 1
    %p60 = por %p58, %p59
    %p62 = scmp.ne.s32.totalorder %s45, %s61
    %p63 = scmp.eq.s32.totalorder %s16, 0
    %p64 = por %p62, %p63
    %s65 = ssub.s32 %s10, %s17
    %p66 = scmp.eq.s32.totalorder %s65, 0
    %s68 = sadd.s32 %s67, 1
    %s69 = scalar_select %p66, %s67, %s68
    %p72 = pneg %p66
    %p73 = scmp.eq.s32.totalorder %s10, 1
    %p74 = por %p72, %p73
    %p75 = scmp.ne.s32.totalorder %s67, %s70
    %p76 = scmp.eq.s32.totalorder %s10, 0
    %p77 = por %p75, %p76
    %p78 = scmp.ne.s32.totalorder %s67, %s70
    %p79 = scmp.eq.s32.totalorder %s15, 1
    %p80 = por %p78, %p79
    %p81 = scmp.ne.s32.totalorder %s70, %s71
    %p82 = scmp.eq.s32.totalorder %s15, 0
    %p83 = por %p81, %p82
    %p84 = scmp.ne.s32.totalorder %s70, %s71
    %p85 = scmp.eq.s32.totalorder %s16, 1
    %p86 = por %p84, %p85
    %p88 = scmp.ne.s32.totalorder %s71, %s87
    %p89 = scmp.eq.s32.totalorder %s16, 0
    %p90 = por %p88, %p89
    %s91 = ssub.s32 %s10, %s17
    %p92 = scmp.eq.s32.totalorder %s91, 0
    %s94 = sadd.s32 %s93, 1
    %s95 = scalar_select %p92, %s93, %s94
    %p98 = pneg %p92
    %p99 = scmp.eq.s32.totalorder %s10, 1
    %p100 = por %p98, %p99
    %p101 = scmp.ne.s32.totalorder %s93, %s96
    %p102 = scmp.eq.s32.totalorder %s10, 0
    %p103 = por %p101, %p102
    %p104 = scmp.ne.s32.totalorder %s93, %s96
    %p105 = scmp.eq.s32.totalorder %s15, 1
    %p106 = por %p104, %p105
    %p107 = scmp.ne.s32.totalorder %s96, %s97
    %p108 = scmp.eq.s32.totalorder %s15, 0
    %p109 = por %p107, %p108
    %p110 = scmp.ne.s32.totalorder %s96, %s97
    %p111 = scmp.eq.s32.totalorder %s16, 1
    %p112 = por %p110, %p111
    %p114 = scmp.ne.s32.totalorder %s97, %s113
    %p115 = scmp.eq.s32.totalorder %s16, 0
    %p116 = por %p114, %p115
    %s117 = ssub.s32 %s10, %s17
    %p118 = scmp.eq.s32.totalorder %s117, 0
    %s120 = sadd.s32 %s119, 1
    %s121 = scalar_select %p118, %s119, %s120
    %p124 = pneg %p118
    %p125 = scmp.eq.s32.totalorder %s10, 1
    %p126 = por %p124, %p125
    %p127 = scmp.ne.s32.totalorder %s119, %s122
    %p128 = scmp.eq.s32.totalorder %s10, 0
    %p129 = por %p127, %p128
    %p130 = scmp.ne.s32.totalorder %s119, %s122
    %p131 = scmp.eq.s32.totalorder %s15, 1
    %p132 = por %p130, %p131
    %p133 = scmp.ne.s32.totalorder %s122, %s123
    %p134 = scmp.eq.s32.totalorder %s15, 0
    %p135 = por %p133, %p134
    %p136 = scmp.ne.s32.totalorder %s122, %s123
    %p137 = scmp.eq.s32.totalorder %s16, 1
    %p138 = por %p136, %p137
    %p140 = scmp.ne.s32.totalorder %s123, %s139
    %p141 = scmp.eq.s32.totalorder %s16, 0
    %p142 = por %p140, %p141
    %p143 = scmp.le.s32.totalorder 1, %s10
    %p144 = scmp.lt.s32.totalorder %s10, 3
    %p145 = pnand %p143, %p144
    %p146 = pneg %p145
    // Predicated region
    $region9: #{hd_multi_clip_embed.6} parent=5 // pred_check
      _
    $region10: #{hd_multi_clip_embed.6} parent=5 // pred_check_branch
      %148 = sbr.rel (%p145) target = $region12
    $region11: #{hd_multi_clip_embed.6} parent=5 // pred_region
      %s149 = ssub.s32 %s10, 1
      // Predicated region
      $region13: #{hd_multi_clip_embed.6} parent=11 // pred_check
        %p150 = pneg %p31
      $region14: #{hd_multi_clip_embed.6} parent=11 // pred_check_branch
        %152 = sbr.rel (%p150) target = $region16
      $region15: #{hd_multi_clip_embed.6} parent=11 // pred_region
        _
      $region16: #{hd_multi_clip_embed.6} parent=11 // pred_fallthru
        _
    $region12: #{hd_multi_clip_embed.6} parent=5 // pred_fallthru
      _
    %p153 = scmp.lt.s32.totalorder %s10, 2
    // Predicated region
    $region17: #{hd_multi_clip_embed.6} parent=5 // pred_check
      %p154 = pneg %p153
    $region18: #{hd_multi_clip_embed.6} parent=5 // pred_check_branch
      %156 = sbr.rel (%p154) target = $region20
    $region19: #{hd_multi_clip_embed.6} parent=5 // pred_region
      // Predicated region
      $region21: #{hd_multi_clip_embed.6} parent=19 // pred_check
        %p157 = pneg %p51
      $region22: #{hd_multi_clip_embed.6} parent=19 // pred_check_branch
        %159 = sbr.rel (%p157) target = $region24
      $region23: #{hd_multi_clip_embed.6} parent=19 // pred_region
        %s160 = smul.u32 8, %s10
        %p161 = scmp.lt.s32.totalorder %s160, 15
        %s162 = scalar_select %p161, %s160, 15
        %s163 = smul.addr %s162, 4
        %s164 = scalar_lea.vmem %s1, %s163
        %s165 = smul.u32 8, %s10
      $region24: #{hd_multi_clip_embed.6} parent=19 // pred_fallthru
        _
      // Predicated region
      $region25: #{hd_multi_clip_embed.6} parent=19 // pred_check
        %p166 = pneg %p77
      $region26: #{hd_multi_clip_embed.6} parent=19 // pred_check_branch
        %168 = sbr.rel (%p166) target = $region28
      $region27: #{hd_multi_clip_embed.6} parent=19 // pred_region
        %s169 = smul.u32 4, %s10
        %p170 = scmp.lt.s32.totalorder %s169, 7
        %s171 = scalar_select %p170, %s169, 7
        %s172 = smul.addr %s171, 24
        %s173 = smul.addr %s172, 4
        %s174 = scalar_lea.vmem %s2, %s173
        %s175 = smul.u32 4, %s10
      $region28: #{hd_multi_clip_embed.6} parent=19 // pred_fallthru
        _
      // Predicated region
      $region29: #{hd_multi_clip_embed.6} parent=19 // pred_check
        %p176 = pneg %p103
      $region30: #{hd_multi_clip_embed.6} parent=19 // pred_check_branch
        %178 = sbr.rel (%p176) target = $region32
      $region31: #{hd_multi_clip_embed.6} parent=19 // pred_region
        %s179 = smul.u32 4, %s10
        %p180 = scmp.lt.s32.totalorder %s179, 7
        %s181 = scalar_select %p180, %s179, 7
        %s182 = smul.addr %s181, 2
        %s183 = smul.addr %s182, 8
        %s184 = scalar_lea.vmem %s3, %s183
        %s185 = smul.u32 4, %s10
      $region32: #{hd_multi_clip_embed.6} parent=19 // pred_fallthru
        _
    $region20: #{hd_multi_clip_embed.6} parent=5 // pred_fallthru
      _
    %p186 = scmp.le.s32.totalorder 1, %s10
    %p187 = scmp.lt.s32.totalorder %s10, 3
    %p188 = pnand %p186, %p187
    %p189 = pneg %p188
    // Predicated region
    $region33: #{hd_multi_clip_embed.6} parent=5 // pred_check
      _
    $region34: #{hd_multi_clip_embed.6} parent=5 // pred_check_branch
      %191 = sbr.rel (%p188) target = $region36
    $region35: #{hd_multi_clip_embed.6} parent=5 // pred_region
      %s192 = ssub.s32 %s10, 1
      %p193 = pneg %p31
      %p194 = pneg %p28
      %s195 = smul.u32 8, %s15
      %p196 = scmp.lt.s32.totalorder %s195, 15
      %s197 = scalar_select %p196, %s195, 15
      %s198 = smul.addr %s197, 4
      %s199 = scalar_lea.vmem %s1, %s198
      %p200 = pneg %p57
      %p201 = pneg %p54
      %s202 = smul.u32 4, %s15
      %p203 = scmp.lt.s32.totalorder %s202, 7
      %s204 = scalar_select %p203, %s202, 7
      %s205 = smul.addr %s204, 24
      %s206 = smul.addr %s205, 4
      %s207 = scalar_lea.vmem %s2, %s206
      %p208 = pneg %p83
      %p209 = pneg %p80
      %s210 = smul.u32 4, %s15
      %p211 = scmp.lt.s32.totalorder %s210, 7
      %s212 = scalar_select %p211, %s210, 7
      %s213 = smul.addr %s212, 2
      %s214 = smul.addr %s213, 8
      %s215 = scalar_lea.vmem %s3, %s214
      %p216 = pneg %p109
      %p217 = pneg %p106
      %p218 = pneg %p135
      %p219 = pneg %p132
      %s220 = smul.u32 4, %s15
      %p221 = scmp.lt.s32.totalorder %s220, 7
      %s222 = scalar_select %p221, %s220, 7
      %s223 = smul.addr %s222, 2
      %s224 = smul.addr %s223, 4
      %s225 = scalar_lea.vmem %s4, %s224
      %s226 = smul.u32 8, %s15
      %p227 = scmp.lt.s32.totalorder %s226, 15
      %s228 = scalar_select %p227, %s226, 15
      %s229 = smul.addr %s228, 4
      %s230 = scalar_lea.vmem %s1, %s229
      %s231 = smul.u32 8, %s15
      %s232 = smul.u32 4, %s15
      %p233 = scmp.lt.s32.totalorder %s232, 7
      %s234 = scalar_select %p233, %s232, 7
      %s235 = smul.addr %s234, 24
      %s236 = smul.addr %s235, 4
      %s237 = scalar_lea.vmem %s2, %s236
      %s238 = smul.u32 4, %s15
      %s239 = smul.u32 4, %s15
      %p240 = scmp.lt.s32.totalorder %s239, 7
      %s241 = scalar_select %p240, %s239, 7
      %s242 = smul.addr %s241, 2
      %s243 = smul.addr %s242, 8
      %s244 = scalar_lea.vmem %s3, %s243
      %s245 = smul.u32 4, %s15
      %s246 = smul.u32 4, %s15
      %p247 = scmp.lt.s32.totalorder %s246, 7
      %s248 = scalar_select %p247, %s246, 7
      %s249 = smul.addr %s248, 2
      %s250 = smul.addr %s249, 4
      %s251 = scalar_lea.vmem %s4, %s250
      %s252 = smul.u32 4, %s15
      %v254 = vld [vmem:[%s230] sm:$0xf]
      %v255 = vld [vmem:[%s230 + $0x4] sm:$0xf]
      %v256 = vld [vmem:[%s230 + $0x8] sm:$0xf]
      %v257 = vld [vmem:[%s230 + $0xc] sm:$0xf]
      %v258 = vld [vmem:[%s230 + $0x10] sm:$0xf]
      %v259 = vld [vmem:[%s230 + $0x14] sm:$0xf]
      %v260 = vld [vmem:[%s230 + $0x18] sm:$0xf]
      %v261 = vld [vmem:[%s230 + $0x1c] sm:$0xf]
      %v262 = vld [vmem:[%s0] sm:$0xff]
      %v263 = vld [vmem:[%s0 + $0x8] sm:$0xff]
      %v264 = vld [vmem:[%s0 + $0x10] sm:$0xff]
      %v265 = vld [vmem:[%s0 + $0x18] sm:$0xff]
      %v266 = vld [vmem:[%s0 + $0x20] sm:$0xff]
      %v267 = vld [vmem:[%s0 + $0x28] sm:$0xff]
      %v268 = vld [vmem:[%s0 + $0x30] sm:$0xff]
      %v269 = vld [vmem:[%s0 + $0x38] sm:$0xff]
      %v278 = vunpack.c.l.b16 %v254
      %v279 = vunpack.c.l.b16 %v255
      %v280 = vunpack.c.l.b16 %v256
      %v281 = vunpack.c.l.b16 %v257
      %v282 = vunpack.c.l.b16 %v258
      %v283 = vunpack.c.l.b16 %v259
      %v284 = vunpack.c.l.b16 %v260
      %v285 = vunpack.c.l.b16 %v261
      %v286 = vpack.c.b16 %v279, %v278
      %v287 = vpack.c.b16 %v281, %v280
      %v288 = vpack.c.b16 %v283, %v282
      %v289 = vpack.c.b16 %v285, %v284
      %v298 = vunpack.c.l.b16 %v262
      %v299 = vunpack.c.h.b16 %v262
      %v300 = vunpack.c.l.b16 %v263
      %v301 = vunpack.c.h.b16 %v263
      %v302 = vunpack.c.l.b16 %v264
      %v303 = vunpack.c.h.b16 %v264
      %v304 = vunpack.c.l.b16 %v265
      %v305 = vunpack.c.h.b16 %v265
      %v306 = vunpack.c.l.b16 %v266
      %v307 = vunpack.c.h.b16 %v266
      %v308 = vunpack.c.l.b16 %v267
      %v309 = vunpack.c.h.b16 %v267
      %v310 = vunpack.c.l.b16 %v268
      %v311 = vunpack.c.h.b16 %v268
      %v312 = vunpack.c.l.b16 %v269
      %v313 = vunpack.c.h.b16 %v269
      %v314 = vpack.c.b16 %v300, %v298
      %v315 = vpack.c.b16 %v301, %v299
      %v316 = vpack.c.b16 %v304, %v302
      %v317 = vpack.c.b16 %v305, %v303
      %v318 = vpack.c.b16 %v308, %v306
      %v319 = vpack.c.b16 %v309, %v307
      %v320 = vpack.c.b16 %v312, %v310
      %v321 = vpack.c.b16 %v313, %v311
      %vm330 = vcmask 523264
      %v332 = vsel %vm330, %v286, 0
      %v335 = vsel %vm330, %v287, 0
      %v338 = vsel %vm330, %v288, 0
      %v341 = vsel %vm330, %v289, 0
      %343 = vmatprep.subr.bf16.mxu0 %v315
      %344 = vmatpush1.bf16.msra.mxu0 %v314
      %345 = vmatprep.subr.bf16.mxu0 %v317
      %346 = vmatpush1.bf16.msra.mxu0 %v316
      %347 = vmatprep.subr.bf16.mxu0 %v319
      %348 = vmatpush1.bf16.msra.mxu0 %v318
      %349 = vmatprep.subr.bf16.mxu0 %v321
      %350 = vmatpush1.bf16.msra.mxu0 %v320
      %351 = vmatprep.subr.bf16.mxu0 0
      %352 = vmatpush1.bf16.msra.mxu0 0
      %353 = vmatprep.subr.bf16.mxu0 0
      %354 = vmatpush1.bf16.msra.mxu0 0
      %355 = vmatprep.subr.bf16.mxu0 0
      %356 = vmatpush1.bf16.msra.mxu0 0
      %357 = vmatprep.subr.bf16.mxu0 0
      %358 = vmatpush1.bf16.msra.mxu0 0
      %359 = vmatprep.subr.bf16.mxu0 0
      %360 = vmatpush1.bf16.msra.mxu0 0
      %361 = vmatprep.subr.bf16.mxu0 0
      %362 = vmatpush1.bf16.msra.mxu0 0
      %363 = vmatprep.subr.bf16.mxu0 0
      %364 = vmatpush1.bf16.msra.mxu0 0
      %365 = vmatprep.subr.bf16.mxu0 0
      %366 = vmatpush1.bf16.msra.mxu0 0
      %367 = vmatprep.subr.bf16.mxu0 0
      %368 = vmatpush1.bf16.msra.mxu0 0
      %369 = vmatprep.subr.bf16.mxu0 0
      %370 = vmatpush1.bf16.msra.mxu0 0
      %371 = vmatprep.subr.bf16.mxu0 0
      %372 = vmatpush1.bf16.msra.mxu0 0
      %373 = vmatprep.subr.bf16.mxu0 0
      %374 = vmatpush1.bf16.msra.mxu0 0
      %375 = vmatprep.mubr.bf16.mxu0 0
      %376 = vmatmul.mubr.bf16.gmra.mrb[0].mxu0 %v332
      %v377 = vpop.f32.mrb[0].mxu0
      %v378 = vadd.f32 0.0, %v377
      %v379 = vpop.f32.mrb[0].mxu0
      %v380 = vadd.f32 0.0, %v379
      %v381 = vpop.f32.mrb[0].mxu0
      %v382 = vadd.f32 0.0, %v381
      %v383 = vpop.f32.mrb[0].mxu0
      %v384 = vadd.f32 0.0, %v383
      %385 = vmatprep.mubr.bf16.mxu0 0
      %386 = vmatmul.mubr.bf16.gmra.mrb[0].mxu0 %v335
      %v387 = vpop.f32.mrb[0].mxu0
      %v388 = vadd.f32 0.0, %v387
      %v389 = vpop.f32.mrb[0].mxu0
      %v390 = vadd.f32 0.0, %v389
      %v391 = vpop.f32.mrb[0].mxu0
      %v392 = vadd.f32 0.0, %v391
      %v393 = vpop.f32.mrb[0].mxu0
      %v394 = vadd.f32 0.0, %v393
      %395 = vmatprep.mubr.bf16.mxu0 0
      %396 = vmatmul.mubr.bf16.gmra.mrb[0].mxu0 %v338
      %v397 = vpop.f32.mrb[0].mxu0
      %v398 = vadd.f32 0.0, %v397
      %v399 = vpop.f32.mrb[0].mxu0
      %v400 = vadd.f32 0.0, %v399
      %v401 = vpop.f32.mrb[0].mxu0
      %v402 = vadd.f32 0.0, %v401
      %v403 = vpop.f32.mrb[0].mxu0
      %v404 = vadd.f32 0.0, %v403
      %405 = vmatprep.mubr.bf16.mxu0 0
      %406 = vmatmul.mubr.bf16.gmra.mrb[0].mxu0 %v341
      %v407 = vpop.f32.mrb[0].mxu0
      %v408 = vadd.f32 0.0, %v407
      %v409 = vpop.f32.mrb[0].mxu0
      %v410 = vadd.f32 0.0, %v409
      %v411 = vpop.f32.mrb[0].mxu0
      %v412 = vadd.f32 0.0, %v411
      %v413 = vpop.f32.mrb[0].mxu0
      %v414 = vadd.f32 0.0, %v413
      %415 = vdwg.mxu0
      %v416 = vpack.c.bf16 %v382, %v378
      %v417 = vpack.c.bf16 %v384, %v380
      %v418 = vpack.c.bf16 %v392, %v388
      %v419 = vpack.c.bf16 %v394, %v390
      %v420 = vpack.c.bf16 %v402, %v398
      %v421 = vpack.c.bf16 %v404, %v400
      %v422 = vpack.c.bf16 %v412, %v408
      %v423 = vpack.c.bf16 %v414, %v410
      %v424 = vld [vmem:[%s237] sm:$0xf]
      %v425 = vld [vmem:[%s237 + $0x4] sm:$0xf]
      %v426 = vld [vmem:[%s237 + $0x8] sm:$0xf]
      %v427 = vld [vmem:[%s237 + $0xc] sm:$0xf]
      %v428 = vld [vmem:[%s237 + $0x10] sm:$0xf]
      %v429 = vld [vmem:[%s237 + $0x14] sm:$0xf]
      %v430 = vld [vmem:[%s237 + $0x18] sm:$0xf]
      %v431 = vld [vmem:[%s237 + $0x1c] sm:$0xf]
      %v432 = vld [vmem:[%s237 + $0x20] sm:$0xf]
      %v433 = vld [vmem:[%s237 + $0x24] sm:$0xf]
      %v434 = vld [vmem:[%s237 + $0x28] sm:$0xf]
      %v435 = vld [vmem:[%s237 + $0x2c] sm:$0xf]
      %v436 = vld [vmem:[%s237 + $0x30] sm:$0xf]
      %v437 = vld [vmem:[%s237 + $0x34] sm:$0xf]
      %v438 = vld [vmem:[%s237 + $0x38] sm:$0xf]
      %v439 = vld [vmem:[%s237 + $0x3c] sm:$0xf]
      %v440 = vld [vmem:[%s237 + $0x40] sm:$0xf]
      %v441 = vld [vmem:[%s237 + $0x44] sm:$0xf]
      %v442 = vld [vmem:[%s237 + $0x48] sm:$0xf]
      %v443 = vld [vmem:[%s237 + $0x4c] sm:$0xf]
      %v444 = vld [vmem:[%s237 + $0x50] sm:$0xf]
      %v445 = vld [vmem:[%s237 + $0x54] sm:$0xf]
      %v446 = vld [vmem:[%s237 + $0x58] sm:$0xf]
      %v447 = vld [vmem:[%s237 + $0x5c] sm:$0xf]
      %v448 = vld [vmem:[%s244] sm:$0xff]
      %v449 = vld [vmem:[%s244 + $0x8] sm:$0xff]
      %v474 = vunpack.c.l.b16 %v424
      %v475 = vunpack.c.l.b16 %v425
      %v476 = vunpack.c.l.b16 %v426
      %v477 = vunpack.c.l.b16 %v427
      %v478 = vunpack.c.l.b16 %v428
      %v479 = vunpack.c.l.b16 %v429
      %v480 = vunpack.c.l.b16 %v430
      %v481 = vunpack.c.l.b16 %v431
      %v482 = vunpack.c.l.b16 %v432
      %v483 = vunpack.c.l.b16 %v433
      %v484 = vunpack.c.l.b16 %v434
      %v485 = vunpack.c.l.b16 %v435
      %v486 = vunpack.c.l.b16 %v436
      %v487 = vunpack.c.l.b16 %v437
      %v488 = vunpack.c.l.b16 %v438
      %v489 = vunpack.c.l.b16 %v439
      %v490 = vunpack.c.l.b16 %v440
      %v491 = vunpack.c.l.b16 %v441
      %v492 = vunpack.c.l.b16 %v442
      %v493 = vunpack.c.l.b16 %v443
      %v494 = vunpack.c.l.b16 %v444
      %v495 = vunpack.c.l.b16 %v445
      %v496 = vunpack.c.l.b16 %v446
      %v497 = vunpack.c.l.b16 %v447
      %v498 = vpack.c.b16 %v475, %v474
      %v499 = vpack.c.b16 %v477, %v476
      %v500 = vpack.c.b16 %v479, %v478
      %v501 = vpack.c.b16 %v481, %v480
      %v502 = vpack.c.b16 %v483, %v482
      %v503 = vpack.c.b16 %v485, %v484
      %v504 = vpack.c.b16 %v487, %v486
      %v505 = vpack.c.b16 %v489, %v488
      %v506 = vpack.c.b16 %v491, %v490
      %v507 = vpack.c.b16 %v493, %v492
      %v508 = vpack.c.b16 %v495, %v494
      %v509 = vpack.c.b16 %v497, %v496
      %v523 = vsel %vm330, %v417, 0
      %525 = vmatprep.subr.bf16.mxu0 0
      %526 = vmatpush1.bf16.msra.mxu0 %v498
      %527 = vmatprep.subr.bf16.mxu0 0
      %528 = vmatpush1.bf16.msra.mxu0 %v499
      %529 = vmatprep.subr.bf16.mxu0 0
      %530 = vmatpush1.bf16.msra.mxu0 %v500
      %531 = vmatprep.subr.bf16.mxu0 0
      %532 = vmatpush1.bf16.msra.mxu0 %v501
      %533 = vmatprep.subr.bf16.mxu0 0
      %534 = vmatpush1.bf16.msra.mxu0 %v502
      %535 = vmatprep.subr.bf16.mxu0 0
      %536 = vmatpush1.bf16.msra.mxu0 %v503
      %537 = vmatprep.subr.bf16.mxu0 0
      %538 = vmatpush1.bf16.msra.mxu0 %v504
      %539 = vmatprep.subr.bf16.mxu0 0
      %540 = vmatpush1.bf16.msra.mxu0 %v505
      %541 = vmatprep.subr.bf16.mxu0 0
      %542 = vmatpush1.bf16.msra.mxu0 %v506
      %543 = vmatprep.subr.bf16.mxu0 0
      %544 = vmatpush1.bf16.msra.mxu0 %v507
      %545 = vmatprep.subr.bf16.mxu0 0
      %546 = vmatpush1.bf16.msra.mxu0 %v508
      %547 = vmatprep.subr.bf16.mxu0 0
      %548 = vmatpush1.bf16.msra.mxu0 %v509
      %549 = vmatprep.subr.bf16.mxu0 0
      %550 = vmatpush1.bf16.msra.mxu0 0
      %551 = vmatprep.subr.bf16.mxu0 0
      %552 = vmatpush1.bf16.msra.mxu0 0
      %553 = vmatprep.subr.bf16.mxu0 0
      %554 = vmatpush1.bf16.msra.mxu0 0
      %555 = vmatprep.subr.bf16.mxu0 0
      %556 = vmatpush1.bf16.msra.mxu0 0
      %557 = vmatprep.mubr.bf16.mxu0 %v523
      %558 = vmatmul.mubr.bf16.gmra.mrb[0].mxu0 %v416
      %v559 = vpop.f32.mrb[0].mxu0
      %v560 = vadd.f32 %v448, %v559
      %v561 = vpop.f32.mrb[0].mxu0
      %v562 = vpop.f32.mrb[0].mxu0
      %v563 = vadd.f32 %v449, %v562
      %v564 = vpop.f32.mrb[0].mxu0
      %565 = vdwg.mxu0
      %v566 = vpack.c.bf16 %v563, %v560
      %v568 = vunpack.c.l.b16 %v566
      %v569 = vunpack.c.h.b16 %v566
      %v570 = vpack.c.b16 %v568, %v568
      %v571 = vpack.c.b16 %v569, %v569
      %vm574 = vcmask 388096
      %575 = vst.msk [vmem:[%s251] sm:$0xf] %vm574, %v570
      %576 = vst.msk [vmem:[%s251 + $0x4] sm:$0xf] %vm574, %v571
      %s577 = scalar_lea.vmem %s237, 96
      %v578 = vld [vmem:[%s577] sm:$0xf]
      %v579 = vld [vmem:[%s577 + $0x4] sm:$0xf]
      %v580 = vld [vmem:[%s577 + $0x8] sm:$0xf]
      %v581 = vld [vmem:[%s577 + $0xc] sm:$0xf]
      %v582 = vld [vmem:[%s577 + $0x10] sm:$0xf]
      %v583 = vld [vmem:[%s577 + $0x14] sm:$0xf]
      %v584 = vld [vmem:[%s577 + $0x18] sm:$0xf]
      %v585 = vld [vmem:[%s577 + $0x1c] sm:$0xf]
      %v586 = vld [vmem:[%s577 + $0x20] sm:$0xf]
      %v587 = vld [vmem:[%s577 + $0x24] sm:$0xf]
      %v588 = vld [vmem:[%s577 + $0x28] sm:$0xf]
      %v589 = vld [vmem:[%s577 + $0x2c] sm:$0xf]
      %v590 = vld [vmem:[%s577 + $0x30] sm:$0xf]
      %v591 = vld [vmem:[%s577 + $0x34] sm:$0xf]
      %v592 = vld [vmem:[%s577 + $0x38] sm:$0xf]
      %v593 = vld [vmem:[%s577 + $0x3c] sm:$0xf]
      %v594 = vld [vmem:[%s577 + $0x40] sm:$0xf]
      %v595 = vld [vmem:[%s577 + $0x44] sm:$0xf]
      %v596 = vld [vmem:[%s577 + $0x48] sm:$0xf]
      %v597 = vld [vmem:[%s577 + $0x4c] sm:$0xf]
      %v598 = vld [vmem:[%s577 + $0x50] sm:$0xf]
      %v599 = vld [vmem:[%s577 + $0x54] sm:$0xf]
      %v600 = vld [vmem:[%s577 + $0x58] sm:$0xf]
      %v601 = vld [vmem:[%s577 + $0x5c] sm:$0xf]
      %s602 = scalar_lea.vmem %s244, 16
      %v603 = vld [vmem:[%s602] sm:$0xff]
      %v604 = vld [vmem:[%s602 + $0x8] sm:$0xff]
      %v629 = vunpack.c.l.b16 %v578
      %v630 = vunpack.c.l.b16 %v579
      %v631 = vunpack.c.l.b16 %v580
      %v632 = vunpack.c.l.b16 %v581
      %v633 = vunpack.c.l.b16 %v582
      %v634 = vunpack.c.l.b16 %v583
      %v635 = vunpack.c.l.b16 %v584
      %v636 = vunpack.c.l.b16 %v585
      %v637 = vunpack.c.l.b16 %v586
      %v638 = vunpack.c.l.b16 %v587
      %v639 = vunpack.c.l.b16 %v588
      %v640 = vunpack.c.l.b16 %v589
      %v641 = vunpack.c.l.b16 %v590
      %v642 = vunpack.c.l.b16 %v591
      %v643 = vunpack.c.l.b16 %v592
      %v644 = vunpack.c.l.b16 %v593
      %v645 = vunpack.c.l.b16 %v594
      %v646 = vunpack.c.l.b16 %v595
      %v647 = vunpack.c.l.b16 %v596
      %v648 = vunpack.c.l.b16 %v597
      %v649 = vunpack.c.l.b16 %v598
      %v650 = vunpack.c.l.b16 %v599
      %v651 = vunpack.c.l.b16 %v600
      %v652 = vunpack.c.l.b16 %v601
      %v653 = vpack.c.b16 %v630, %v629
      %v654 = vpack.c.b16 %v632, %v631
      %v655 = vpack.c.b16 %v634, %v633
      %v656 = vpack.c.b16 %v636, %v635
      %v657 = vpack.c.b16 %v638, %v637
      %v658 = vpack.c.b16 %v640, %v639
      %v659 = vpack.c.b16 %v642, %v641
      %v660 = vpack.c.b16 %v644, %v643
      %v661 = vpack.c.b16 %v646, %v645
      %v662 = vpack.c.b16 %v648, %v647
      %v663 = vpack.c.b16 %v650, %v649
      %v664 = vpack.c.b16 %v652, %v651
      %v678 = vsel %vm330, %v419, 0
      %680 = vmatprep.subr.bf16.mxu0 0
      %681 = vmatpush1.bf16.msra.mxu0 %v653
      %682 = vmatprep.subr.bf16.mxu0 0
      %683 = vmatpush1.bf16.msra.mxu0 %v654
      %684 = vmatprep.subr.bf16.mxu0 0
      %685 = vmatpush1.bf16.msra.mxu0 %v655
      %686 = vmatprep.subr.bf16.mxu0 0
      %687 = vmatpush1.bf16.msra.mxu0 %v656
      %688 = vmatprep.subr.bf16.mxu0 0
      %689 = vmatpush1.bf16.msra.mxu0 %v657
      %690 = vmatprep.subr.bf16.mxu0 0
      %691 = vmatpush1.bf16.msra.mxu0 %v658
      %692 = vmatprep.subr.bf16.mxu0 0
      %693 = vmatpush1.bf16.msra.mxu0 %v659
      %694 = vmatprep.subr.bf16.mxu0 0
      %695 = vmatpush1.bf16.msra.mxu0 %v660
      %696 = vmatprep.subr.bf16.mxu0 0
      %697 = vmatpush1.bf16.msra.mxu0 %v661
      %698 = vmatprep.subr.bf16.mxu0 0
      %699 = vmatpush1.bf16.msra.mxu0 %v662
      %700 = vmatprep.subr.bf16.mxu0 0
      %701 = vmatpush1.bf16.msra.mxu0 %v663
      %702 = vmatprep.subr.bf16.mxu0 0
      %703 = vmatpush1.bf16.msra.mxu0 %v664
      %704 = vmatprep.subr.bf16.mxu0 0
      %705 = vmatpush1.bf16.msra.mxu0 0
      %706 = vmatprep.subr.bf16.mxu0 0
      %707 = vmatpush1.bf16.msra.mxu0 0
      %708 = vmatprep.subr.bf16.mxu0 0
      %709 = vmatpush1.bf16.msra.mxu0 0
      %710 = vmatprep.subr.bf16.mxu0 0
      %711 = vmatpush1.bf16.msra.mxu0 0
      %712 = vmatprep.mubr.bf16.mxu0 %v678
      %713 = vmatmul.mubr.bf16.gmra.mrb[0].mxu0 %v418
      %v714 = vpop.f32.mrb[0].mxu0
      %v715 = vadd.f32 %v603, %v714
      %v716 = vpop.f32.mrb[0].mxu0
      %v717 = vpop.f32.mrb[0].mxu0
      %v718 = vadd.f32 %v604, %v717
      %v719 = vpop.f32.mrb[0].mxu0
      %720 = vdwg.mxu0
      %v721 = vpack.c.bf16 %v718, %v715
      %v723 = vunpack.c.l.b16 %v721
      %v724 = vunpack.c.h.b16 %v721
      %v725 = vpack.c.b16 %v723, %v723
      %v726 = vpack.c.b16 %v724, %v724
      %s729 = scalar_lea.vmem %s251, 8
      %730 = vst.msk [vmem:[%s729] sm:$0xf] %vm574, %v725
      %731 = vst.msk [vmem:[%s729 + $0x4] sm:$0xf] %vm574, %v726
      %s732 = scalar_lea.vmem %s237, 192
      %v733 = vld [vmem:[%s732] sm:$0xf]
      %v734 = vld [vmem:[%s732 + $0x4] sm:$0xf]
      %v735 = vld [vmem:[%s732 + $0x8] sm:$0xf]
      %v736 = vld [vmem:[%s732 + $0xc] sm:$0xf]
      %v737 = vld [vmem:[%s732 + $0x10] sm:$0xf]
      %v738 = vld [vmem:[%s732 + $0x14] sm:$0xf]
      %v739 = vld [vmem:[%s732 + $0x18] sm:$0xf]
      %v740 = vld [vmem:[%s732 + $0x1c] sm:$0xf]
      %v741 = vld [vmem:[%s732 + $0x20] sm:$0xf]
      %v742 = vld [vmem:[%s732 + $0x24] sm:$0xf]
      %v743 = vld [vmem:[%s732 + $0x28] sm:$0xf]
      %v744 = vld [vmem:[%s732 + $0x2c] sm:$0xf]
      %v745 = vld [vmem:[%s732 + $0x30] sm:$0xf]
      %v746 = vld [vmem:[%s732 + $0x34] sm:$0xf]
      %v747 = vld [vmem:[%s732 + $0x38] sm:$0xf]
      %v748 = vld [vmem:[%s732 + $0x3c] sm:$0xf]
      %v749 = vld [vmem:[%s732 + $0x40] sm:$0xf]
      %v750 = vld [vmem:[%s732 + $0x44] sm:$0xf]
      %v751 = vld [vmem:[%s732 + $0x48] sm:$0xf]
      %v752 = vld [vmem:[%s732 + $0x4c] sm:$0xf]
      %v753 = vld [vmem:[%s732 + $0x50] sm:$0xf]
      %v754 = vld [vmem:[%s732 + $0x54] sm:$0xf]
      %v755 = vld [vmem:[%s732 + $0x58] sm:$0xf]
      %v756 = vld [vmem:[%s732 + $0x5c] sm:$0xf]
      %s757 = scalar_lea.vmem %s244, 32
      %v758 = vld [vmem:[%s757] sm:$0xff]
      %v759 = vld [vmem:[%s757 + $0x8] sm:$0xff]
      %v784 = vunpack.c.l.b16 %v733
      %v785 = vunpack.c.l.b16 %v734
      %v786 = vunpack.c.l.b16 %v735
      %v787 = vunpack.c.l.b16 %v736
      %v788 = vunpack.c.l.b16 %v737
      %v789 = vunpack.c.l.b16 %v738
      %v790 = vunpack.c.l.b16 %v739
      %v791 = vunpack.c.l.b16 %v740
      %v792 = vunpack.c.l.b16 %v741
      %v793 = vunpack.c.l.b16 %v742
      %v794 = vunpack.c.l.b16 %v743
      %v795 = vunpack.c.l.b16 %v744
      %v796 = vunpack.c.l.b16 %v745
      %v797 = vunpack.c.l.b16 %v746
      %v798 = vunpack.c.l.b16 %v747
      %v799 = vunpack.c.l.b16 %v748
      %v800 = vunpack.c.l.b16 %v749
      %v801 = vunpack.c.l.b16 %v750
      %v802 = vunpack.c.l.b16 %v751
      %v803 = vunpack.c.l.b16 %v752
      %v804 = vunpack.c.l.b16 %v753
      %v805 = vunpack.c.l.b16 %v754
      %v806 = vunpack.c.l.b16 %v755
      %v807 = vunpack.c.l.b16 %v756
      %v808 = vpack.c.b16 %v785, %v784
      %v809 = vpack.c.b16 %v787, %v786
      %v810 = vpack.c.b16 %v789, %v788
      %v811 = vpack.c.b16 %v791, %v790
      %v812 = vpack.c.b16 %v793, %v792
      %v813 = vpack.c.b16 %v795, %v794
      %v814 = vpack.c.b16 %v797, %v796
      %v815 = vpack.c.b16 %v799, %v798
      %v816 = vpack.c.b16 %v801, %v800
      %v817 = vpack.c.b16 %v803, %v802
      %v818 = vpack.c.b16 %v805, %v804
      %v819 = vpack.c.b16 %v807, %v806
      %v833 = vsel %vm330, %v421, 0
      %835 = vmatprep.subr.bf16.mxu0 0
      %836 = vmatpush1.bf16.msra.mxu0 %v808
      %837 = vmatprep.subr.bf16.mxu0 0
      %838 = vmatpush1.bf16.msra.mxu0 %v809
      %839 = vmatprep.subr.bf16.mxu0 0
      %840 = vmatpush1.bf16.msra.mxu0 %v810
      %841 = vmatprep.subr.bf16.mxu0 0
      %842 = vmatpush1.bf16.msra.mxu0 %v811
      %843 = vmatprep.subr.bf16.mxu0 0
      %844 = vmatpush1.bf16.msra.mxu0 %v812
      %845 = vmatprep.subr.bf16.mxu0 0
      %846 = vmatpush1.bf16.msra.mxu0 %v813
      %847 = vmatprep.subr.bf16.mxu0 0
      %848 = vmatpush1.bf16.msra.mxu0 %v814
      %849 = vmatprep.subr.bf16.mxu0 0
      %850 = vmatpush1.bf16.msra.mxu0 %v815
      %851 = vmatprep.subr.bf16.mxu0 0
      %852 = vmatpush1.bf16.msra.mxu0 %v816
      %853 = vmatprep.subr.bf16.mxu0 0
      %854 = vmatpush1.bf16.msra.mxu0 %v817
      %855 = vmatprep.subr.bf16.mxu0 0
      %856 = vmatpush1.bf16.msra.mxu0 %v818
      %857 = vmatprep.subr.bf16.mxu0 0
      %858 = vmatpush1.bf16.msra.mxu0 %v819
      %859 = vmatprep.subr.bf16.mxu0 0
      %860 = vmatpush1.bf16.msra.mxu0 0
      %861 = vmatprep.subr.bf16.mxu0 0
      %862 = vmatpush1.bf16.msra.mxu0 0
      %863 = vmatprep.subr.bf16.mxu0 0
      %864 = vmatpush1.bf16.msra.mxu0 0
      %865 = vmatprep.subr.bf16.mxu0 0
      %866 = vmatpush1.bf16.msra.mxu0 0
      %867 = vmatprep.mubr.bf16.mxu0 %v833
      %868 = vmatmul.mubr.bf16.gmra.mrb[0].mxu0 %v420
      %v869 = vpop.f32.mrb[0].mxu0
      %v870 = vadd.f32 %v758, %v869
      %v871 = vpop.f32.mrb[0].mxu0
      %v872 = vpop.f32.mrb[0].mxu0
      %v873 = vadd.f32 %v759, %v872
      %v874 = vpop.f32.mrb[0].mxu0
      %875 = vdwg.mxu0
      %v876 = vpack.c.bf16 %v873, %v870
      %v878 = vunpack.c.l.b16 %v876
      %v879 = vunpack.c.h.b16 %v876
      %v880 = vpack.c.b16 %v878, %v878
      %v881 = vpack.c.b16 %v879, %v879
      %s884 = scalar_lea.vmem %s251, 16
      %885 = vst.msk [vmem:[%s884] sm:$0xf] %vm574, %v880
      %886 = vst.msk [vmem:[%s884 + $0x4] sm:$0xf] %vm574, %v881
      %s887 = scalar_lea.vmem %s237, 288
      %v888 = vld [vmem:[%s887] sm:$0xf]
      %v889 = vld [vmem:[%s887 + $0x4] sm:$0xf]
      %v890 = vld [vmem:[%s887 + $0x8] sm:$0xf]
      %v891 = vld [vmem:[%s887 + $0xc] sm:$0xf]
      %v892 = vld [vmem:[%s887 + $0x10] sm:$0xf]
      %v893 = vld [vmem:[%s887 + $0x14] sm:$0xf]
      %v894 = vld [vmem:[%s887 + $0x18] sm:$0xf]
      %v895 = vld [vmem:[%s887 + $0x1c] sm:$0xf]
      %v896 = vld [vmem:[%s887 + $0x20] sm:$0xf]
      %v897 = vld [vmem:[%s887 + $0x24] sm:$0xf]
      %v898 = vld [vmem:[%s887 + $0x28] sm:$0xf]
      %v899 = vld [vmem:[%s887 + $0x2c] sm:$0xf]
      %v900 = vld [vmem:[%s887 + $0x30] sm:$0xf]
      %v901 = vld [vmem:[%s887 + $0x34] sm:$0xf]
      %v902 = vld [vmem:[%s887 + $0x38] sm:$0xf]
      %v903 = vld [vmem:[%s887 + $0x3c] sm:$0xf]
      %v904 = vld [vmem:[%s887 + $0x40] sm:$0xf]
      %v905 = vld [vmem:[%s887 + $0x44] sm:$0xf]
      %v906 = vld [vmem:[%s887 + $0x48] sm:$0xf]
      %v907 = vld [vmem:[%s887 + $0x4c] sm:$0xf]
      %v908 = vld [vmem:[%s887 + $0x50] sm:$0xf]
      %v909 = vld [vmem:[%s887 + $0x54] sm:$0xf]
      %v910 = vld [vmem:[%s887 + $0x58] sm:$0xf]
      %v911 = vld [vmem:[%s887 + $0x5c] sm:$0xf]
      %s912 = scalar_lea.vmem %s244, 48
      %v913 = vld [vmem:[%s912] sm:$0xff]
      %v914 = vld [vmem:[%s912 + $0x8] sm:$0xff]
      %v939 = vunpack.c.l.b16 %v888
      %v940 = vunpack.c.l.b16 %v889
      %v941 = vunpack.c.l.b16 %v890
      %v942 = vunpack.c.l.b16 %v891
      %v943 = vunpack.c.l.b16 %v892
      %v944 = vunpack.c.l.b16 %v893
      %v945 = vunpack.c.l.b16 %v894
      %v946 = vunpack.c.l.b16 %v895
      %v947 = vunpack.c.l.b16 %v896
      %v948 = vunpack.c.l.b16 %v897
      %v949 = vunpack.c.l.b16 %v898
      %v950 = vunpack.c.l.b16 %v899
      %v951 = vunpack.c.l.b16 %v900
      %v952 = vunpack.c.l.b16 %v901
      %v953 = vunpack.c.l.b16 %v902
      %v954 = vunpack.c.l.b16 %v903
      %v955 = vunpack.c.l.b16 %v904
      %v956 = vunpack.c.l.b16 %v905
      %v957 = vunpack.c.l.b16 %v906
      %v958 = vunpack.c.l.b16 %v907
      %v959 = vunpack.c.l.b16 %v908
      %v960 = vunpack.c.l.b16 %v909
      %v961 = vunpack.c.l.b16 %v910
      %v962 = vunpack.c.l.b16 %v911
      %v963 = vpack.c.b16 %v940, %v939
      %v964 = vpack.c.b16 %v942, %v941
      %v965 = vpack.c.b16 %v944, %v943
      %v966 = vpack.c.b16 %v946, %v945
      %v967 = vpack.c.b16 %v948, %v947
      %v968 = vpack.c.b16 %v950, %v949
      %v969 = vpack.c.b16 %v952, %v951
      %v970 = vpack.c.b16 %v954, %v953
      %v971 = vpack.c.b16 %v956, %v955
      %v972 = vpack.c.b16 %v958, %v957
      %v973 = vpack.c.b16 %v960, %v959
      %v974 = vpack.c.b16 %v962, %v961
      %v988 = vsel %vm330, %v423, 0
      %990 = vmatprep.subr.bf16.mxu0 0
      %991 = vmatpush1.bf16.msra.mxu0 %v963
      %992 = vmatprep.subr.bf16.mxu0 0
      %993 = vmatpush1.bf16.msra.mxu0 %v964
      %994 = vmatprep.subr.bf16.mxu0 0
      %995 = vmatpush1.bf16.msra.mxu0 %v965
      %996 = vmatprep.subr.bf16.mxu0 0
      %997 = vmatpush1.bf16.msra.mxu0 %v966
      %998 = vmatprep.subr.bf16.mxu0 0
      %999 = vmatpush1.bf16.msra.mxu0 %v967
      %1000 = vmatprep.subr.bf16.mxu0 0
      %1001 = vmatpush1.bf16.msra.mxu0 %v968
      %1002 = vmatprep.subr.bf16.mxu0 0
      %1003 = vmatpush1.bf16.msra.mxu0 %v969
      %1004 = vmatprep.subr.bf16.mxu0 0
      %1005 = vmatpush1.bf16.msra.mxu0 %v970
      %1006 = vmatprep.subr.bf16.mxu0 0
      %1007 = vmatpush1.bf16.msra.mxu0 %v971
      %1008 = vmatprep.subr.bf16.mxu0 0
      %1009 = vmatpush1.bf16.msra.mxu0 %v972
      %1010 = vmatprep.subr.bf16.mxu0 0
      %1011 = vmatpush1.bf16.msra.mxu0 %v973
      %1012 = vmatprep.subr.bf16.mxu0 0
      %1013 = vmatpush1.bf16.msra.mxu0 %v974
      %1014 = vmatprep.subr.bf16.mxu0 0
      %1015 = vmatpush1.bf16.msra.mxu0 0
      %1016 = vmatprep.subr.bf16.mxu0 0
      %1017 = vmatpush1.bf16.msra.mxu0 0
      %1018 = vmatprep.subr.bf16.mxu0 0
      %1019 = vmatpush1.bf16.msra.mxu0 0
      %1020 = vmatprep.subr.bf16.mxu0 0
      %1021 = vmatpush1.bf16.msra.mxu0 0
      %1022 = vmatprep.mubr.bf16.mxu0 %v988
      %1023 = vmatmul.mubr.bf16.gmra.mrb[0].mxu0 %v422
      %v1024 = vpop.f32.mrb[0].mxu0
      %v1025 = vadd.f32 %v913, %v1024
      %v1026 = vpop.f32.mrb[0].mxu0
      %v1027 = vpop.f32.mrb[0].mxu0
      %v1028 = vadd.f32 %v914, %v1027
      %v1029 = vpop.f32.mrb[0].mxu0
      %1030 = vdwg.mxu0
      %v1031 = vpack.c.bf16 %v1028, %v1025
      %v1033 = vunpack.c.l.b16 %v1031
      %v1034 = vunpack.c.h.b16 %v1031
      %v1035 = vpack.c.b16 %v1033, %v1033
      %v1036 = vpack.c.b16 %v1034, %v1034
      %s1039 = scalar_lea.vmem %s251, 24
      %1040 = vst.msk [vmem:[%s1039] sm:$0xf] %vm574, %v1035
      %1041 = vst.msk [vmem:[%s1039 + $0x4] sm:$0xf] %vm574, %v1036
      %s1042 = smul.u32 4, %s15
      %p1043 = scmp.lt.s32.totalorder %s1042, 7
      %s1044 = scalar_select %p1043, %s1042, 7
      %s1045 = smul.addr %s1044, 2
      %s1046 = smul.addr %s1045, 4
      %s1047 = scalar_lea.vmem %s4, %s1046
      // Predicated region
      $region37: #{hd_multi_clip_embed.6} parent=35 // pred_check
        %p1048 = pneg %p132
      $region38: #{hd_multi_clip_embed.6} parent=35 // pred_check_branch
        %1050 = sbr.rel (%p1048) target = $region40
      $region39: #{hd_multi_clip_embed.6} parent=35 // pred_region
        %s1051 = smul.u32 4, %s15
      $region40: #{hd_multi_clip_embed.6} parent=35 // pred_fallthru
        _
    $region36: #{hd_multi_clip_embed.6} parent=5 // pred_fallthru
      _
    %p1052 = scmp.le.s32.totalorder 2, %s10
    // Predicated region
    $region41: #{hd_multi_clip_embed.6} parent=5 // pred_check
      %p1053 = pneg %p1052
    $region42: #{hd_multi_clip_embed.6} parent=5 // pred_check_branch
      %1055 = sbr.rel (%p1053) target = $region44
    $region43: #{hd_multi_clip_embed.6} parent=5 // pred_region
      %s1056 = ssub.s32 %s10, 2
      // Predicated region
      $region45: #{hd_multi_clip_embed.6} parent=43 // pred_check
        %p1057 = pneg %p138
      $region46: #{hd_multi_clip_embed.6} parent=43 // pred_check_branch
        %1059 = sbr.rel (%p1057) target = $region48
      $region47: #{hd_multi_clip_embed.6} parent=43 // pred_region
        %s1060 = smul.u32 4, %s16
        %p1061 = scmp.lt.s32.totalorder %s1060, 7
        %s1062 = scalar_select %p1061, %s1060, 7
        %s1063 = smul.addr %s1062, 2
        %s1064 = smul.addr %s1063, 4
        %s1065 = scalar_lea.vmem %s4, %s1064
      $region48: #{hd_multi_clip_embed.6} parent=43 // pred_fallthru
        _
    $region44: #{hd_multi_clip_embed.6} parent=5 // pred_fallthru
      _
  $region6: #{hd_multi_clip_embed.6} parent=0 // loop_footer
    %s14 = sadd.s32 1, %s10
  $region7: #{hd_multi_clip_embed.6} parent=0 // loop_footer_branch
    %9 = sbr.rel target = $region3
  $region8: #{hd_multi_clip_embed.6} parent=0 // loop_exit
    _

// kernel: hd_multi_clip_embed.7
$region0: #{hd_multi_clip_embed.7}
  #allocation0 [shape = 'u32[]', space=smem, size = 0x4, offset = 0x4, fixed_abs, tag = 'smem constant byte address 0x4 - core index']
  #allocation1 [shape = 'u32[144,128]{1,0:T(1,128)}', space=vmem, size = 0x12000, scoped, tag = 'internal scratch']
  %s0 = inlined_call_operand.vmem [shape: bf16[2,8,3072], index: 0, kind: input, shape index: {}]
  %s1 = inlined_call_operand.vmem [shape: bf16[2,3072,128], index: 1, kind: input, shape index: {}]
  %s2 = inlined_call_operand.vmem [shape: f32[2,1,128], index: 2, kind: input, shape index: {}]
  %s3 = inlined_call_operand.hbm [shape: f32[2,8,128], index: 3, kind: output, shape index: {}]
  %s4 = sld [smem:[#allocation0]]
  $region45: #{hd_multi_clip_embed.7} parent=0
    _
  %s6 = ssub.s32 1, %s4
  %s7 = scalar_select 0, %s6, %s4
  $region1: #{hd_multi_clip_embed.7} parent=0
    #allocation2 [shape = 'u8[8192]{0}', space=vmem, size = 0x2000, scoped, tag = 'output window, operand 0']
    #allocation3 [shape = 's32[2]{0}', space=sflag, size = 0x8, scoped, tag = 'scoped memory for hd_multi_clip_embed.7']
    %8 = vsyncpa [#allocation3], 0
    %s9 = scalar_lea.sflag [#allocation3], 1
    %10 = vsyncpa %s9, 0
    loop: start=0, step=1, limit=4
    $region2: #{hd_multi_clip_embed.7} parent=1 // loop_pre_header
      _
    $region3: #{hd_multi_clip_embed.7} parent=1 // loop_header
      %s12 = sphi 0, %s16
      %p13 = scmp.ge.s32.totalorder %s12, 4
      %s22 = sphi 0, %s24
      %s25 = sphi 0, %s22
      %s26 = sphi 0, %s25
      %s42 = sphi 0, %s26
      %s48 = sphi 0, %s50
      %s51 = sphi 0, %s48
      %s52 = sphi 0, %s51
      %s68 = sphi 0, %s52
      %s74 = sphi 0, %s76
      %s77 = sphi 0, %s74
      %s78 = sphi 0, %s77
      %s94 = sphi 0, %s78
      %s100 = sphi 0, %s102
      %s103 = sphi 0, %s100
      %s104 = sphi 0, %s103
      %s120 = sphi 0, %s104
    $region4: #{hd_multi_clip_embed.7} parent=1 // loop_header_branch
      %15 = sbr.rel (%p13) target = $region8
    $region5: #{hd_multi_clip_embed.7} parent=1 // loop_body
      %s17 = ssub.s32 %s12, 1
      %s18 = ssub.s32 %s12, 2
      %s19 = sadd.s32 %s12, 1
      %s20 = ssub.s32 %s12, %s19
      %p21 = scmp.eq.s32.totalorder %s20, 0
      %s23 = sadd.s32 %s22, 1
      %s24 = scalar_select %p21, %s22, %s23
      %p27 = pneg %p21
      %p28 = scmp.eq.s32.totalorder %s12, 1
      %p29 = por %p27, %p28
      %p30 = scmp.ne.s32.totalorder %s22, %s25
      %p31 = scmp.eq.s32.totalorder %s12, 0
      %p32 = por %p30, %p31
      %p33 = scmp.ne.s32.totalorder %s22, %s25
      %p34 = scmp.eq.s32.totalorder %s17, 1
      %p35 = por %p33, %p34
      %p36 = scmp.ne.s32.totalorder %s25, %s26
      %p37 = scmp.eq.s32.totalorder %s17, 0
      %p38 = por %p36, %p37
      %p39 = scmp.ne.s32.totalorder %s25, %s26
      %p40 = scmp.eq.s32.totalorder %s18, 1
      %p41 = por %p39, %p40
      %p43 = scmp.ne.s32.totalorder %s26, %s42
      %p44 = scmp.eq.s32.totalorder %s18, 0
      %p45 = por %p43, %p44
      %s46 = ssub.s32 %s12, %s19
      %p47 = scmp.eq.s32.totalorder %s46, 0
      %s49 = sadd.s32 %s48, 1
      %s50 = scalar_select %p47, %s48, %s49
      %p53 = pneg %p47
      %p54 = scmp.eq.s32.totalorder %s12, 1
      %p55 = por %p53, %p54
      %p56 = scmp.ne.s32.totalorder %s48, %s51
      %p57 = scmp.eq.s32.totalorder %s12, 0
      %p58 = por %p56, %p57
      %p59 = scmp.ne.s32.totalorder %s48, %s51
      %p60 = scmp.eq.s32.totalorder %s17, 1
      %p61 = por %p59, %p60
      %p62 = scmp.ne.s32.totalorder %s51, %s52
      %p63 = scmp.eq.s32.totalorder %s17, 0
      %p64 = por %p62, %p63
      %p65 = scmp.ne.s32.totalorder %s51, %s52
      %p66 = scmp.eq.s32.totalorder %s18, 1
      %p67 = por %p65, %p66
      %p69 = scmp.ne.s32.totalorder %s52, %s68
      %p70 = scmp.eq.s32.totalorder %s18, 0
      %p71 = por %p69, %p70
      %s72 = ssub.s32 %s12, %s19
      %p73 = scmp.eq.s32.totalorder %s72, 0
      %s75 = sadd.s32 %s74, 1
      %s76 = scalar_select %p73, %s74, %s75
      %p79 = pneg %p73
      %p80 = scmp.eq.s32.totalorder %s12, 1
      %p81 = por %p79, %p80
      %p82 = scmp.ne.s32.totalorder %s74, %s77
      %p83 = scmp.eq.s32.totalorder %s12, 0
      %p84 = por %p82, %p83
      %p85 = scmp.ne.s32.totalorder %s74, %s77
      %p86 = scmp.eq.s32.totalorder %s17, 1
      %p87 = por %p85, %p86
      %p88 = scmp.ne.s32.totalorder %s77, %s78
      %p89 = scmp.eq.s32.totalorder %s17, 0
      %p90 = por %p88, %p89
      %p91 = scmp.ne.s32.totalorder %s77, %s78
      %p92 = scmp.eq.s32.totalorder %s18, 1
      %p93 = por %p91, %p92
      %p95 = scmp.ne.s32.totalorder %s78, %s94
      %p96 = scmp.eq.s32.totalorder %s18, 0
      %p97 = por %p95, %p96
      %s98 = ssub.s32 %s12, %s19
      %p99 = scmp.eq.s32.totalorder %s98, 0
      %s101 = sadd.s32 %s100, 1
      %s102 = scalar_select %p99, %s100, %s101
      %p105 = pneg %p99
      %p106 = scmp.eq.s32.totalorder %s12, 1
      %p107 = por %p105, %p106
      %p108 = scmp.ne.s32.totalorder %s100, %s103
      %p109 = scmp.eq.s32.totalorder %s12, 0
      %p110 = por %p108, %p109
      %p111 = scmp.ne.s32.totalorder %s100, %s103
      %p112 = scmp.eq.s32.totalorder %s17, 1
      %p113 = por %p111, %p112
      %p114 = scmp.ne.s32.totalorder %s103, %s104
      %p115 = scmp.eq.s32.totalorder %s17, 0
      %p116 = por %p114, %p115
      %p117 = scmp.ne.s32.totalorder %s103, %s104
      %p118 = scmp.eq.s32.totalorder %s18, 1
      %p119 = por %p117, %p118
      %p121 = scmp.ne.s32.totalorder %s104, %s120
      %p122 = scmp.eq.s32.totalorder %s18, 0
      %p123 = por %p121, %p122
      %p124 = scmp.le.s32.totalorder 1, %s12
      %p125 = scmp.lt.s32.totalorder %s12, 3
      %p126 = pnand %p124, %p125
      %p127 = pneg %p126
      // Predicated region
      $region9: #{hd_multi_clip_embed.7} parent=5 // pred_check
        _
      $region10: #{hd_multi_clip_embed.7} parent=5 // pred_check_branch
        %129 = sbr.rel (%p126) target = $region12
      $region11: #{hd_multi_clip_embed.7} parent=5 // pred_region
        %s130 = ssub.s32 %s12, 1
      $region12: #{hd_multi_clip_embed.7} parent=5 // pred_fallthru
        _
      %p131 = scmp.lt.s32.totalorder %s12, 2
      // Predicated region
      $region13: #{hd_multi_clip_embed.7} parent=5 // pred_check
        %p132 = pneg %p131
      $region14: #{hd_multi_clip_embed.7} parent=5 // pred_check_branch
        %134 = sbr.rel (%p132) target = $region16
      $region15: #{hd_multi_clip_embed.7} parent=5 // pred_region
        // Predicated region
        $region17: #{hd_multi_clip_embed.7} parent=15 // pred_check
          %p135 = pneg %p32
        $region18: #{hd_multi_clip_embed.7} parent=15 // pred_check_branch
          %137 = sbr.rel (%p135) target = $region20
        $region19: #{hd_multi_clip_embed.7} parent=15 // pred_region
          %p138 = scmp.lt.s32.totalorder %s12, 1
          %s139 = scalar_select %p138, %s12, 1
          %s140 = smul.addr %s139, 24
          %s141 = smul.addr %s140, 4
          %s142 = scalar_lea.vmem %s0, %s141
        $region20: #{hd_multi_clip_embed.7} parent=15 // pred_fallthru
          _
        // Predicated region
        $region21: #{hd_multi_clip_embed.7} parent=15 // pred_check
          %p143 = pneg %p58
        $region22: #{hd_multi_clip_embed.7} parent=15 // pred_check_branch
          %145 = sbr.rel (%p143) target = $region24
        $region23: #{hd_multi_clip_embed.7} parent=15 // pred_region
          %p146 = scmp.lt.s32.totalorder %s12, 1
          %s147 = scalar_select %p146, %s12, 1
          %s148 = smul.addr %s147, 384
          %s149 = smul.addr %s148, 4
          %s150 = scalar_lea.vmem %s1, %s149
        $region24: #{hd_multi_clip_embed.7} parent=15 // pred_fallthru
          _
        // Predicated region
        $region25: #{hd_multi_clip_embed.7} parent=15 // pred_check
          %p151 = pneg %p84
        $region26: #{hd_multi_clip_embed.7} parent=15 // pred_check_branch
          %153 = sbr.rel (%p151) target = $region28
        $region27: #{hd_multi_clip_embed.7} parent=15 // pred_region
          %p154 = scmp.lt.s32.totalorder %s12, 1
          %s155 = scalar_select %p154, %s12, 1
          %s156 = scalar_lea.vmem %s2, %s155
        $region28: #{hd_multi_clip_embed.7} parent=15 // pred_fallthru
          _
      $region16: #{hd_multi_clip_embed.7} parent=5 // pred_fallthru
        _
      %p157 = scmp.le.s32.totalorder 1, %s12
      %p158 = scmp.lt.s32.totalorder %s12, 3
      %p159 = pnand %p157, %p158
      %p160 = pneg %p159
      // Predicated region
      $region29: #{hd_multi_clip_embed.7} parent=5 // pred_check
        _
      $region30: #{hd_multi_clip_embed.7} parent=5 // pred_check_branch
        %162 = sbr.rel (%p159) target = $region32
      $region31: #{hd_multi_clip_embed.7} parent=5 // pred_region
        %s163 = ssub.s32 %s12, 1
        %p164 = scmp.lt.s32.totalorder %s17, 1
        %s165 = scalar_select %p164, %s17, 1
        %s166 = smul.addr %s165, 24
        %s167 = smul.addr %s166, 4
        %s168 = scalar_lea.vmem %s0, %s167
        %p169 = pneg %p38
        %p170 = pneg %p35
        %p171 = scmp.lt.s32.totalorder %s17, 1
        %s172 = scalar_select %p171, %s17, 1
        %s173 = smul.addr %s172, 384
        %s174 = smul.addr %s173, 4
        %s175 = scalar_lea.vmem %s1, %s174
        %p176 = pneg %p64
        %p177 = pneg %p61
        %p178 = scmp.lt.s32.totalorder %s17, 1
        %s179 = scalar_select %p178, %s17, 1
        %s180 = scalar_lea.vmem %s2, %s179
        %p181 = pneg %p90
        %p182 = pneg %p87
        %p183 = pneg %p116
        %p184 = pneg %p113
        %s185 = sand.u32 %s103, 1
        %s186 = scalar_lea.sflag [#allocation3], %s185
        %s187 = sand.u32 %s103, 1
        %s188 = smul.addr %s187, 8
        %s189 = scalar_lea.vmem [#allocation2], %s188
        %p190 = scmp.lt.s32.totalorder %s17, 1
        %s191 = scalar_select %p190, %s17, 1
        %s192 = smul.addr %s191, 24
        %s193 = smul.addr %s192, 4
        %s194 = scalar_lea.vmem %s0, %s193
        %p195 = scmp.lt.s32.totalorder %s17, 1
        %s196 = scalar_select %p195, %s17, 1
        %s197 = smul.addr %s196, 384
        %s198 = smul.addr %s197, 4
        %s199 = scalar_lea.vmem %s1, %s198
        %p200 = scmp.lt.s32.totalorder %s17, 1
        %s201 = scalar_select %p200, %s17, 1
        %s202 = scalar_lea.vmem %s2, %s201
        %v204 = vld [vmem:[%s194] sm:$0xff]
        %v205 = vld [vmem:[%s194 + $0x8] sm:$0xff]
        %v206 = vld [vmem:[%s194 + $0x10] sm:$0xff]
        %v207 = vld [vmem:[%s194 + $0x18] sm:$0xff]
        %v208 = vld [vmem:[%s194 + $0x20] sm:$0xff]
        %v209 = vld [vmem:[%s194 + $0x28] sm:$0xff]
        %v210 = vld [vmem:[%s194 + $0x30] sm:$0xff]
        %v211 = vld [vmem:[%s194 + $0x38] sm:$0xff]
        %v212 = vld [vmem:[%s194 + $0x40] sm:$0xff]
        %v213 = vld [vmem:[%s194 + $0x48] sm:$0xff]
        %v214 = vld [vmem:[%s194 + $0x50] sm:$0xff]
        %v215 = vld [vmem:[%s194 + $0x58] sm:$0xff]
        %v216 = vld [vmem:[%s199] sm:$0xf]
        %v217 = vld [vmem:[%s199 + $0x4] sm:$0xf]
        %v218 = vld [vmem:[%s199 + $0x8] sm:$0xf]
        %v219 = vld [vmem:[%s199 + $0xc] sm:$0xf]
        %v220 = vld [vmem:[%s199 + $0x10] sm:$0xf]
        %v221 = vld [vmem:[%s199 + $0x14] sm:$0xf]
        %v222 = vld [vmem:[%s199 + $0x18] sm:$0xf]
        %v223 = vld [vmem:[%s199 + $0x1c] sm:$0xf]
        %v224 = vld [vmem:[%s199 + $0x20] sm:$0xf]
        %v225 = vld [vmem:[%s199 + $0x24] sm:$0xf]
        %v226 = vld [vmem:[%s199 + $0x28] sm:$0xf]
        %v227 = vld [vmem:[%s199 + $0x2c] sm:$0xf]
        %v228 = vld [vmem:[%s199 + $0x30] sm:$0xf]
        %v229 = vld [vmem:[%s199 + $0x34] sm:$0xf]
        %v230 = vld [vmem:[%s199 + $0x38] sm:$0xf]
        %v231 = vld [vmem:[%s199 + $0x3c] sm:$0xf]
        %v232 = vld [vmem:[%s199 + $0x40] sm:$0xf]
        %v233 = vld [vmem:[%s199 + $0x44] sm:$0xf]
        %v234 = vld [vmem:[%s199 + $0x48] sm:$0xf]
        %v235 = vld [vmem:[%s199 + $0x4c] sm:$0xf]
        %v236 = vld [vmem:[%s199 + $0x50] sm:$0xf]
        %v237 = vld [vmem:[%s199 + $0x54] sm:$0xf]
        %v238 = vld [vmem:[%s199 + $0x58] sm:$0xf]
        %v239 = vld [vmem:[%s199 + $0x5c] sm:$0xf]
        %v240 = vld [vmem:[%s199 + $0x60] sm:$0xf]
        %v241 = vld [vmem:[%s199 + $0x64] sm:$0xf]
        %v242 = vld [vmem:[%s199 + $0x68] sm:$0xf]
        %v243 = vld [vmem:[%s199 + $0x6c] sm:$0xf]
        %v244 = vld [vmem:[%s199 + $0x70] sm:$0xf]
        %v245 = vld [vmem:[%s199 + $0x74] sm:$0xf]
        %v246 = vld [vmem:[%s199 + $0x78] sm:$0xf]
        %v247 = vld [vmem:[%s199 + $0x7c] sm:$0xf]
        %v248 = vld [vmem:[%s199 + $0x80] sm:$0xf]
        %v249 = vld [vmem:[%s199 + $0x84] sm:$0xf]
        %v250 = vld [vmem:[%s199 + $0x88] sm:$0xf]
        %v251 = vld [vmem:[%s199 + $0x8c] sm:$0xf]
        %v252 = vld [vmem:[%s199 + $0x90] sm:$0xf]
        %v253 = vld [vmem:[%s199 + $0x94] sm:$0xf]
        %v254 = vld [vmem:[%s199 + $0x98] sm:$0xf]
        %v255 = vld [vmem:[%s199 + $0x9c] sm:$0xf]
        %v256 = vld [vmem:[%s199 + $0xa0] sm:$0xf]
        %v257 = vld [vmem:[%s199 + $0xa4] sm:$0xf]
        %v258 = vld [vmem:[%s199 + $0xa8] sm:$0xf]
        %v259 = vld [vmem:[%s199 + $0xac] sm:$0xf]
        %v260 = vld [vmem:[%s199 + $0xb0] sm:$0xf]
        %v261 = vld [vmem:[%s199 + $0xb4] sm:$0xf]
        %v262 = vld [vmem:[%s199 + $0xb8] sm:$0xf]
        %v263 = vld [vmem:[%s199 + $0xbc] sm:$0xf]
        %v264 = vld [vmem:[%s199 + $0xc0] sm:$0xf]
        %v265 = vld [vmem:[%s199 + $0xc4] sm:$0xf]
        %v266 = vld [vmem:[%s199 + $0xc8] sm:$0xf]
        %v267 = vld [vmem:[%s199 + $0xcc] sm:$0xf]
        %v268 = vld [vmem:[%s199 + $0xd0] sm:$0xf]
        %v269 = vld [vmem:[%s199 + $0xd4] sm:$0xf]
        %v270 = vld [vmem:[%s199 + $0xd8] sm:$0xf]
        %v271 = vld [vmem:[%s199 + $0xdc] sm:$0xf]
        %v272 = vld [vmem:[%s199 + $0xe0] sm:$0xf]
        %v273 = vld [vmem:[%s199 + $0xe4] sm:$0xf]
        %v274 = vld [vmem:[%s199 + $0xe8] sm:$0xf]
        %v275 = vld [vmem:[%s199 + $0xec] sm:$0xf]
        %v276 = vld [vmem:[%s199 + $0xf0] sm:$0xf]
        %v277 = vld [vmem:[%s199 + $0xf4] sm:$0xf]
        %v278 = vld [vmem:[%s199 + $0xf8] sm:$0xf]
        %v279 = vld [vmem:[%s199 + $0xfc] sm:$0xf]
        %v280 = vld [vmem:[%s199 + $0x100] sm:$0xf]
        %v281 = vld [vmem:[%s199 + $0x104] sm:$0xf]
        %v282 = vld [vmem:[%s199 + $0x108] sm:$0xf]
        %v283 = vld [vmem:[%s199 + $0x10c] sm:$0xf]
        %v284 = vld [vmem:[%s199 + $0x110] sm:$0xf]
        %v285 = vld [vmem:[%s199 + $0x114] sm:$0xf]
        %v286 = vld [vmem:[%s199 + $0x118] sm:$0xf]
        %v287 = vld [vmem:[%s199 + $0x11c] sm:$0xf]
        %v288 = vld [vmem:[%s199 + $0x120] sm:$0xf]
        %v289 = vld [vmem:[%s199 + $0x124] sm:$0xf]
        %v290 = vld [vmem:[%s199 + $0x128] sm:$0xf]
        %v291 = vld [vmem:[%s199 + $0x12c] sm:$0xf]
        %v292 = vld [vmem:[%s199 + $0x130] sm:$0xf]
        %v293 = vld [vmem:[%s199 + $0x134] sm:$0xf]
        %v294 = vld [vmem:[%s199 + $0x138] sm:$0xf]
        %v295 = vld [vmem:[%s199 + $0x13c] sm:$0xf]
        %v296 = vld [vmem:[%s199 + $0x140] sm:$0xf]
        %v297 = vld [vmem:[%s199 + $0x144] sm:$0xf]
        %v298 = vld [vmem:[%s199 + $0x148] sm:$0xf]
        %v299 = vld [vmem:[%s199 + $0x14c] sm:$0xf]
        %v300 = vld [vmem:[%s199 + $0x150] sm:$0xf]
        %v301 = vld [vmem:[%s199 + $0x154] sm:$0xf]
        %v302 = vld [vmem:[%s199 + $0x158] sm:$0xf]
        %v303 = vld [vmem:[%s199 + $0x15c] sm:$0xf]
        %v304 = vld [vmem:[%s199 + $0x160] sm:$0xf]
        %v305 = vld [vmem:[%s199 + $0x164] sm:$0xf]
        %v306 = vld [vmem:[%s199 + $0x168] sm:$0xf]
        %v307 = vld [vmem:[%s199 + $0x16c] sm:$0xf]
        %v308 = vld [vmem:[%s199 + $0x170] sm:$0xf]
        %v309 = vld [vmem:[%s199 + $0x174] sm:$0xf]
        %v310 = vld [vmem:[%s199 + $0x178] sm:$0xf]
        %v311 = vld [vmem:[%s199 + $0x17c] sm:$0xf]
        %v312 = vld [vmem:[%s199 + $0x180] sm:$0xf]
        %v313 = vld [vmem:[%s199 + $0x184] sm:$0xf]
        %v314 = vld [vmem:[%s199 + $0x188] sm:$0xf]
        %v315 = vld [vmem:[%s199 + $0x18c] sm:$0xf]
        %v316 = vld [vmem:[%s199 + $0x190] sm:$0xf]
        %v317 = vld [vmem:[%s199 + $0x194] sm:$0xf]
        %v318 = vld [vmem:[%s199 + $0x198] sm:$0xf]
        %v319 = vld [vmem:[%s199 + $0x19c] sm:$0xf]
        %v320 = vld [vmem:[%s199 + $0x1a0] sm:$0xf]
        %v321 = vld [vmem:[%s199 + $0x1a4] sm:$0xf]
        %v322 = vld [vmem:[%s199 + $0x1a8] sm:$0xf]
        %v323 = vld [vmem:[%s199 + $0x1ac] sm:$0xf]
        %v324 = vld [vmem:[%s199 + $0x1b0] sm:$0xf]
        %v325 = vld [vmem:[%s199 + $0x1b4] sm:$0xf]
        %v326 = vld [vmem:[%s199 + $0x1b8] sm:$0xf]
        %v327 = vld [vmem:[%s199 + $0x1bc] sm:$0xf]
        %v328 = vld [vmem:[%s199 + $0x1c0] sm:$0xf]
        %v329 = vld [vmem:[%s199 + $0x1c4] sm:$0xf]
        %v330 = vld [vmem:[%s199 + $0x1c8] sm:$0xf]
        %v331 = vld [vmem:[%s199 + $0x1cc] sm:$0xf]
        %v332 = vld [vmem:[%s199 + $0x1d0] sm:$0xf]
        %v333 = vld [vmem:[%s199 + $0x1d4] sm:$0xf]
        %v334 = vld [vmem:[%s199 + $0x1d8] sm:$0xf]
        %v335 = vld [vmem:[%s199 + $0x1dc] sm:$0xf]
        %v336 = vld [vmem:[%s199 + $0x1e0] sm:$0xf]
        %v337 = vld [vmem:[%s199 + $0x1e4] sm:$0xf]
        %v338 = vld [vmem:[%s199 + $0x1e8] sm:$0xf]
        %v339 = vld [vmem:[%s199 + $0x1ec] sm:$0xf]
        %v340 = vld [vmem:[%s199 + $0x1f0] sm:$0xf]
        %v341 = vld [vmem:[%s199 + $0x1f4] sm:$0xf]
        %v342 = vld [vmem:[%s199 + $0x1f8] sm:$0xf]
        %v343 = vld [vmem:[%s199 + $0x1fc] sm:$0xf]
        %v344 = vld [vmem:[%s199 + $0x200] sm:$0xf]
        %v345 = vld [vmem:[%s199 + $0x204] sm:$0xf]
        %v346 = vld [vmem:[%s199 + $0x208] sm:$0xf]
        %v347 = vld [vmem:[%s199 + $0x20c] sm:$0xf]
        %v348 = vld [vmem:[%s199 + $0x210] sm:$0xf]
        %v349 = vld [vmem:[%s199 + $0x214] sm:$0xf]
        %v350 = vld [vmem:[%s199 + $0x218] sm:$0xf]
        %v351 = vld [vmem:[%s199 + $0x21c] sm:$0xf]
        %v352 = vld [vmem:[%s199 + $0x220] sm:$0xf]
        %v353 = vld [vmem:[%s199 + $0x224] sm:$0xf]
        %v354 = vld [vmem:[%s199 + $0x228] sm:$0xf]
        %v355 = vld [vmem:[%s199 + $0x22c] sm:$0xf]
        %v356 = vld [vmem:[%s199 + $0x230] sm:$0xf]
        %v357 = vld [vmem:[%s199 + $0x234] sm:$0xf]
        %v358 = vld [vmem:[%s199 + $0x238] sm:$0xf]
        %v359 = vld [vmem:[%s199 + $0x23c] sm:$0xf]
        %v360 = vld [vmem:[%s199 + $0x240] sm:$0xf]
        %v361 = vld [vmem:[%s199 + $0x244] sm:$0xf]
        %v362 = vld [vmem:[%s199 + $0x248] sm:$0xf]
        %v363 = vld [vmem:[%s199 + $0x24c] sm:$0xf]
        %v364 = vld [vmem:[%s199 + $0x250] sm:$0xf]
        %v365 = vld [vmem:[%s199 + $0x254] sm:$0xf]
        %v366 = vld [vmem:[%s199 + $0x258] sm:$0xf]
        %v367 = vld [vmem:[%s199 + $0x25c] sm:$0xf]
        %v368 = vld [vmem:[%s199 + $0x260] sm:$0xf]
        %v369 = vld [vmem:[%s199 + $0x264] sm:$0xf]
        %v370 = vld [vmem:[%s199 + $0x268] sm:$0xf]
        %v371 = vld [vmem:[%s199 + $0x26c] sm:$0xf]
        %v372 = vld [vmem:[%s199 + $0x270] sm:$0xf]
        %v373 = vld [vmem:[%s199 + $0x274] sm:$0xf]
        %v374 = vld [vmem:[%s199 + $0x278] sm:$0xf]
        %v375 = vld [vmem:[%s199 + $0x27c] sm:$0xf]
        %v376 = vld [vmem:[%s199 + $0x280] sm:$0xf]
        %v377 = vld [vmem:[%s199 + $0x284] sm:$0xf]
        %v378 = vld [vmem:[%s199 + $0x288] sm:$0xf]
        %v379 = vld [vmem:[%s199 + $0x28c] sm:$0xf]
        %v380 = vld [vmem:[%s199 + $0x290] sm:$0xf]
        %v381 = vld [vmem:[%s199 + $0x294] sm:$0xf]
        %v382 = vld [vmem:[%s199 + $0x298] sm:$0xf]
        %v383 = vld [vmem:[%s199 + $0x29c] sm:$0xf]
        %v384 = vld [vmem:[%s199 + $0x2a0] sm:$0xf]
        %v385 = vld [vmem:[%s199 + $0x2a4] sm:$0xf]
        %v386 = vld [vmem:[%s199 + $0x2a8] sm:$0xf]
        %v387 = vld [vmem:[%s199 + $0x2ac] sm:$0xf]
        %v388 = vld [vmem:[%s199 + $0x2b0] sm:$0xf]
        %v389 = vld [vmem:[%s199 + $0x2b4] sm:$0xf]
        %v390 = vld [vmem:[%s199 + $0x2b8] sm:$0xf]
        %v391 = vld [vmem:[%s199 + $0x2bc] sm:$0xf]
        %v392 = vld [vmem:[%s199 + $0x2c0] sm:$0xf]
        %v393 = vld [vmem:[%s199 + $0x2c4] sm:$0xf]
        %v394 = vld [vmem:[%s199 + $0x2c8] sm:$0xf]
        %v395 = vld [vmem:[%s199 + $0x2cc] sm:$0xf]
        %v396 = vld [vmem:[%s199 + $0x2d0] sm:$0xf]
        %v397 = vld [vmem:[%s199 + $0x2d4] sm:$0xf]
        %v398 = vld [vmem:[%s199 + $0x2d8] sm:$0xf]
        %v399 = vld [vmem:[%s199 + $0x2dc] sm:$0xf]
        %v400 = vld [vmem:[%s199 + $0x2e0] sm:$0xf]
        %v401 = vld [vmem:[%s199 + $0x2e4] sm:$0xf]
        %v402 = vld [vmem:[%s199 + $0x2e8] sm:$0xf]
        %v403 = vld [vmem:[%s199 + $0x2ec] sm:$0xf]
        %v404 = vld [vmem:[%s199 + $0x2f0] sm:$0xf]
        %v405 = vld [vmem:[%s199 + $0x2f4] sm:$0xf]
        %v406 = vld [vmem:[%s199 + $0x2f8] sm:$0xf]
        %v407 = vld [vmem:[%s199 + $0x2fc] sm:$0xf]
        %v408 = vld [vmem:[%s199 + $0x300] sm:$0xf]
        %v409 = vld [vmem:[%s199 + $0x304] sm:$0xf]
        %v410 = vld [vmem:[%s199 + $0x308] sm:$0xf]
        %v411 = vld [vmem:[%s199 + $0x30c] sm:$0xf]
        %v412 = vld [vmem:[%s199 + $0x310] sm:$0xf]
        %v413 = vld [vmem:[%s199 + $0x314] sm:$0xf]
        %v414 = vld [vmem:[%s199 + $0x318] sm:$0xf]
        %v415 = vld [vmem:[%s199 + $0x31c] sm:$0xf]
        %v416 = vld [vmem:[%s199 + $0x320] sm:$0xf]
        %v417 = vld [vmem:[%s199 + $0x324] sm:$0xf]
        %v418 = vld [vmem:[%s199 + $0x328] sm:$0xf]
        %v419 = vld [vmem:[%s199 + $0x32c] sm:$0xf]
        %v420 = vld [vmem:[%s199 + $0x330] sm:$0xf]
        %v421 = vld [vmem:[%s199 + $0x334] sm:$0xf]
        %v422 = vld [vmem:[%s199 + $0x338] sm:$0xf]
        %v423 = vld [vmem:[%s199 + $0x33c] sm:$0xf]
        %v424 = vld [vmem:[%s199 + $0x340] sm:$0xf]
        %v425 = vld [vmem:[%s199 + $0x344] sm:$0xf]
        %v426 = vld [vmem:[%s199 + $0x348] sm:$0xf]
        %v427 = vld [vmem:[%s199 + $0x34c] sm:$0xf]
        %v428 = vld [vmem:[%s199 + $0x350] sm:$0xf]
        %v429 = vld [vmem:[%s199 + $0x354] sm:$0xf]
        %v430 = vld [vmem:[%s199 + $0x358] sm:$0xf]
        %v431 = vld [vmem:[%s199 + $0x35c] sm:$0xf]
        %v432 = vld [vmem:[%s199 + $0x360] sm:$0xf]
        %v433 = vld [vmem:[%s199 + $0x364] sm:$0xf]
        %v434 = vld [vmem:[%s199 + $0x368] sm:$0xf]
        %v435 = vld [vmem:[%s199 + $0x36c] sm:$0xf]
        %v436 = vld [vmem:[%s199 + $0x370] sm:$0xf]
        %v437 = vld [vmem:[%s199 + $0x374] sm:$0xf]
        %v438 = vld [vmem:[%s199 + $0x378] sm:$0xf]
        %v439 = vld [vmem:[%s199 + $0x37c] sm:$0xf]
        %v440 = vld [vmem:[%s199 + $0x380] sm:$0xf]
        %v441 = vld [vmem:[%s199 + $0x384] sm:$0xf]
        %v442 = vld [vmem:[%s199 + $0x388] sm:$0xf]
        %v443 = vld [vmem:[%s199 + $0x38c] sm:$0xf]
        %v444 = vld [vmem:[%s199 + $0x390] sm:$0xf]
        %v445 = vld [vmem:[%s199 + $0x394] sm:$0xf]
        %v446 = vld [vmem:[%s199 + $0x398] sm:$0xf]
        %v447 = vld [vmem:[%s199 + $0x39c] sm:$0xf]
        %v448 = vld [vmem:[%s199 + $0x3a0] sm:$0xf]
        %v449 = vld [vmem:[%s199 + $0x3a4] sm:$0xf]
        %v450 = vld [vmem:[%s199 + $0x3a8] sm:$0xf]
        %v451 = vld [vmem:[%s199 + $0x3ac] sm:$0xf]
        %v452 = vld [vmem:[%s199 + $0x3b0] sm:$0xf]
        %v453 = vld [vmem:[%s199 + $0x3b4] sm:$0xf]
        %v454 = vld [vmem:[%s199 + $0x3b8] sm:$0xf]
        %v455 = vld [vmem:[%s199 + $0x3bc] sm:$0xf]
        %v456 = vld [vmem:[%s199 + $0x3c0] sm:$0xf]
        %v457 = vld [vmem:[%s199 + $0x3c4] sm:$0xf]
        %v458 = vld [vmem:[%s199 + $0x3c8] sm:$0xf]
        %v459 = vld [vmem:[%s199 + $0x3cc] sm:$0xf]
        %v460 = vld [vmem:[%s199 + $0x3d0] sm:$0xf]
        %v461 = vld [vmem:[%s199 + $0x3d4] sm:$0xf]
        %v462 = vld [vmem:[%s199 + $0x3d8] sm:$0xf]
        %v463 = vld [vmem:[%s199 + $0x3dc] sm:$0xf]
        %v464 = vld [vmem:[%s199 + $0x3e0] sm:$0xf]
        %v465 = vld [vmem:[%s199 + $0x3e4] sm:$0xf]
        %v466 = vld [vmem:[%s199 + $0x3e8] sm:$0xf]
        %v467 = vld [vmem:[%s199 + $0x3ec] sm:$0xf]
        %v468 = vld [vmem:[%s199 + $0x3f0] sm:$0xf]
        %v469 = vld [vmem:[%s199 + $0x3f4] sm:$0xf]
        %v470 = vld [vmem:[%s199 + $0x3f8] sm:$0xf]
        %v471 = vld [vmem:[%s199 + $0x3fc] sm:$0xf]
        %v472 = vld [vmem:[%s199 + $0x400] sm:$0xf]
        %v473 = vld [vmem:[%s199 + $0x404] sm:$0xf]
        %v474 = vld [vmem:[%s199 + $0x408] sm:$0xf]
        %v475 = vld [vmem:[%s199 + $0x40c] sm:$0xf]
        %v476 = vld [vmem:[%s199 + $0x410] sm:$0xf]
        %v477 = vld [vmem:[%s199 + $0x414] sm:$0xf]
        %v478 = vld [vmem:[%s199 + $0x418] sm:$0xf]
        %v479 = vld [vmem:[%s199 + $0x41c] sm:$0xf]
        %v480 = vld [vmem:[%s199 + $0x420] sm:$0xf]
        %v481 = vld [vmem:[%s199 + $0x424] sm:$0xf]
        %v482 = vld [vmem:[%s199 + $0x428] sm:$0xf]
        %v483 = vld [vmem:[%s199 + $0x42c] sm:$0xf]
        %v484 = vld [vmem:[%s199 + $0x430] sm:$0xf]
        %v485 = vld [vmem:[%s199 + $0x434] sm:$0xf]
        %v486 = vld [vmem:[%s199 + $0x438] sm:$0xf]
        %v487 = vld [vmem:[%s199 + $0x43c] sm:$0xf]
        %v488 = vld [vmem:[%s199 + $0x440] sm:$0xf]
        %v489 = vld [vmem:[%s199 + $0x444] sm:$0xf]
        %v490 = vld [vmem:[%s199 + $0x448] sm:$0xf]
        %v491 = vld [vmem:[%s199 + $0x44c] sm:$0xf]
        %v492 = vld [vmem:[%s199 + $0x450] sm:$0xf]
        %v493 = vld [vmem:[%s199 + $0x454] sm:$0xf]
        %v494 = vld [vmem:[%s199 + $0x458] sm:$0xf]
        %v495 = vld [vmem:[%s199 + $0x45c] sm:$0xf]
        %v496 = vld [vmem:[%s199 + $0x460] sm:$0xf]
        %v497 = vld [vmem:[%s199 + $0x464] sm:$0xf]
        %v498 = vld [vmem:[%s199 + $0x468] sm:$0xf]
        %v499 = vld [vmem:[%s199 + $0x46c] sm:$0xf]
        %v500 = vld [vmem:[%s199 + $0x470] sm:$0xf]
        %v501 = vld [vmem:[%s199 + $0x474] sm:$0xf]
        %v502 = vld [vmem:[%s199 + $0x478] sm:$0xf]
        %v503 = vld [vmem:[%s199 + $0x47c] sm:$0xf]
        %v504 = vld [vmem:[%s199 + $0x480] sm:$0xf]
        %v505 = vld [vmem:[%s199 + $0x484] sm:$0xf]
        %v506 = vld [vmem:[%s199 + $0x488] sm:$0xf]
        %v507 = vld [vmem:[%s199 + $0x48c] sm:$0xf]
        %v508 = vld [vmem:[%s199 + $0x490] sm:$0xf]
        %v509 = vld [vmem:[%s199 + $0x494] sm:$0xf]
        %v510 = vld [vmem:[%s199 + $0x498] sm:$0xf]
        %v511 = vld [vmem:[%s199 + $0x49c] sm:$0xf]
        %v512 = vld [vmem:[%s199 + $0x4a0] sm:$0xf]
        %v513 = vld [vmem:[%s199 + $0x4a4] sm:$0xf]
        %v514 = vld [vmem:[%s199 + $0x4a8] sm:$0xf]
        %v515 = vld [vmem:[%s199 + $0x4ac] sm:$0xf]
        %v516 = vld [vmem:[%s199 + $0x4b0] sm:$0xf]
        %v517 = vld [vmem:[%s199 + $0x4b4] sm:$0xf]
        %v518 = vld [vmem:[%s199 + $0x4b8] sm:$0xf]
        %v519 = vld [vmem:[%s199 + $0x4bc] sm:$0xf]
        %v520 = vld [vmem:[%s199 + $0x4c0] sm:$0xf]
        %v521 = vld [vmem:[%s199 + $0x4c4] sm:$0xf]
        %v522 = vld [vmem:[%s199 + $0x4c8] sm:$0xf]
        %v523 = vld [vmem:[%s199 + $0x4cc] sm:$0xf]
        %v524 = vld [vmem:[%s199 + $0x4d0] sm:$0xf]
        %v525 = vld [vmem:[%s199 + $0x4d4] sm:$0xf]
        %v526 = vld [vmem:[%s199 + $0x4d8] sm:$0xf]
        %v527 = vld [vmem:[%s199 + $0x4dc] sm:$0xf]
        %v528 = vld [vmem:[%s199 + $0x4e0] sm:$0xf]
        %v529 = vld [vmem:[%s199 + $0x4e4] sm:$0xf]
        %v530 = vld [vmem:[%s199 + $0x4e8] sm:$0xf]
        %v531 = vld [vmem:[%s199 + $0x4ec] sm:$0xf]
        %v532 = vld [vmem:[%s199 + $0x4f0] sm:$0xf]
        %v533 = vld [vmem:[%s199 + $0x4f4] sm:$0xf]
        %v534 = vld [vmem:[%s199 + $0x4f8] sm:$0xf]
        %v535 = vld [vmem:[%s199 + $0x4fc] sm:$0xf]
        %v536 = vld [vmem:[%s199 + $0x500] sm:$0xf]
        %v537 = vld [vmem:[%s199 + $0x504] sm:$0xf]
        %v538 = vld [vmem:[%s199 + $0x508] sm:$0xf]
        %v539 = vld [vmem:[%s199 + $0x50c] sm:$0xf]
        %v540 = vld [vmem:[%s199 + $0x510] sm:$0xf]
        %v541 = vld [vmem:[%s199 + $0x514] sm:$0xf]
        %v542 = vld [vmem:[%s199 + $0x518] sm:$0xf]
        %v543 = vld [vmem:[%s199 + $0x51c] sm:$0xf]
        %v544 = vld [vmem:[%s199 + $0x520] sm:$0xf]
        %v545 = vld [vmem:[%s199 + $0x524] sm:$0xf]
        %v546 = vld [vmem:[%s199 + $0x528] sm:$0xf]
        %v547 = vld [vmem:[%s199 + $0x52c] sm:$0xf]
        %v548 = vld [vmem:[%s199 + $0x530] sm:$0xf]
        %v549 = vld [vmem:[%s199 + $0x534] sm:$0xf]
        %v550 = vld [vmem:[%s199 + $0x538] sm:$0xf]
        %v551 = vld [vmem:[%s199 + $0x53c] sm:$0xf]
        %v552 = vld [vmem:[%s199 + $0x540] sm:$0xf]
        %v553 = vld [vmem:[%s199 + $0x544] sm:$0xf]
        %v554 = vld [vmem:[%s199 + $0x548] sm:$0xf]
        %v555 = vld [vmem:[%s199 + $0x54c] sm:$0xf]
        %v556 = vld [vmem:[%s199 + $0x550] sm:$0xf]
        %v557 = vld [vmem:[%s199 + $0x554] sm:$0xf]
        %v558 = vld [vmem:[%s199 + $0x558] sm:$0xf]
        %v559 = vld [vmem:[%s199 + $0x55c] sm:$0xf]
        %v560 = vld [vmem:[%s199 + $0x560] sm:$0xf]
        %v561 = vld [vmem:[%s199 + $0x564] sm:$0xf]
        %v562 = vld [vmem:[%s199 + $0x568] sm:$0xf]
        %v563 = vld [vmem:[%s199 + $0x56c] sm:$0xf]
        %v564 = vld [vmem:[%s199 + $0x570] sm:$0xf]
        %v565 = vld [vmem:[%s199 + $0x574] sm:$0xf]
        %v566 = vld [vmem:[%s199 + $0x578] sm:$0xf]
        %v567 = vld [vmem:[%s199 + $0x57c] sm:$0xf]
        %v568 = vld [vmem:[%s199 + $0x580] sm:$0xf]
        %v569 = vld [vmem:[%s199 + $0x584] sm:$0xf]
        %v570 = vld [vmem:[%s199 + $0x588] sm:$0xf]
        %v571 = vld [vmem:[%s199 + $0x58c] sm:$0xf]
        %v572 = vld [vmem:[%s199 + $0x590] sm:$0xf]
        %v573 = vld [vmem:[%s199 + $0x594] sm:$0xf]
        %v574 = vld [vmem:[%s199 + $0x598] sm:$0xf]
        %v575 = vld [vmem:[%s199 + $0x59c] sm:$0xf]
        %v576 = vld [vmem:[%s199 + $0x5a0] sm:$0xf]
        %v577 = vld [vmem:[%s199 + $0x5a4] sm:$0xf]
        %v578 = vld [vmem:[%s199 + $0x5a8] sm:$0xf]
        %v579 = vld [vmem:[%s199 + $0x5ac] sm:$0xf]
        %v580 = vld [vmem:[%s199 + $0x5b0] sm:$0xf]
        %v581 = vld [vmem:[%s199 + $0x5b4] sm:$0xf]
        %v582 = vld [vmem:[%s199 + $0x5b8] sm:$0xf]
        %v583 = vld [vmem:[%s199 + $0x5bc] sm:$0xf]
        %v584 = vld [vmem:[%s199 + $0x5c0] sm:$0xf]
        %v585 = vld [vmem:[%s199 + $0x5c4] sm:$0xf]
        %v586 = vld [vmem:[%s199 + $0x5c8] sm:$0xf]
        %v587 = vld [vmem:[%s199 + $0x5cc] sm:$0xf]
        %v588 = vld [vmem:[%s199 + $0x5d0] sm:$0xf]
        %v589 = vld [vmem:[%s199 + $0x5d4] sm:$0xf]
        %v590 = vld [vmem:[%s199 + $0x5d8] sm:$0xf]
        %v591 = vld [vmem:[%s199 + $0x5dc] sm:$0xf]
        %v592 = vld [vmem:[%s199 + $0x5e0] sm:$0xf]
        %v593 = vld [vmem:[%s199 + $0x5e4] sm:$0xf]
        %v594 = vld [vmem:[%s199 + $0x5e8] sm:$0xf]
        %v595 = vld [vmem:[%s199 + $0x5ec] sm:$0xf]
        %v596 = vld [vmem:[%s199 + $0x5f0] sm:$0xf]
        %v597 = vld [vmem:[%s199 + $0x5f4] sm:$0xf]
        %v598 = vld [vmem:[%s199 + $0x5f8] sm:$0xf]
        %v599 = vld [vmem:[%s199 + $0x5fc] sm:$0xf]
        %v600 = vld [vmem:[%s202] sm:$0x1]
        %v602 = vlaneseq
        %v603 = vshrl.u32 %v602, 7
        %v604 = vsub.s32 0, %v603
        %v605 = vrot.slane %v600, %v604
        %v619 = vunpack.c.l.b16 %v204
        %v620 = vunpack.c.h.b16 %v204
        %v621 = vunpack.c.l.b16 %v205
        %v622 = vunpack.c.h.b16 %v205
        %v623 = vunpack.c.l.b16 %v206
        %v624 = vunpack.c.h.b16 %v206
        %v625 = vunpack.c.l.b16 %v207
        %v626 = vunpack.c.h.b16 %v207
        %v627 = vunpack.c.l.b16 %v208
        %v628 = vunpack.c.h.b16 %v208
        %v629 = vunpack.c.l.b16 %v209
        %v630 = vunpack.c.h.b16 %v209
        %v631 = vunpack.c.l.b16 %v210
        %v632 = vunpack.c.h.b16 %v210
        %v633 = vunpack.c.l.b16 %v211
        %v634 = vunpack.c.h.b16 %v211
        %v635 = vunpack.c.l.b16 %v212
        %v636 = vunpack.c.h.b16 %v212
        %v637 = vunpack.c.l.b16 %v213
        %v638 = vunpack.c.h.b16 %v213
        %v639 = vunpack.c.l.b16 %v214
        %v640 = vunpack.c.h.b16 %v214
        %v641 = vunpack.c.l.b16 %v215
        %v642 = vunpack.c.h.b16 %v215
        %v643 = vpack.c.b16 %v619, %v619
        %v644 = vpack.c.b16 %v620, %v620
        %v645 = vpack.c.b16 %v621, %v621
        %v646 = vpack.c.b16 %v622, %v622
        %v647 = vpack.c.b16 %v623, %v623
        %v648 = vpack.c.b16 %v624, %v624
        %v649 = vpack.c.b16 %v625, %v625
        %v650 = vpack.c.b16 %v626, %v626
        %v651 = vpack.c.b16 %v627, %v627
        %v652 = vpack.c.b16 %v628, %v628
        %v653 = vpack.c.b16 %v629, %v629
        %v654 = vpack.c.b16 %v630, %v630
        %v655 = vpack.c.b16 %v631, %v631
        %v656 = vpack.c.b16 %v632, %v632
        %v657 = vpack.c.b16 %v633, %v633
        %v658 = vpack.c.b16 %v634, %v634
        %v659 = vpack.c.b16 %v635, %v635
        %v660 = vpack.c.b16 %v636, %v636
        %v661 = vpack.c.b16 %v637, %v637
        %v662 = vpack.c.b16 %v638, %v638
        %v663 = vpack.c.b16 %v639, %v639
        %v664 = vpack.c.b16 %v640, %v640
        %v665 = vpack.c.b16 %v641, %v641
        %v666 = vpack.c.b16 %v642, %v642
        %v1075 = vunpack.c.l.b16 %v216
        %v1076 = vunpack.c.l.b16 %v217
        %v1077 = vunpack.c.l.b16 %v218
        %v1078 = vunpack.c.l.b16 %v219
        %v1079 = vunpack.c.l.b16 %v220
        %v1080 = vunpack.c.l.b16 %v221
        %v1081 = vunpack.c.l.b16 %v222
        %v1082 = vunpack.c.l.b16 %v223
        %v1083 = vunpack.c.l.b16 %v224
        %v1084 = vunpack.c.l.b16 %v225
        %v1085 = vunpack.c.l.b16 %v226
        %v1086 = vunpack.c.l.b16 %v227
        %v1087 = vunpack.c.l.b16 %v228
        %v1088 = vunpack.c.l.b16 %v229
        %v1089 = vunpack.c.l.b16 %v230
        %v1090 = vunpack.c.l.b16 %v231
        %v1091 = vunpack.c.l.b16 %v232
        %v1092 = vunpack.c.l.b16 %v233
        %v1093 = vunpack.c.l.b16 %v234
        %v1094 = vunpack.c.l.b16 %v235
        %v1095 = vunpack.c.l.b16 %v236
        %v1096 = vunpack.c.l.b16 %v237
        %v1097 = vunpack.c.l.b16 %v238
        %v1098 = vunpack.c.l.b16 %v239
        %v1099 = vunpack.c.l.b16 %v240
        %v1100 = vunpack.c.l.b16 %v241
        %v1101 = vunpack.c.l.b16 %v242
        %v1102 = vunpack.c.l.b16 %v243
        %v1103 = vunpack.c.l.b16 %v244
        %v1104 = vunpack.c.l.b16 %v245
        %v1105 = vunpack.c.l.b16 %v246
        %v1106 = vunpack.c.l.b16 %v247
        %v1107 = vunpack.c.l.b16 %v248
        %v1108 = vunpack.c.l.b16 %v249
        %v1109 = vunpack.c.l.b16 %v250
        %v1110 = vunpack.c.l.b16 %v251
        %v1111 = vunpack.c.l.b16 %v252
        %v1112 = vunpack.c.l.b16 %v253
        %v1113 = vunpack.c.l.b16 %v254
        %v1114 = vunpack.c.l.b16 %v255
        %v1115 = vunpack.c.l.b16 %v256
        %v1116 = vunpack.c.l.b16 %v257
        %v1117 = vunpack.c.l.b16 %v258
        %v1118 = vunpack.c.l.b16 %v259
        %v1119 = vunpack.c.l.b16 %v260
        %v1120 = vunpack.c.l.b16 %v261
        %v1121 = vunpack.c.l.b16 %v262
        %v1122 = vunpack.c.l.b16 %v263
        %v1123 = vunpack.c.l.b16 %v264
        %v1124 = vunpack.c.l.b16 %v265
        %v1125 = vunpack.c.l.b16 %v266
        %v1126 = vunpack.c.l.b16 %v267
        %v1127 = vunpack.c.l.b16 %v268
        %v1128 = vunpack.c.l.b16 %v269
        %v1129 = vunpack.c.l.b16 %v270
        %v1130 = vunpack.c.l.b16 %v271
        %v1131 = vunpack.c.l.b16 %v272
        %v1132 = vunpack.c.l.b16 %v273
        %v1133 = vunpack.c.l.b16 %v274
        %v1134 = vunpack.c.l.b16 %v275
        %v1135 = vunpack.c.l.b16 %v276
        %v1136 = vunpack.c.l.b16 %v277
        %v1137 = vunpack.c.l.b16 %v278
        %v1138 = vunpack.c.l.b16 %v279
        %v1139 = vunpack.c.l.b16 %v280
        %v1140 = vunpack.c.l.b16 %v281
        %v1141 = vunpack.c.l.b16 %v282
        %v1142 = vunpack.c.l.b16 %v283
        %v1143 = vunpack.c.l.b16 %v284
        %v1144 = vunpack.c.l.b16 %v285
        %v1145 = vunpack.c.l.b16 %v286
        %v1146 = vunpack.c.l.b16 %v287
        %v1147 = vunpack.c.l.b16 %v288
        %v1148 = vunpack.c.l.b16 %v289
        %v1149 = vunpack.c.l.b16 %v290
        %v1150 = vunpack.c.l.b16 %v291
        %v1151 = vunpack.c.l.b16 %v292
        %v1152 = vunpack.c.l.b16 %v293
        %v1153 = vunpack.c.l.b16 %v294
        %v1154 = vunpack.c.l.b16 %v295
        %v1155 = vunpack.c.l.b16 %v296
        %v1156 = vunpack.c.l.b16 %v297
        %v1157 = vunpack.c.l.b16 %v298
        %v1158 = vunpack.c.l.b16 %v299
        %v1159 = vunpack.c.l.b16 %v300
        %v1160 = vunpack.c.l.b16 %v301
        %v1161 = vunpack.c.l.b16 %v302
        %v1162 = vunpack.c.l.b16 %v303
        %v1163 = vunpack.c.l.b16 %v304
        %v1164 = vunpack.c.l.b16 %v305
        %v1165 = vunpack.c.l.b16 %v306
        %v1166 = vunpack.c.l.b16 %v307
        %v1167 = vunpack.c.l.b16 %v308
        %v1168 = vunpack.c.l.b16 %v309
        %v1169 = vunpack.c.l.b16 %v310
        %v1170 = vunpack.c.l.b16 %v311
        %v1171 = vunpack.c.l.b16 %v312
        %v1172 = vunpack.c.l.b16 %v313
        %v1173 = vunpack.c.l.b16 %v314
        %v1174 = vunpack.c.l.b16 %v315
        %v1175 = vunpack.c.l.b16 %v316
        %v1176 = vunpack.c.l.b16 %v317
        %v1177 = vunpack.c.l.b16 %v318
        %v1178 = vunpack.c.l.b16 %v319
        %v1179 = vunpack.c.l.b16 %v320
        %v1180 = vunpack.c.l.b16 %v321
        %v1181 = vunpack.c.l.b16 %v322
        %v1182 = vunpack.c.l.b16 %v323
        %v1183 = vunpack.c.l.b16 %v324
        %v1184 = vunpack.c.l.b16 %v325
        %v1185 = vunpack.c.l.b16 %v326
        %v1186 = vunpack.c.l.b16 %v327
        %v1187 = vunpack.c.l.b16 %v328
        %v1188 = vunpack.c.l.b16 %v329
        %v1189 = vunpack.c.l.b16 %v330
        %v1190 = vunpack.c.l.b16 %v331
        %v1191 = vunpack.c.l.b16 %v332
        %v1192 = vunpack.c.l.b16 %v333
        %v1193 = vunpack.c.l.b16 %v334
        %v1194 = vunpack.c.l.b16 %v335
        %v1195 = vunpack.c.l.b16 %v336
        %v1196 = vunpack.c.l.b16 %v337
        %v1197 = vunpack.c.l.b16 %v338
        %v1198 = vunpack.c.l.b16 %v339
        %v1199 = vunpack.c.l.b16 %v340
        %v1200 = vunpack.c.l.b16 %v341
        %v1201 = vunpack.c.l.b16 %v342
        %v1202 = vunpack.c.l.b16 %v343
        %v1203 = vunpack.c.l.b16 %v344
        %v1204 = vunpack.c.l.b16 %v345
        %v1205 = vunpack.c.l.b16 %v346
        %v1206 = vunpack.c.l.b16 %v347
        %v1207 = vunpack.c.l.b16 %v348
        %v1208 = vunpack.c.l.b16 %v349
        %v1209 = vunpack.c.l.b16 %v350
        %v1210 = vunpack.c.l.b16 %v351
        %v1211 = vunpack.c.l.b16 %v352
        %v1212 = vunpack.c.l.b16 %v353
        %v1213 = vunpack.c.l.b16 %v354
        %v1214 = vunpack.c.l.b16 %v355
        %v1215 = vunpack.c.l.b16 %v356
        %v1216 = vunpack.c.l.b16 %v357
        %v1217 = vunpack.c.l.b16 %v358
        %v1218 = vunpack.c.l.b16 %v359
        %v1219 = vunpack.c.l.b16 %v360
        %v1220 = vunpack.c.l.b16 %v361
        %v1221 = vunpack.c.l.b16 %v362
        %v1222 = vunpack.c.l.b16 %v363
        %v1223 = vunpack.c.l.b16 %v364
        %v1224 = vunpack.c.l.b16 %v365
        %v1225 = vunpack.c.l.b16 %v366
        %v1226 = vunpack.c.l.b16 %v367
        %v1227 = vunpack.c.l.b16 %v368
        %v1228 = vunpack.c.l.b16 %v369
        %v1229 = vunpack.c.l.b16 %v370
        %v1230 = vunpack.c.l.b16 %v371
        %v1231 = vunpack.c.l.b16 %v372
        %v1232 = vunpack.c.l.b16 %v373
        %v1233 = vunpack.c.l.b16 %v374
        %v1234 = vunpack.c.l.b16 %v375
        %v1235 = vunpack.c.l.b16 %v376
        %v1236 = vunpack.c.l.b16 %v377
        %v1237 = vunpack.c.l.b16 %v378
        %v1238 = vunpack.c.l.b16 %v379
        %v1239 = vunpack.c.l.b16 %v380
        %v1240 = vunpack.c.l.b16 %v381
        %v1241 = vunpack.c.l.b16 %v382
        %v1242 = vunpack.c.l.b16 %v383
        %v1243 = vunpack.c.l.b16 %v384
        %v1244 = vunpack.c.l.b16 %v385
        %v1245 = vunpack.c.l.b16 %v386
        %v1246 = vunpack.c.l.b16 %v387
        %v1247 = vunpack.c.l.b16 %v388
        %v1248 = vunpack.c.l.b16 %v389
        %v1249 = vunpack.c.l.b16 %v390
        %v1250 = vunpack.c.l.b16 %v391
        %v1251 = vunpack.c.l.b16 %v392
        %v1252 = vunpack.c.l.b16 %v393
        %v1253 = vunpack.c.l.b16 %v394
        %v1254 = vunpack.c.l.b16 %v395
        %v1255 = vunpack.c.l.b16 %v396
        %v1256 = vunpack.c.l.b16 %v397
        %v1257 = vunpack.c.l.b16 %v398
        %v1258 = vunpack.c.l.b16 %v399
        %v1259 = vunpack.c.l.b16 %v400
        %v1260 = vunpack.c.l.b16 %v401
        %v1261 = vunpack.c.l.b16 %v402
        %v1262 = vunpack.c.l.b16 %v403
        %v1263 = vunpack.c.l.b16 %v404
        %v1264 = vunpack.c.l.b16 %v405
        %v1265 = vunpack.c.l.b16 %v406
        %v1266 = vunpack.c.l.b16 %v407
        %v1267 = vunpack.c.l.b16 %v408
        %v1268 = vunpack.c.l.b16 %v409
        %v1269 = vunpack.c.l.b16 %v410
        %v1270 = vunpack.c.l.b16 %v411
        %v1271 = vunpack.c.l.b16 %v412
        %v1272 = vunpack.c.l.b16 %v413
        %v1273 = vunpack.c.l.b16 %v414
        %v1274 = vunpack.c.l.b16 %v415
        %v1275 = vunpack.c.l.b16 %v416
        %v1276 = vunpack.c.l.b16 %v417
        %v1277 = vunpack.c.l.b16 %v418
        %v1278 = vunpack.c.l.b16 %v419
        %v1279 = vunpack.c.l.b16 %v420
        %v1280 = vunpack.c.l.b16 %v421
        %v1281 = vunpack.c.l.b16 %v422
        %v1282 = vunpack.c.l.b16 %v423
        %v1283 = vunpack.c.l.b16 %v424
        %v1284 = vunpack.c.l.b16 %v425
        %v1285 = vunpack.c.l.b16 %v426
        %v1286 = vunpack.c.l.b16 %v427
        %v1287 = vunpack.c.l.b16 %v428
        %v1288 = vunpack.c.l.b16 %v429
        %v1289 = vunpack.c.l.b16 %v430
        %v1290 = vunpack.c.l.b16 %v431
        %v1291 = vunpack.c.l.b16 %v432
        %v1292 = vunpack.c.l.b16 %v433
        %v1293 = vunpack.c.l.b16 %v434
        %v1294 = vunpack.c.l.b16 %v435
        %v1295 = vunpack.c.l.b16 %v436
        %v1296 = vunpack.c.l.b16 %v437
        %v1297 = vunpack.c.l.b16 %v438
        %v1298 = vunpack.c.l.b16 %v439
        %v1299 = vunpack.c.l.b16 %v440
        %v1300 = vunpack.c.l.b16 %v441
        %v1301 = vunpack.c.l.b16 %v442
        %v1302 = vunpack.c.l.b16 %v443
        %v1303 = vunpack.c.l.b16 %v444
        %v1304 = vunpack.c.l.b16 %v445
        %v1305 = vunpack.c.l.b16 %v446
        %v1306 = vunpack.c.l.b16 %v447
        %v1307 = vunpack.c.l.b16 %v448
        %v1308 = vunpack.c.l.b16 %v449
        %v1309 = vunpack.c.l.b16 %v450
        %v1310 = vunpack.c.l.b16 %v451
        %v1311 = vunpack.c.l.b16 %v452
        %v1312 = vunpack.c.l.b16 %v453
        %v1313 = vunpack.c.l.b16 %v454
        %v1314 = vunpack.c.l.b16 %v455
        %v1315 = vunpack.c.l.b16 %v456
        %v1316 = vunpack.c.l.b16 %v457
        %v1317 = vunpack.c.l.b16 %v458
        %v1318 = vunpack.c.l.b16 %v459
        %v1319 = vunpack.c.l.b16 %v460
        %v1320 = vunpack.c.l.b16 %v461
        %v1321 = vunpack.c.l.b16 %v462
        %v1322 = vunpack.c.l.b16 %v463
        %v1323 = vunpack.c.l.b16 %v464
        %v1324 = vunpack.c.l.b16 %v465
        %v1325 = vunpack.c.l.b16 %v466
        %v1326 = vunpack.c.l.b16 %v467
        %v1327 = vunpack.c.l.b16 %v468
        %v1328 = vunpack.c.l.b16 %v469
        %v1329 = vunpack.c.l.b16 %v470
        %v1330 = vunpack.c.l.b16 %v471
        %v1331 = vunpack.c.l.b16 %v472
        %v1332 = vunpack.c.l.b16 %v473
        %v1333 = vunpack.c.l.b16 %v474
        %v1334 = vunpack.c.l.b16 %v475
        %v1335 = vunpack.c.l.b16 %v476
        %v1336 = vunpack.c.l.b16 %v477
        %v1337 = vunpack.c.l.b16 %v478
        %v1338 = vunpack.c.l.b16 %v479
        %v1339 = vunpack.c.l.b16 %v480
        %v1340 = vunpack.c.l.b16 %v481
        %v1341 = vunpack.c.l.b16 %v482
        %v1342 = vunpack.c.l.b16 %v483
        %v1343 = vunpack.c.l.b16 %v484
        %v1344 = vunpack.c.l.b16 %v485
        %v1345 = vunpack.c.l.b16 %v486
        %v1346 = vunpack.c.l.b16 %v487
        %v1347 = vunpack.c.l.b16 %v488
        %v1348 = vunpack.c.l.b16 %v489
        %v1349 = vunpack.c.l.b16 %v490
        %v1350 = vunpack.c.l.b16 %v491
        %v1351 = vunpack.c.l.b16 %v492
        %v1352 = vunpack.c.l.b16 %v493
        %v1353 = vunpack.c.l.b16 %v494
        %v1354 = vunpack.c.l.b16 %v495
        %v1355 = vunpack.c.l.b16 %v496
        %v1356 = vunpack.c.l.b16 %v497
        %v1357 = vunpack.c.l.b16 %v498
        %v1358 = vunpack.c.l.b16 %v499
        %v1359 = vunpack.c.l.b16 %v500
        %v1360 = vunpack.c.l.b16 %v501
        %v1361 = vunpack.c.l.b16 %v502
        %v1362 = vunpack.c.l.b16 %v503
        %v1363 = vunpack.c.l.b16 %v504
        %v1364 = vunpack.c.l.b16 %v505
        %v1365 = vunpack.c.l.b16 %v506
        %v1366 = vunpack.c.l.b16 %v507
        %v1367 = vunpack.c.l.b16 %v508
        %v1368 = vunpack.c.l.b16 %v509
        %v1369 = vunpack.c.l.b16 %v510
        %v1370 = vunpack.c.l.b16 %v511
        %v1371 = vunpack.c.l.b16 %v512
        %v1372 = vunpack.c.l.b16 %v513
        %v1373 = vunpack.c.l.b16 %v514
        %v1374 = vunpack.c.l.b16 %v515
        %v1375 = vunpack.c.l.b16 %v516
        %v1376 = vunpack.c.l.b16 %v517
        %v1377 = vunpack.c.l.b16 %v518
        %v1378 = vunpack.c.l.b16 %v519
        %v1379 = vunpack.c.l.b16 %v520
        %v1380 = vunpack.c.l.b16 %v521
        %v1381 = vunpack.c.l.b16 %v522
        %v1382 = vunpack.c.l.b16 %v523
        %v1383 = vunpack.c.l.b16 %v524
        %v1384 = vunpack.c.l.b16 %v525
        %v1385 = vunpack.c.l.b16 %v526
        %v1386 = vunpack.c.l.b16 %v527
        %v1387 = vunpack.c.l.b16 %v528
        %v1388 = vunpack.c.l.b16 %v529
        %v1389 = vunpack.c.l.b16 %v530
        %v1390 = vunpack.c.l.b16 %v531
        %v1391 = vunpack.c.l.b16 %v532
        %v1392 = vunpack.c.l.b16 %v533
        %v1393 = vunpack.c.l.b16 %v534
        %v1394 = vunpack.c.l.b16 %v535
        %v1395 = vunpack.c.l.b16 %v536
        %v1396 = vunpack.c.l.b16 %v537
        %v1397 = vunpack.c.l.b16 %v538
        %v1398 = vunpack.c.l.b16 %v539
        %v1399 = vunpack.c.l.b16 %v540
        %v1400 = vunpack.c.l.b16 %v541
        %v1401 = vunpack.c.l.b16 %v542
        %v1402 = vunpack.c.l.b16 %v543
        %v1403 = vunpack.c.l.b16 %v544
        %v1404 = vunpack.c.l.b16 %v545
        %v1405 = vunpack.c.l.b16 %v546
        %v1406 = vunpack.c.l.b16 %v547
        %v1407 = vunpack.c.l.b16 %v548
        %v1408 = vunpack.c.l.b16 %v549
        %v1409 = vunpack.c.l.b16 %v550
        %v1410 = vunpack.c.l.b16 %v551
        %v1411 = vunpack.c.l.b16 %v552
        %v1412 = vunpack.c.l.b16 %v553
        %v1413 = vunpack.c.l.b16 %v554
        %v1414 = vunpack.c.l.b16 %v555
        %v1415 = vunpack.c.l.b16 %v556
        %v1416 = vunpack.c.l.b16 %v557
        %v1417 = vunpack.c.l.b16 %v558
        %v1418 = vunpack.c.l.b16 %v559
        %v1419 = vunpack.c.l.b16 %v560
        %v1420 = vunpack.c.l.b16 %v561
        %v1421 = vunpack.c.l.b16 %v562
        %v1422 = vunpack.c.l.b16 %v563
        %v1423 = vunpack.c.l.b16 %v564
        %v1424 = vunpack.c.l.b16 %v565
        %v1425 = vunpack.c.l.b16 %v566
        %v1426 = vunpack.c.l.b16 %v567
        %v1427 = vunpack.c.l.b16 %v568
        %v1428 = vunpack.c.l.b16 %v569
        %v1429 = vunpack.c.l.b16 %v570
        %v1430 = vunpack.c.l.b16 %v571
        %v1431 = vunpack.c.l.b16 %v572
        %v1432 = vunpack.c.l.b16 %v573
        %v1433 = vunpack.c.l.b16 %v574
        %v1434 = vunpack.c.l.b16 %v575
        %v1435 = vunpack.c.l.b16 %v576
        %v1436 = vunpack.c.l.b16 %v577
        %v1437 = vunpack.c.l.b16 %v578
        %v1438 = vunpack.c.l.b16 %v579
        %v1439 = vunpack.c.l.b16 %v580
        %v1440 = vunpack.c.l.b16 %v581
        %v1441 = vunpack.c.l.b16 %v582
        %v1442 = vunpack.c.l.b16 %v583
        %v1443 = vunpack.c.l.b16 %v584
        %v1444 = vunpack.c.l.b16 %v585
        %v1445 = vunpack.c.l.b16 %v586
        %v1446 = vunpack.c.l.b16 %v587
        %v1447 = vunpack.c.l.b16 %v588
        %v1448 = vunpack.c.l.b16 %v589
        %v1449 = vunpack.c.l.b16 %v590
        %v1450 = vunpack.c.l.b16 %v591
        %v1451 = vunpack.c.l.b16 %v592
        %v1452 = vunpack.c.l.b16 %v593
        %v1453 = vunpack.c.l.b16 %v594
        %v1454 = vunpack.c.l.b16 %v595
        %v1455 = vunpack.c.l.b16 %v596
        %v1456 = vunpack.c.l.b16 %v597
        %v1457 = vunpack.c.l.b16 %v598
        %v1458 = vunpack.c.l.b16 %v599
        %v1459 = vpack.c.b16 %v1076, %v1075
        %v1460 = vpack.c.b16 %v1078, %v1077
        %v1461 = vpack.c.b16 %v1080, %v1079
        %v1462 = vpack.c.b16 %v1082, %v1081
        %v1463 = vpack.c.b16 %v1084, %v1083
        %v1464 = vpack.c.b16 %v1086, %v1085
        %v1465 = vpack.c.b16 %v1088, %v1087
        %v1466 = vpack.c.b16 %v1090, %v1089
        %v1467 = vpack.c.b16 %v1092, %v1091
        %v1468 = vpack.c.b16 %v1094, %v1093
        %v1469 = vpack.c.b16 %v1096, %v1095
        %v1470 = vpack.c.b16 %v1098, %v1097
        %v1471 = vpack.c.b16 %v1100, %v1099
        %v1472 = vpack.c.b16 %v1102, %v1101
        %v1473 = vpack.c.b16 %v1104, %v1103
        %v1474 = vpack.c.b16 %v1106, %v1105
        %v1475 = vpack.c.b16 %v1108, %v1107
        %v1476 = vpack.c.b16 %v1110, %v1109
        %v1477 = vpack.c.b16 %v1112, %v1111
        %v1478 = vpack.c.b16 %v1114, %v1113
        %v1479 = vpack.c.b16 %v1116, %v1115
        %v1480 = vpack.c.b16 %v1118, %v1117
        %v1481 = vpack.c.b16 %v1120, %v1119
        %v1482 = vpack.c.b16 %v1122, %v1121
        %v1483 = vpack.c.b16 %v1124, %v1123
        %v1484 = vpack.c.b16 %v1126, %v1125
        %v1485 = vpack.c.b16 %v1128, %v1127
        %v1486 = vpack.c.b16 %v1130, %v1129
        %v1487 = vpack.c.b16 %v1132, %v1131
        %v1488 = vpack.c.b16 %v1134, %v1133
        %v1489 = vpack.c.b16 %v1136, %v1135
        %v1490 = vpack.c.b16 %v1138, %v1137
        %v1491 = vpack.c.b16 %v1140, %v1139
        %v1492 = vpack.c.b16 %v1142, %v1141
        %v1493 = vpack.c.b16 %v1144, %v1143
        %v1494 = vpack.c.b16 %v1146, %v1145
        %v1495 = vpack.c.b16 %v1148, %v1147
        %v1496 = vpack.c.b16 %v1150, %v1149
        %v1497 = vpack.c.b16 %v1152, %v1151
        %v1498 = vpack.c.b16 %v1154, %v1153
        %v1499 = vpack.c.b16 %v1156, %v1155
        %v1500 = vpack.c.b16 %v1158, %v1157
        %v1501 = vpack.c.b16 %v1160, %v1159
        %v1502 = vpack.c.b16 %v1162, %v1161
        %v1503 = vpack.c.b16 %v1164, %v1163
        %v1504 = vpack.c.b16 %v1166, %v1165
        %v1505 = vpack.c.b16 %v1168, %v1167
        %v1506 = vpack.c.b16 %v1170, %v1169
        %v1507 = vpack.c.b16 %v1172, %v1171
        %v1508 = vpack.c.b16 %v1174, %v1173
        %v1509 = vpack.c.b16 %v1176, %v1175
        %v1510 = vpack.c.b16 %v1178, %v1177
        %v1511 = vpack.c.b16 %v1180, %v1179
        %v1512 = vpack.c.b16 %v1182, %v1181
        %v1513 = vpack.c.b16 %v1184, %v1183
        %v1514 = vpack.c.b16 %v1186, %v1185
        %v1515 = vpack.c.b16 %v1188, %v1187
        %v1516 = vpack.c.b16 %v1190, %v1189
        %v1517 = vpack.c.b16 %v1192, %v1191
        %v1518 = vpack.c.b16 %v1194, %v1193
        %v1519 = vpack.c.b16 %v1196, %v1195
        %v1520 = vpack.c.b16 %v1198, %v1197
        %v1521 = vpack.c.b16 %v1200, %v1199
        %v1522 = vpack.c.b16 %v1202, %v1201
        %v1523 = vpack.c.b16 %v1204, %v1203
        %v1524 = vpack.c.b16 %v1206, %v1205
        %v1525 = vpack.c.b16 %v1208, %v1207
        %v1526 = vpack.c.b16 %v1210, %v1209
        %v1527 = vpack.c.b16 %v1212, %v1211
        %v1528 = vpack.c.b16 %v1214, %v1213
        %v1529 = vpack.c.b16 %v1216, %v1215
        %v1530 = vpack.c.b16 %v1218, %v1217
        %v1531 = vpack.c.b16 %v1220, %v1219
        %v1532 = vpack.c.b16 %v1222, %v1221
        %v1533 = vpack.c.b16 %v1224, %v1223
        %v1534 = vpack.c.b16 %v1226, %v1225
        %v1535 = vpack.c.b16 %v1228, %v1227
        %v1536 = vpack.c.b16 %v1230, %v1229
        %v1537 = vpack.c.b16 %v1232, %v1231
        %v1538 = vpack.c.b16 %v1234, %v1233
        %v1539 = vpack.c.b16 %v1236, %v1235
        %v1540 = vpack.c.b16 %v1238, %v1237
        %v1541 = vpack.c.b16 %v1240, %v1239
        %v1542 = vpack.c.b16 %v1242, %v1241
        %v1543 = vpack.c.b16 %v1244, %v1243
        %v1544 = vpack.c.b16 %v1246, %v1245
        %v1545 = vpack.c.b16 %v1248, %v1247
        %v1546 = vpack.c.b16 %v1250, %v1249
        %v1547 = vpack.c.b16 %v1252, %v1251
        %v1548 = vpack.c.b16 %v1254, %v1253
        %v1549 = vpack.c.b16 %v1256, %v1255
        %v1550 = vpack.c.b16 %v1258, %v1257
        %v1551 = vpack.c.b16 %v1260, %v1259
        %v1552 = vpack.c.b16 %v1262, %v1261
        %v1553 = vpack.c.b16 %v1264, %v1263
        %v1554 = vpack.c.b16 %v1266, %v1265
        %v1555 = vpack.c.b16 %v1268, %v1267
        %v1556 = vpack.c.b16 %v1270, %v1269
        %v1557 = vpack.c.b16 %v1272, %v1271
        %v1558 = vpack.c.b16 %v1274, %v1273
        %v1559 = vpack.c.b16 %v1276, %v1275
        %v1560 = vpack.c.b16 %v1278, %v1277
        %v1561 = vpack.c.b16 %v1280, %v1279
        %v1562 = vpack.c.b16 %v1282, %v1281
        %v1563 = vpack.c.b16 %v1284, %v1283
        %v1564 = vpack.c.b16 %v1286, %v1285
        %v1565 = vpack.c.b16 %v1288, %v1287
        %v1566 = vpack.c.b16 %v1290, %v1289
        %v1567 = vpack.c.b16 %v1292, %v1291
        %v1568 = vpack.c.b16 %v1294, %v1293
        %v1569 = vpack.c.b16 %v1296, %v1295
        %v1570 = vpack.c.b16 %v1298, %v1297
        %v1571 = vpack.c.b16 %v1300, %v1299
        %v1572 = vpack.c.b16 %v1302, %v1301
        %v1573 = vpack.c.b16 %v1304, %v1303
        %v1574 = vpack.c.b16 %v1306, %v1305
        %v1575 = vpack.c.b16 %v1308, %v1307
        %v1576 = vpack.c.b16 %v1310, %v1309
        %v1577 = vpack.c.b16 %v1312, %v1311
        %v1578 = vpack.c.b16 %v1314, %v1313
        %v1579 = vpack.c.b16 %v1316, %v1315
        %v1580 = vpack.c.b16 %v1318, %v1317
        %v1581 = vpack.c.b16 %v1320, %v1319
        %v1582 = vpack.c.b16 %v1322, %v1321
        %v1583 = vpack.c.b16 %v1324, %v1323
        %v1584 = vpack.c.b16 %v1326, %v1325
        %v1585 = vpack.c.b16 %v1328, %v1327
        %v1586 = vpack.c.b16 %v1330, %v1329
        %v1587 = vpack.c.b16 %v1332, %v1331
        %v1588 = vpack.c.b16 %v1334, %v1333
        %v1589 = vpack.c.b16 %v1336, %v1335
        %v1590 = vpack.c.b16 %v1338, %v1337
        %v1591 = vpack.c.b16 %v1340, %v1339
        %v1592 = vpack.c.b16 %v1342, %v1341
        %v1593 = vpack.c.b16 %v1344, %v1343
        %v1594 = vpack.c.b16 %v1346, %v1345
        %v1595 = vpack.c.b16 %v1348, %v1347
        %v1596 = vpack.c.b16 %v1350, %v1349
        %v1597 = vpack.c.b16 %v1352, %v1351
        %v1598 = vpack.c.b16 %v1354, %v1353
        %v1599 = vpack.c.b16 %v1356, %v1355
        %v1600 = vpack.c.b16 %v1358, %v1357
        %v1601 = vpack.c.b16 %v1360, %v1359
        %v1602 = vpack.c.b16 %v1362, %v1361
        %v1603 = vpack.c.b16 %v1364, %v1363
        %v1604 = vpack.c.b16 %v1366, %v1365
        %v1605 = vpack.c.b16 %v1368, %v1367
        %v1606 = vpack.c.b16 %v1370, %v1369
        %v1607 = vpack.c.b16 %v1372, %v1371
        %v1608 = vpack.c.b16 %v1374, %v1373
        %v1609 = vpack.c.b16 %v1376, %v1375
        %v1610 = vpack.c.b16 %v1378, %v1377
        %v1611 = vpack.c.b16 %v1380, %v1379
        %v1612 = vpack.c.b16 %v1382, %v1381
        %v1613 = vpack.c.b16 %v1384, %v1383
        %v1614 = vpack.c.b16 %v1386, %v1385
        %v1615 = vpack.c.b16 %v1388, %v1387
        %v1616 = vpack.c.b16 %v1390, %v1389
        %v1617 = vpack.c.b16 %v1392, %v1391
        %v1618 = vpack.c.b16 %v1394, %v1393
        %v1619 = vpack.c.b16 %v1396, %v1395
        %v1620 = vpack.c.b16 %v1398, %v1397
        %v1621 = vpack.c.b16 %v1400, %v1399
        %v1622 = vpack.c.b16 %v1402, %v1401
        %v1623 = vpack.c.b16 %v1404, %v1403
        %v1624 = vpack.c.b16 %v1406, %v1405
        %v1625 = vpack.c.b16 %v1408, %v1407
        %v1626 = vpack.c.b16 %v1410, %v1409
        %v1627 = vpack.c.b16 %v1412, %v1411
        %v1628 = vpack.c.b16 %v1414, %v1413
        %v1629 = vpack.c.b16 %v1416, %v1415
        %v1630 = vpack.c.b16 %v1418, %v1417
        %v1631 = vpack.c.b16 %v1420, %v1419
        %v1632 = vpack.c.b16 %v1422, %v1421
        %v1633 = vpack.c.b16 %v1424, %v1423
        %v1634 = vpack.c.b16 %v1426, %v1425
        %v1635 = vpack.c.b16 %v1428, %v1427
        %v1636 = vpack.c.b16 %v1430, %v1429
        %v1637 = vpack.c.b16 %v1432, %v1431
        %v1638 = vpack.c.b16 %v1434, %v1433
        %v1639 = vpack.c.b16 %v1436, %v1435
        %v1640 = vpack.c.b16 %v1438, %v1437
        %v1641 = vpack.c.b16 %v1440, %v1439
        %v1642 = vpack.c.b16 %v1442, %v1441
        %v1643 = vpack.c.b16 %v1444, %v1443
        %v1644 = vpack.c.b16 %v1446, %v1445
        %v1645 = vpack.c.b16 %v1448, %v1447
        %v1646 = vpack.c.b16 %v1450, %v1449
        %v1647 = vpack.c.b16 %v1452, %v1451
        %v1648 = vpack.c.b16 %v1454, %v1453
        %v1649 = vpack.c.b16 %v1456, %v1455
        %v1650 = vpack.c.b16 %v1458, %v1457
        %1843 = vmatprep.subr.bf16.mxu0 0
        %1844 = vmatpush1.bf16.msra.mxu0 %v1459
        %1845 = vmatprep.subr.bf16.mxu0 0
        %1846 = vmatpush1.bf16.msra.mxu0 %v1460
        %1847 = vmatprep.subr.bf16.mxu0 0
        %1848 = vmatpush1.bf16.msra.mxu0 %v1461
        %1849 = vmatprep.subr.bf16.mxu0 0
        %1850 = vmatpush1.bf16.msra.mxu0 %v1462
        %1851 = vmatprep.subr.bf16.mxu0 0
        %1852 = vmatpush1.bf16.msra.mxu0 %v1463
        %1853 = vmatprep.subr.bf16.mxu0 0
        %1854 = vmatpush1.bf16.msra.mxu0 %v1464
        %1855 = vmatprep.subr.bf16.mxu0 0
        %1856 = vmatpush1.bf16.msra.mxu0 %v1465
        %1857 = vmatprep.subr.bf16.mxu0 0
        %1858 = vmatpush1.bf16.msra.mxu0 %v1466
        %1859 = vmatprep.subr.bf16.mxu0 0
        %1860 = vmatpush1.bf16.msra.mxu0 %v1467
        %1861 = vmatprep.subr.bf16.mxu0 0
        %1862 = vmatpush1.bf16.msra.mxu0 %v1468
        %1863 = vmatprep.subr.bf16.mxu0 0
        %1864 = vmatpush1.bf16.msra.mxu0 %v1469
        %1865 = vmatprep.subr.bf16.mxu0 0
        %1866 = vmatpush1.bf16.msra.mxu0 %v1470
        %1867 = vmatprep.subr.bf16.mxu0 0
        %1868 = vmatpush1.bf16.msra.mxu0 %v1471
        %1869 = vmatprep.subr.bf16.mxu0 0
        %1870 = vmatpush1.bf16.msra.mxu0 %v1472
        %1871 = vmatprep.subr.bf16.mxu0 0
        %1872 = vmatpush1.bf16.msra.mxu0 %v1473
        %1873 = vmatprep.subr.bf16.mxu0 0
        %1874 = vmatpush1.bf16.msra.mxu0 %v1474
        %1875 = vmatprep.mubr.bf16.mxu0 %v644
        %1876 = vmatmul.mubr.bf16.gmra.mrb[0].mxu0 %v643
        %v1877 = vpop.f32.mrb[0].mxu0
        %v1878 = vadd.f32 %v605, %v1877
        %v1879 = vpop.f32.mrb[0].mxu0
        %v1880 = vpop.f32.mrb[0].mxu0
        %v1881 = vpop.f32.mrb[0].mxu0
        %1882 = vdwg.mxu0
        %1883 = vmatprep.subr.bf16.mxu0 0
        %1884 = vmatpush1.bf16.msra.mxu0 %v1475
        %1885 = vmatprep.subr.bf16.mxu0 0
        %1886 = vmatpush1.bf16.msra.mxu0 %v1476
        %1887 = vmatprep.subr.bf16.mxu0 0
        %1888 = vmatpush1.bf16.msra.mxu0 %v1477
        %1889 = vmatprep.subr.bf16.mxu0 0
        %1890 = vmatpush1.bf16.msra.mxu0 %v1478
        %1891 = vmatprep.subr.bf16.mxu0 0
        %1892 = vmatpush1.bf16.msra.mxu0 %v1479
        %1893 = vmatprep.subr.bf16.mxu0 0
        %1894 = vmatpush1.bf16.msra.mxu0 %v1480
        %1895 = vmatprep.subr.bf16.mxu0 0
        %1896 = vmatpush1.bf16.msra.mxu0 %v1481
        %1897 = vmatprep.subr.bf16.mxu0 0
        %1898 = vmatpush1.bf16.msra.mxu0 %v1482
        %1899 = vmatprep.subr.bf16.mxu0 0
        %1900 = vmatpush1.bf16.msra.mxu0 %v1483
        %1901 = vmatprep.subr.bf16.mxu0 0
        %1902 = vmatpush1.bf16.msra.mxu0 %v1484
        %1903 = vmatprep.subr.bf16.mxu0 0
        %1904 = vmatpush1.bf16.msra.mxu0 %v1485
        %1905 = vmatprep.subr.bf16.mxu0 0
        %1906 = vmatpush1.bf16.msra.mxu0 %v1486
        %1907 = vmatprep.subr.bf16.mxu0 0
        %1908 = vmatpush1.bf16.msra.mxu0 %v1487
        %1909 = vmatprep.subr.bf16.mxu0 0
        %1910 = vmatpush1.bf16.msra.mxu0 %v1488
        %1911 = vmatprep.subr.bf16.mxu0 0
        %1912 = vmatpush1.bf16.msra.mxu0 %v1489
        %1913 = vmatprep.subr.bf16.mxu0 0
        %1914 = vmatpush1.bf16.msra.mxu0 %v1490
        %1915 = vmatprep.mubr.bf16.mxu0 %v646
        %1916 = vmatmul.mubr.bf16.gmra.mrb[0].mxu0 %v645
        %v1917 = vpop.f32.mrb[0].mxu0
        %v1918 = vadd.f32 %v1878, %v1917
        %v1919 = vpop.f32.mrb[0].mxu0
        %v1920 = vpop.f32.mrb[0].mxu0
        %v1921 = vpop.f32.mrb[0].mxu0
        %1922 = vdwg.mxu0
        %1923 = vmatprep.subr.bf16.mxu0 0
        %1924 = vmatpush1.bf16.msra.mxu0 %v1491
        %1925 = vmatprep.subr.bf16.mxu0 0
        %1926 = vmatpush1.bf16.msra.mxu0 %v1492
        %1927 = vmatprep.subr.bf16.mxu0 0
        %1928 = vmatpush1.bf16.msra.mxu0 %v1493
        %1929 = vmatprep.subr.bf16.mxu0 0
        %1930 = vmatpush1.bf16.msra.mxu0 %v1494
        %1931 = vmatprep.subr.bf16.mxu0 0
        %1932 = vmatpush1.bf16.msra.mxu0 %v1495
        %1933 = vmatprep.subr.bf16.mxu0 0
        %1934 = vmatpush1.bf16.msra.mxu0 %v1496
        %1935 = vmatprep.subr.bf16.mxu0 0
        %1936 = vmatpush1.bf16.msra.mxu0 %v1497
        %1937 = vmatprep.subr.bf16.mxu0 0
        %1938 = vmatpush1.bf16.msra.mxu0 %v1498
        %1939 = vmatprep.subr.bf16.mxu0 0
        %1940 = vmatpush1.bf16.msra.mxu0 %v1499
        %1941 = vmatprep.subr.bf16.mxu0 0
        %1942 = vmatpush1.bf16.msra.mxu0 %v1500
        %1943 = vmatprep.subr.bf16.mxu0 0
        %1944 = vmatpush1.bf16.msra.mxu0 %v1501
        %1945 = vmatprep.subr.bf16.mxu0 0
        %1946 = vmatpush1.bf16.msra.mxu0 %v1502
        %1947 = vmatprep.subr.bf16.mxu0 0
        %1948 = vmatpush1.bf16.msra.mxu0 %v1503
        %1949 = vmatprep.subr.bf16.mxu0 0
        %1950 = vmatpush1.bf16.msra.mxu0 %v1504
        %1951 = vmatprep.subr.bf16.mxu0 0
        %1952 = vmatpush1.bf16.msra.mxu0 %v1505
        %1953 = vmatprep.subr.bf16.mxu0 0
        %1954 = vmatpush1.bf16.msra.mxu0 %v1506
        %1955 = vmatprep.mubr.bf16.mxu0 %v648
        %1956 = vmatmul.mubr.bf16.gmra.mrb[0].mxu0 %v647
        %v1957 = vpop.f32.mrb[0].mxu0
        %v1958 = vadd.f32 %v1918, %v1957
        %v1959 = vpop.f32.mrb[0].mxu0
        %v1960 = vpop.f32.mrb[0].mxu0
        %v1961 = vpop.f32.mrb[0].mxu0
        %1962 = vdwg.mxu0
        %1963 = vmatprep.subr.bf16.mxu0 0
        %1964 = vmatpush1.bf16.msra.mxu0 %v1507
        %1965 = vmatprep.subr.bf16.mxu0 0
        %1966 = vmatpush1.bf16.msra.mxu0 %v1508
        %1967 = vmatprep.subr.bf16.mxu0 0
        %1968 = vmatpush1.bf16.msra.mxu0 %v1509
        %1969 = vmatprep.subr.bf16.mxu0 0
        %1970 = vmatpush1.bf16.msra.mxu0 %v1510
        %1971 = vmatprep.subr.bf16.mxu0 0
        %1972 = vmatpush1.bf16.msra.mxu0 %v1511
        %1973 = vmatprep.subr.bf16.mxu0 0
        %1974 = vmatpush1.bf16.msra.mxu0 %v1512
        %1975 = vmatprep.subr.bf16.mxu0 0
        %1976 = vmatpush1.bf16.msra.mxu0 %v1513
        %1977 = vmatprep.subr.bf16.mxu0 0
        %1978 = vmatpush1.bf16.msra.mxu0 %v1514
        %1979 = vmatprep.subr.bf16.mxu0 0
        %1980 = vmatpush1.bf16.msra.mxu0 %v1515
        %1981 = vmatprep.subr.bf16.mxu0 0
        %1982 = vmatpush1.bf16.msra.mxu0 %v1516
        %1983 = vmatprep.subr.bf16.mxu0 0
        %1984 = vmatpush1.bf16.msra.mxu0 %v1517
        %1985 = vmatprep.subr.bf16.mxu0 0
        %1986 = vmatpush1.bf16.msra.mxu0 %v1518
        %1987 = vmatprep.subr.bf16.mxu0 0
        %1988 = vmatpush1.bf16.msra.mxu0 %v1519
        %1989 = vmatprep.subr.bf16.mxu0 0
        %1990 = vmatpush1.bf16.msra.mxu0 %v1520
        %1991 = vmatprep.subr.bf16.mxu0 0
        %1992 = vmatpush1.bf16.msra.mxu0 %v1521
        %1993 = vmatprep.subr.bf16.mxu0 0
        %1994 = vmatpush1.bf16.msra.mxu0 %v1522
        %1995 = vmatprep.mubr.bf16.mxu0 %v650
        %1996 = vmatmul.mubr.bf16.gmra.mrb[0].mxu0 %v649
        %v1997 = vpop.f32.mrb[0].mxu0
        %v1998 = vadd.f32 %v1958, %v1997
        %v1999 = vpop.f32.mrb[0].mxu0
        %v2000 = vpop.f32.mrb[0].mxu0
        %v2001 = vpop.f32.mrb[0].mxu0
        %2002 = vdwg.mxu0
        %2003 = vmatprep.subr.bf16.mxu0 0
        %2004 = vmatpush1.bf16.msra.mxu0 %v1523
        %2005 = vmatprep.subr.bf16.mxu0 0
        %2006 = vmatpush1.bf16.msra.mxu0 %v1524
        %2007 = vmatprep.subr.bf16.mxu0 0
        %2008 = vmatpush1.bf16.msra.mxu0 %v1525
        %2009 = vmatprep.subr.bf16.mxu0 0
        %2010 = vmatpush1.bf16.msra.mxu0 %v1526
        %2011 = vmatprep.subr.bf16.mxu0 0
        %2012 = vmatpush1.bf16.msra.mxu0 %v1527
        %2013 = vmatprep.subr.bf16.mxu0 0
        %2014 = vmatpush1.bf16.msra.mxu0 %v1528
        %2015 = vmatprep.subr.bf16.mxu0 0
        %2016 = vmatpush1.bf16.msra.mxu0 %v1529
        %2017 = vmatprep.subr.bf16.mxu0 0
        %2018 = vmatpush1.bf16.msra.mxu0 %v1530
        %2019 = vmatprep.subr.bf16.mxu0 0
        %2020 = vmatpush1.bf16.msra.mxu0 %v1531
        %2021 = vmatprep.subr.bf16.mxu0 0
        %2022 = vmatpush1.bf16.msra.mxu0 %v1532
        %2023 = vmatprep.subr.bf16.mxu0 0
        %2024 = vmatpush1.bf16.msra.mxu0 %v1533
        %2025 = vmatprep.subr.bf16.mxu0 0
        %2026 = vmatpush1.bf16.msra.mxu0 %v1534
        %2027 = vmatprep.subr.bf16.mxu0 0
        %2028 = vmatpush1.bf16.msra.mxu0 %v1535
        %2029 = vmatprep.subr.bf16.mxu0 0
        %2030 = vmatpush1.bf16.msra.mxu0 %v1536
        %2031 = vmatprep.subr.bf16.mxu0 0
        %2032 = vmatpush1.bf16.msra.mxu0 %v1537
        %2033 = vmatprep.subr.bf16.mxu0 0
        %2034 = vmatpush1.bf16.msra.mxu0 %v1538
        %2035 = vmatprep.mubr.bf16.mxu0 %v652
        %2036 = vmatmul.mubr.bf16.gmra.mrb[0].mxu0 %v651
        %v2037 = vpop.f32.mrb[0].mxu0
        %v2038 = vadd.f32 %v1998, %v2037
        %v2039 = vpop.f32.mrb[0].mxu0
        %v2040 = vpop.f32.mrb[0].mxu0
        %v2041 = vpop.f32.mrb[0].mxu0
        %2042 = vdwg.mxu0
        %2043 = vmatprep.subr.bf16.mxu0 0
        %2044 = vmatpush1.bf16.msra.mxu0 %v1539
        %2045 = vmatprep.subr.bf16.mxu0 0
        %2046 = vmatpush1.bf16.msra.mxu0 %v1540
        %2047 = vmatprep.subr.bf16.mxu0 0
        %2048 = vmatpush1.bf16.msra.mxu0 %v1541
        %2049 = vmatprep.subr.bf16.mxu0 0
        %2050 = vmatpush1.bf16.msra.mxu0 %v1542
        %2051 = vmatprep.subr.bf16.mxu0 0
        %2052 = vmatpush1.bf16.msra.mxu0 %v1543
        %2053 = vmatprep.subr.bf16.mxu0 0
        %2054 = vmatpush1.bf16.msra.mxu0 %v1544
        %2055 = vmatprep.subr.bf16.mxu0 0
        %2056 = vmatpush1.bf16.msra.mxu0 %v1545
        %2057 = vmatprep.subr.bf16.mxu0 0
        %2058 = vmatpush1.bf16.msra.mxu0 %v1546
        %2059 = vmatprep.subr.bf16.mxu0 0
        %2060 = vmatpush1.bf16.msra.mxu0 %v1547
        %2061 = vmatprep.subr.bf16.mxu0 0
        %2062 = vmatpush1.bf16.msra.mxu0 %v1548
        %2063 = vmatprep.subr.bf16.mxu0 0
        %2064 = vmatpush1.bf16.msra.mxu0 %v1549
        %2065 = vmatprep.subr.bf16.mxu0 0
        %2066 = vmatpush1.bf16.msra.mxu0 %v1550
        %2067 = vmatprep.subr.bf16.mxu0 0
        %2068 = vmatpush1.bf16.msra.mxu0 %v1551
        %2069 = vmatprep.subr.bf16.mxu0 0
        %2070 = vmatpush1.bf16.msra.mxu0 %v1552
        %2071 = vmatprep.subr.bf16.mxu0 0
        %2072 = vmatpush1.bf16.msra.mxu0 %v1553
        %2073 = vmatprep.subr.bf16.mxu0 0
        %2074 = vmatpush1.bf16.msra.mxu0 %v1554
        %2075 = vmatprep.mubr.bf16.mxu0 %v654
        %2076 = vmatmul.mubr.bf16.gmra.mrb[0].mxu0 %v653
        %v2077 = vpop.f32.mrb[0].mxu0
        %v2078 = vadd.f32 %v2038, %v2077
        %v2079 = vpop.f32.mrb[0].mxu0
        %v2080 = vpop.f32.mrb[0].mxu0
        %v2081 = vpop.f32.mrb[0].mxu0
        %2082 = vdwg.mxu0
        %2083 = vmatprep.subr.bf16.mxu0 0
        %2084 = vmatpush1.bf16.msra.mxu0 %v1555
        %2085 = vmatprep.subr.bf16.mxu0 0
        %2086 = vmatpush1.bf16.msra.mxu0 %v1556
        %2087 = vmatprep.subr.bf16.mxu0 0
        %2088 = vmatpush1.bf16.msra.mxu0 %v1557
        %2089 = vmatprep.subr.bf16.mxu0 0
        %2090 = vmatpush1.bf16.msra.mxu0 %v1558
        %2091 = vmatprep.subr.bf16.mxu0 0
        %2092 = vmatpush1.bf16.msra.mxu0 %v1559
        %2093 = vmatprep.subr.bf16.mxu0 0
        %2094 = vmatpush1.bf16.msra.mxu0 %v1560
        %2095 = vmatprep.subr.bf16.mxu0 0
        %2096 = vmatpush1.bf16.msra.mxu0 %v1561
        %2097 = vmatprep.subr.bf16.mxu0 0
        %2098 = vmatpush1.bf16.msra.mxu0 %v1562
        %2099 = vmatprep.subr.bf16.mxu0 0
        %2100 = vmatpush1.bf16.msra.mxu0 %v1563
        %2101 = vmatprep.subr.bf16.mxu0 0
        %2102 = vmatpush1.bf16.msra.mxu0 %v1564
        %2103 = vmatprep.subr.bf16.mxu0 0
        %2104 = vmatpush1.bf16.msra.mxu0 %v1565
        %2105 = vmatprep.subr.bf16.mxu0 0
        %2106 = vmatpush1.bf16.msra.mxu0 %v1566
        %2107 = vmatprep.subr.bf16.mxu0 0
        %2108 = vmatpush1.bf16.msra.mxu0 %v1567
        %2109 = vmatprep.subr.bf16.mxu0 0
        %2110 = vmatpush1.bf16.msra.mxu0 %v1568
        %2111 = vmatprep.subr.bf16.mxu0 0
        %2112 = vmatpush1.bf16.msra.mxu0 %v1569
        %2113 = vmatprep.subr.bf16.mxu0 0
        %2114 = vmatpush1.bf16.msra.mxu0 %v1570
        %2115 = vmatprep.mubr.bf16.mxu0 %v656
        %2116 = vmatmul.mubr.bf16.gmra.mrb[0].mxu0 %v655
        %v2117 = vpop.f32.mrb[0].mxu0
        %v2118 = vadd.f32 %v2078, %v2117
        %v2119 = vpop.f32.mrb[0].mxu0
        %v2120 = vpop.f32.mrb[0].mxu0
        %v2121 = vpop.f32.mrb[0].mxu0
        %2122 = vdwg.mxu0
        %2123 = vmatprep.subr.bf16.mxu0 0
        %2124 = vmatpush1.bf16.msra.mxu0 %v1571
        %2125 = vmatprep.subr.bf16.mxu0 0
        %2126 = vmatpush1.bf16.msra.mxu0 %v1572
        %2127 = vmatprep.subr.bf16.mxu0 0
        %2128 = vmatpush1.bf16.msra.mxu0 %v1573
        %2129 = vmatprep.subr.bf16.mxu0 0
        %2130 = vmatpush1.bf16.msra.mxu0 %v1574
        %2131 = vmatprep.subr.bf16.mxu0 0
        %2132 = vmatpush1.bf16.msra.mxu0 %v1575
        %2133 = vmatprep.subr.bf16.mxu0 0
        %2134 = vmatpush1.bf16.msra.mxu0 %v1576
        %2135 = vmatprep.subr.bf16.mxu0 0
        %2136 = vmatpush1.bf16.msra.mxu0 %v1577
        %2137 = vmatprep.subr.bf16.mxu0 0
        %2138 = vmatpush1.bf16.msra.mxu0 %v1578
        %2139 = vmatprep.subr.bf16.mxu0 0
        %2140 = vmatpush1.bf16.msra.mxu0 %v1579
        %2141 = vmatprep.subr.bf16.mxu0 0
        %2142 = vmatpush1.bf16.msra.mxu0 %v1580
        %2143 = vmatprep.subr.bf16.mxu0 0
        %2144 = vmatpush1.bf16.msra.mxu0 %v1581
        %2145 = vmatprep.subr.bf16.mxu0 0
        %2146 = vmatpush1.bf16.msra.mxu0 %v1582
        %2147 = vmatprep.subr.bf16.mxu0 0
        %2148 = vmatpush1.bf16.msra.mxu0 %v1583
        %2149 = vmatprep.subr.bf16.mxu0 0
        %2150 = vmatpush1.bf16.msra.mxu0 %v1584
        %2151 = vmatprep.subr.bf16.mxu0 0
        %2152 = vmatpush1.bf16.msra.mxu0 %v1585
        %2153 = vmatprep.subr.bf16.mxu0 0
        %2154 = vmatpush1.bf16.msra.mxu0 %v1586
        %2155 = vmatprep.mubr.bf16.mxu0 %v658
        %2156 = vmatmul.mubr.bf16.gmra.mrb[0].mxu0 %v657
        %v2157 = vpop.f32.mrb[0].mxu0
        %v2158 = vadd.f32 %v2118, %v2157
        %v2159 = vpop.f32.mrb[0].mxu0
        %v2160 = vpop.f32.mrb[0].mxu0
        %v2161 = vpop.f32.mrb[0].mxu0
        %2162 = vdwg.mxu0
        %2163 = vmatprep.subr.bf16.mxu0 0
        %2164 = vmatpush1.bf16.msra.mxu0 %v1587
        %2165 = vmatprep.subr.bf16.mxu0 0
        %2166 = vmatpush1.bf16.msra.mxu0 %v1588
        %2167 = vmatprep.subr.bf16.mxu0 0
        %2168 = vmatpush1.bf16.msra.mxu0 %v1589
        %2169 = vmatprep.subr.bf16.mxu0 0
        %2170 = vmatpush1.bf16.msra.mxu0 %v1590
        %2171 = vmatprep.subr.bf16.mxu0 0
        %2172 = vmatpush1.bf16.msra.mxu0 %v1591
        %2173 = vmatprep.subr.bf16.mxu0 0
        %2174 = vmatpush1.bf16.msra.mxu0 %v1592
        %2175 = vmatprep.subr.bf16.mxu0 0
        %2176 = vmatpush1.bf16.msra.mxu0 %v1593
        %2177 = vmatprep.subr.bf16.mxu0 0
        %2178 = vmatpush1.bf16.msra.mxu0 %v1594
        %2179 = vmatprep.subr.bf16.mxu0 0
        %2180 = vmatpush1.bf16.msra.mxu0 %v1595
        %2181 = vmatprep.subr.bf16.mxu0 0
        %2182 = vmatpush1.bf16.msra.mxu0 %v1596
        %2183 = vmatprep.subr.bf16.mxu0 0
        %2184 = vmatpush1.bf16.msra.mxu0 %v1597
        %2185 = vmatprep.subr.bf16.mxu0 0
        %2186 = vmatpush1.bf16.msra.mxu0 %v1598
        %2187 = vmatprep.subr.bf16.mxu0 0
        %2188 = vmatpush1.bf16.msra.mxu0 %v1599
        %2189 = vmatprep.subr.bf16.mxu0 0
        %2190 = vmatpush1.bf16.msra.mxu0 %v1600
        %2191 = vmatprep.subr.bf16.mxu0 0
        %2192 = vmatpush1.bf16.msra.mxu0 %v1601
        %2193 = vmatprep.subr.bf16.mxu0 0
        %2194 = vmatpush1.bf16.msra.mxu0 %v1602
        %2195 = vmatprep.mubr.bf16.mxu0 %v660
        %2196 = vmatmul.mubr.bf16.gmra.mrb[0].mxu0 %v659
        %v2197 = vpop.f32.mrb[0].mxu0
        %v2198 = vadd.f32 %v2158, %v2197
        %v2199 = vpop.f32.mrb[0].mxu0
        %v2200 = vpop.f32.mrb[0].mxu0
        %v2201 = vpop.f32.mrb[0].mxu0
        %2202 = vdwg.mxu0
        %2203 = vmatprep.subr.bf16.mxu0 0
        %2204 = vmatpush1.bf16.msra.mxu0 %v1603
        %2205 = vmatprep.subr.bf16.mxu0 0
        %2206 = vmatpush1.bf16.msra.mxu0 %v1604
        %2207 = vmatprep.subr.bf16.mxu0 0
        %2208 = vmatpush1.bf16.msra.mxu0 %v1605
        %2209 = vmatprep.subr.bf16.mxu0 0
        %2210 = vmatpush1.bf16.msra.mxu0 %v1606
        %2211 = vmatprep.subr.bf16.mxu0 0
        %2212 = vmatpush1.bf16.msra.mxu0 %v1607
        %2213 = vmatprep.subr.bf16.mxu0 0
        %2214 = vmatpush1.bf16.msra.mxu0 %v1608
        %2215 = vmatprep.subr.bf16.mxu0 0
        %2216 = vmatpush1.bf16.msra.mxu0 %v1609
        %2217 = vmatprep.subr.bf16.mxu0 0
        %2218 = vmatpush1.bf16.msra.mxu0 %v1610
        %2219 = vmatprep.subr.bf16.mxu0 0
        %2220 = vmatpush1.bf16.msra.mxu0 %v1611
        %2221 = vmatprep.subr.bf16.mxu0 0
        %2222 = vmatpush1.bf16.msra.mxu0 %v1612
        %2223 = vmatprep.subr.bf16.mxu0 0
        %2224 = vmatpush1.bf16.msra.mxu0 %v1613
        %2225 = vmatprep.subr.bf16.mxu0 0
        %2226 = vmatpush1.bf16.msra.mxu0 %v1614
        %2227 = vmatprep.subr.bf16.mxu0 0
        %2228 = vmatpush1.bf16.msra.mxu0 %v1615
        %2229 = vmatprep.subr.bf16.mxu0 0
        %2230 = vmatpush1.bf16.msra.mxu0 %v1616
        %2231 = vmatprep.subr.bf16.mxu0 0
        %2232 = vmatpush1.bf16.msra.mxu0 %v1617
        %2233 = vmatprep.subr.bf16.mxu0 0
        %2234 = vmatpush1.bf16.msra.mxu0 %v1618
        %2235 = vmatprep.mubr.bf16.mxu0 %v662
        %2236 = vmatmul.mubr.bf16.gmra.mrb[0].mxu0 %v661
        %v2237 = vpop.f32.mrb[0].mxu0
        %v2238 = vadd.f32 %v2198, %v2237
        %v2239 = vpop.f32.mrb[0].mxu0
        %v2240 = vpop.f32.mrb[0].mxu0
        %v2241 = vpop.f32.mrb[0].mxu0
        %2242 = vdwg.mxu0
        %2243 = vmatprep.subr.bf16.mxu0 0
        %2244 = vmatpush1.bf16.msra.mxu0 %v1619
        %2245 = vmatprep.subr.bf16.mxu0 0
        %2246 = vmatpush1.bf16.msra.mxu0 %v1620
        %2247 = vmatprep.subr.bf16.mxu0 0
        %2248 = vmatpush1.bf16.msra.mxu0 %v1621
        %2249 = vmatprep.subr.bf16.mxu0 0
        %2250 = vmatpush1.bf16.msra.mxu0 %v1622
        %2251 = vmatprep.subr.bf16.mxu0 0
        %2252 = vmatpush1.bf16.msra.mxu0 %v1623
        %2253 = vmatprep.subr.bf16.mxu0 0
        %2254 = vmatpush1.bf16.msra.mxu0 %v1624
        %2255 = vmatprep.subr.bf16.mxu0 0
        %2256 = vmatpush1.bf16.msra.mxu0 %v1625
        %2257 = vmatprep.subr.bf16.mxu0 0
        %2258 = vmatpush1.bf16.msra.mxu0 %v1626
        %2259 = vmatprep.subr.bf16.mxu0 0
        %2260 = vmatpush1.bf16.msra.mxu0 %v1627
        %2261 = vmatprep.subr.bf16.mxu0 0
        %2262 = vmatpush1.bf16.msra.mxu0 %v1628
        %2263 = vmatprep.subr.bf16.mxu0 0
        %2264 = vmatpush1.bf16.msra.mxu0 %v1629
        %2265 = vmatprep.subr.bf16.mxu0 0
        %2266 = vmatpush1.bf16.msra.mxu0 %v1630
        %2267 = vmatprep.subr.bf16.mxu0 0
        %2268 = vmatpush1.bf16.msra.mxu0 %v1631
        %2269 = vmatprep.subr.bf16.mxu0 0
        %2270 = vmatpush1.bf16.msra.mxu0 %v1632
        %2271 = vmatprep.subr.bf16.mxu0 0
        %2272 = vmatpush1.bf16.msra.mxu0 %v1633
        %2273 = vmatprep.subr.bf16.mxu0 0
        %2274 = vmatpush1.bf16.msra.mxu0 %v1634
        %2275 = vmatprep.mubr.bf16.mxu0 %v664
        %2276 = vmatmul.mubr.bf16.gmra.mrb[0].mxu0 %v663
        %v2277 = vpop.f32.mrb[0].mxu0
        %v2278 = vadd.f32 %v2238, %v2277
        %v2279 = vpop.f32.mrb[0].mxu0
        %v2280 = vpop.f32.mrb[0].mxu0
        %v2281 = vpop.f32.mrb[0].mxu0
        %2282 = vdwg.mxu0
        %2283 = vmatprep.subr.bf16.mxu0 0
        %2284 = vmatpush1.bf16.msra.mxu0 %v1635
        %2285 = vmatprep.subr.bf16.mxu0 0
        %2286 = vmatpush1.bf16.msra.mxu0 %v1636
        %2287 = vmatprep.subr.bf16.mxu0 0
        %2288 = vmatpush1.bf16.msra.mxu0 %v1637
        %2289 = vmatprep.subr.bf16.mxu0 0
        %2290 = vmatpush1.bf16.msra.mxu0 %v1638
        %2291 = vmatprep.subr.bf16.mxu0 0
        %2292 = vmatpush1.bf16.msra.mxu0 %v1639
        %2293 = vmatprep.subr.bf16.mxu0 0
        %2294 = vmatpush1.bf16.msra.mxu0 %v1640
        %2295 = vmatprep.subr.bf16.mxu0 0
        %2296 = vmatpush1.bf16.msra.mxu0 %v1641
        %2297 = vmatprep.subr.bf16.mxu0 0
        %2298 = vmatpush1.bf16.msra.mxu0 %v1642
        %2299 = vmatprep.subr.bf16.mxu0 0
        %2300 = vmatpush1.bf16.msra.mxu0 %v1643
        %2301 = vmatprep.subr.bf16.mxu0 0
        %2302 = vmatpush1.bf16.msra.mxu0 %v1644
        %2303 = vmatprep.subr.bf16.mxu0 0
        %2304 = vmatpush1.bf16.msra.mxu0 %v1645
        %2305 = vmatprep.subr.bf16.mxu0 0
        %2306 = vmatpush1.bf16.msra.mxu0 %v1646
        %2307 = vmatprep.subr.bf16.mxu0 0
        %2308 = vmatpush1.bf16.msra.mxu0 %v1647
        %2309 = vmatprep.subr.bf16.mxu0 0
        %2310 = vmatpush1.bf16.msra.mxu0 %v1648
        %2311 = vmatprep.subr.bf16.mxu0 0
        %2312 = vmatpush1.bf16.msra.mxu0 %v1649
        %2313 = vmatprep.subr.bf16.mxu0 0
        %2314 = vmatpush1.bf16.msra.mxu0 %v1650
        %2315 = vmatprep.mubr.bf16.mxu0 %v666
        %2316 = vmatmul.mubr.bf16.gmra.mrb[0].mxu0 %v665
        %v2317 = vpop.f32.mrb[0].mxu0
        %v2318 = vadd.f32 %v2278, %v2317
        %v2319 = vpop.f32.mrb[0].mxu0
        %v2320 = vpop.f32.mrb[0].mxu0
        %v2321 = vpop.f32.mrb[0].mxu0
        %2322 = vdwg.mxu0
        %2323 = vst [vmem:[%s189] sm:$0xff] %v2318
        %s2324 = sand.u32 %s103, 1
        %s2325 = scalar_lea.sflag [#allocation3], %s2324
        %s2326 = sand.u32 %s103, 1
        %s2327 = smul.addr %s2326, 8
        %s2328 = scalar_lea.vmem [#allocation2], %s2327
        // Predicated region
        $region33: #{hd_multi_clip_embed.7} parent=31 // pred_check
          %p2329 = pneg %p113
        $region34: #{hd_multi_clip_embed.7} parent=31 // pred_check_branch
          %2331 = sbr.rel (%p2329) target = $region36
        $region35: #{hd_multi_clip_embed.7} parent=31 // pred_region
          %s2333 = ssub.s32 128, 128
          %2334 = vsyncadd %s2325, %s2333
          %s2335 = smul.addr %s17, 128
          %s2336 = scalar_lea.hbm %s3, %s2335
          %s2338 = sshll.u32 %s2328, 4
          %s2339 = int_to_ptr.vmem [resolvable:$true] %s2338
          %2341 = dma.vmem_to_hbm [thread:$0]  %s2339, 128, %s2336, %s2325
        $region36: #{hd_multi_clip_embed.7} parent=31 // pred_fallthru
          _
      $region32: #{hd_multi_clip_embed.7} parent=5 // pred_fallthru
        _
      %p2342 = scmp.le.s32.totalorder 2, %s12
      // Predicated region
      $region37: #{hd_multi_clip_embed.7} parent=5 // pred_check
        %p2343 = pneg %p2342
      $region38: #{hd_multi_clip_embed.7} parent=5 // pred_check_branch
        %2345 = sbr.rel (%p2343) target = $region40
      $region39: #{hd_multi_clip_embed.7} parent=5 // pred_region
        %s2346 = ssub.s32 %s12, 2
        // Predicated region
        $region41: #{hd_multi_clip_embed.7} parent=39 // pred_check
          %p2347 = pneg %p119
        $region42: #{hd_multi_clip_embed.7} parent=39 // pred_check_branch
          %2349 = sbr.rel (%p2347) target = $region44
        $region43: #{hd_multi_clip_embed.7} parent=39 // pred_region
          %s2350 = sand.u32 %s104, 1
          %s2351 = scalar_lea.sflag [#allocation3], %s2350
          %s2352 = sand.u32 %s104, 1
          %s2353 = smul.addr %s2352, 8
          %s2354 = scalar_lea.vmem [#allocation2], %s2353
          %2355 = dma.done %s2351, 128
        $region44: #{hd_multi_clip_embed.7} parent=39 // pred_fallthru
          _
      $region40: #{hd_multi_clip_embed.7} parent=5 // pred_fallthru
        _
    $region6: #{hd_multi_clip_embed.7} parent=1 // loop_footer
      %s16 = sadd.s32 1, %s12
    $region7: #{hd_multi_clip_embed.7} parent=1 // loop_footer_branch
      %11 = sbr.rel target = $region3
    $region8: #{hd_multi_clip_embed.7} parent=1 // loop_exit
      _
    %2356 = vsyncpa [#allocation3], 1
    %s2357 = scalar_lea.sflag [#allocation3], 1
    %2358 = vsyncpa %s2357, 1

</llo_original>
